<compile_context>
chip_gen: v6e
topology: v6e:2x2x1
jax: 0.10.0
libtpu: 0.0.40
codegen_flags: <defaults>
</compile_context>

<pallas_src>
import functools

import jax
import jax.numpy as jnp
from jax.experimental import pallas as pl
from jax.experimental.pallas import tpu as pltpu


# ------------------ STE weight quantization (tiny parameter prep, plain JAX) -----
I8_MIN, I8_MAX = -128, 127
W_MIN_F32 = -128.0 / 128.0
W_MAX_F32 = 127.0 / 128.0
I_BITS = 8


def ste_quantize(w):
    # Mirrors StraightThroughEstimator.forward (torch.round == round-half-to-even == jnp.round).
    q = (w - W_MIN_F32) / (W_MAX_F32 - W_MIN_F32) * (I8_MAX - I8_MIN) + I8_MIN
    q = jnp.clip(jnp.round(q), I8_MIN, I8_MAX)
    q = jnp.floor(q / 2 ** (8 - I_BITS))
    return q / 2 ** (I_BITS - 1)


def bn_fold(gamma, beta, mean, var, eps=1e-5):
    # TODO(synk): BatchNorm reproduced in eval/inference mode (running stats folded
    # to a per-channel scale/bias); training-mode batch statistics are not computed.
    scale = gamma / jnp.sqrt(var + eps)
    bias = beta - mean * scale
    return scale.astype(jnp.float32), bias.astype(jnp.float32)


# ------------------ Pallas kernel --------------------------------------------------
def _conv3x3_block_kernel(*refs, stride, proj_stride, shortcut, fuse_taps):
    """3x3 conv (pad=1, stride s, BN scale folded into w) + bias + shortcut + ReLU.

    shortcut: "none"      -> conv1 + bn1 + relu
              "identity"  -> conv2 + bn2 + x        + relu
              "proj"      -> conv2 + bn2 + (1x1 conv + bn of x, fused) + relu
    """
    if shortcut == "none":
        x_ref, w_ref, b_ref, o_ref, xpad_ref = refs
    elif shortcut == "identity":
        x_ref, w_ref, b_ref, res_ref, o_ref, xpad_ref = refs
    else:  # "proj"
        x_ref, w_ref, b_ref, xs_ref, ws_ref, bs_ref, o_ref, xpad_ref = refs

    _, h_in, w_in, cin = x_ref.shape
    _, th, w_out, cout = o_ref.shape
    h_idx = pl.program_id(1)

    # In-kernel zero padding: build the (h_in+2, w_in+2, cin) halo'd copy of the image
    # in a VMEM scratch (replaces a wrapper-level jnp.pad and its extra HBM round trip).
    # Refilled every step: with both grid axes "parallel" the h axis may be split across
    # TensorCores, so we cannot rely on h_idx == 0 running first on every core.  The
    # refill is VMEM-local and cheap compared with the HBM traffic it saves.
    xpad_ref[...] = jnp.zeros_like(xpad_ref)
    xpad_ref[1:h_in + 1, 1:w_in + 1, :] = x_ref[0].astype(xpad_ref.dtype)

    # First padded-input row used by this output row-tile.
    row0 = pl.multiple_of(h_idx * (th * stride), th * stride)

    def tap(kh, kw):
        # Only the rows/cols that contribute to this tile's outputs are read; for
        # stride > 1 the subsampling happens here (no stride-1 conv + wrapper slice).
        if stride == 1:
            return xpad_ref[pl.ds(row0 + kh, th), pl.ds(kw, w_out), :]
        return xpad_ref[pl.ds(row0 + kh, th, stride), pl.ds(kw, w_out, stride), :]

    if fuse_taps:
        # im2col: one MXU matmul with K = 9*cin (w_ref is (9*cin, cout), (kh, kw, cin)-major).
        patch = jnp.concatenate(
            [tap(kh, kw) for kh in range(3) for kw in range(3)], axis=-1)
        out = jnp.dot(patch.reshape(th * w_out, 9 * cin).astype(jnp.bfloat16),
                      w_ref[...], preferred_element_type=jnp.float32)
    else:
        # cin is tiny: K-fusion cannot fill the MXU's contraction dim anyway and the 9x
        # patch materialization costs more than it saves, so accumulate the 9 taps.
        out = jnp.zeros((th * w_out, cout), jnp.float32)
        idx = 0
        for kh in range(3):
            for kw in range(3):
                lhs = tap(kh, kw).reshape(th * w_out, cin).astype(jnp.bfloat16)
                out = out + jnp.dot(lhs, w_ref[idx * cin:(idx + 1) * cin, :],
                                    preferred_element_type=jnp.float32)
                idx += 1

    out = out + b_ref[...]  # BN scale is pre-folded into w; only the bias remains.

    if shortcut == "identity":
        out = out + res_ref[0].reshape(th * w_out, cout).astype(jnp.float32)
    elif shortcut == "proj":
        cs = xs_ref.shape[-1]
        if proj_stride == 1:
            xs = xs_ref[0]
        else:
            xs = xs_ref[0, pl.ds(0, th, proj_stride), pl.ds(0, w_out, proj_stride), :]
        sc = jnp.dot(xs.reshape(th * w_out, cs), ws_ref[...],
                     preferred_element_type=jnp.float32)
        out = out + sc + bs_ref[...]

    out = jnp.maximum(out, 0.0)
    o_ref[...] = out.reshape(1, th, w_out, cout).astype(o_ref.dtype)


# ------------------ wrapper ---------------------------------------------------------
def _pick_tile_h(h_out, w_out, cout, max_rows=8, acc_budget_bytes=1 << 20):
    """Largest divisor of h_out with th <= max_rows and a bounded f32 accumulator.

    Keeps the per-step output block / accumulator small (no vreg spills at real
    ResNet shapes), gives several grid steps per image (pipelining), and provides a
    spatial axis both v7x TensorCores can split.  Per-step VMEM stays far below the
    smallest scoped default (16 MiB on v5e) so one tiling works on v5e/v6e/v7x.
    """
    best = 1
    for th in range(1, h_out + 1):
        if h_out % th:
            continue
        if th > max_rows or th * w_out * cout * 4 > acc_budget_bytes:
            break
        best = th
    return best


def conv3x3_block(x, w9, b, *, stride=1, residual=None, proj_input=None,
                  proj_w=None, proj_b=None, proj_stride=1, out_dtype=jnp.float32):
    """Fused 3x3 conv (pad=1) + folded-BN bias + optional shortcut + ReLU.

    x:   (N, H, W, Cin)  NHWC bf16 (MXU operand dtype)
    w9:  (9*Cin, Cout)   bf16, (kh, kw, cin)-major, BN scale pre-folded
    b:   (1, Cout)       f32 folded BN bias
    residual:            identity-shortcut tensor added before the final ReLU
    proj_*:              1x1-conv + BN shortcut, computed inside the same kernel
    """
    n, h_in, w_in, cin = x.shape
    cout = w9.shape[-1]
    assert h_in % stride == 0 and w_in % stride == 0
    h_out, w_out = h_in // stride, w_in // stride
    th = _pick_tile_h(h_out, w_out, cout)
    n_h = h_out // th

    if residual is not None:
        shortcut = "identity"
    elif proj_input is not None:
        shortcut = "proj"
    else:
        shortcut = "none"

    in_arrays = [x, w9, b]
    in_specs = [
        # Full (un-padded) image per batch element; the block index is constant over
        # the h axis, so it is DMA'd once per image and re-used by every row-tile.
        pl.BlockSpec((1, h_in, w_in, cin), lambda nb, hb: (nb, 0, 0, 0)),
        pl.BlockSpec((9 * cin, cout), lambda nb, hb: (0, 0)),
        pl.BlockSpec((1, cout), lambda nb, hb: (0, 0)),
    ]
    if shortcut == "identity":
        in_arrays.append(residual)
        in_specs.append(
            pl.BlockSpec((1, th, w_out, cout), lambda nb, hb: (nb, hb, 0, 0)))
    elif shortcut == "proj":
        cs = proj_input.shape[-1]
        in_arrays += [proj_input, proj_w, proj_b]
        in_specs += [
            pl.BlockSpec((1, th * proj_stride, w_out * proj_stride, cs),
                         lambda nb, hb: (nb, hb, 0, 0)),
            pl.BlockSpec((cs, cout), lambda nb, hb: (0, 0)),
            pl.BlockSpec((1, cout), lambda nb, hb: (0, 0)),
        ]

    kernel = functools.partial(
        _conv3x3_block_kernel, stride=stride, proj_stride=proj_stride,
        shortcut=shortcut, fuse_taps=(cin >= 16))

    return pl.pallas_call(
        kernel,
        out_shape=jax.ShapeDtypeStruct((n, h_out, w_out, cout), out_dtype),
        grid=(n, n_h),
        in_specs=in_specs,
        out_specs=pl.BlockSpec((1, th, w_out, cout), lambda nb, hb: (nb, hb, 0, 0)),
        # f32 pad scratch: unpacked dtype keeps the halo-offset stores / shifted tap
        # reads on the plainest store/load path; operands are cast to bf16 at the dot.
        scratch_shapes=[pltpu.VMEM((h_in + 2, w_in + 2, cin), jnp.float32)],
        compiler_params=pltpu.CompilerParams(
            dimension_semantics=("parallel", "parallel")),
    )(*in_arrays)


def basic_block_forward(x_nchw, params, *, in_planes, planes, stride=1):
    """Pallas implementation of BasicBlock.forward.  Input/output are NCHW like PyTorch."""
    x = jnp.transpose(x_nchw, (0, 2, 3, 1)).astype(jnp.float32)   # NCHW -> NHWC
    # Single bf16 copy of x feeds conv1, the fused projection shortcut and the
    # identity residual (bf16 operands are the MXU fast path and halve HBM bytes).
    xb = x.astype(jnp.bfloat16)

    s1, b1 = bn_fold(*params["bn1"])
    s2, b2 = bn_fold(*params["bn2"])
    # STE-quantized weights with the BN scale folded in, laid out (kh*kw*cin, cout).
    w1f = (ste_quantize(params["w1"]) * s1).reshape(9 * in_planes, planes).astype(jnp.bfloat16)
    w2f = (ste_quantize(params["w2"]) * s2).reshape(9 * planes, planes).astype(jnp.bfloat16)

    # conv1 + bn1 + relu (stride handled in-kernel); bf16 output halves the HBM
    # round trip into conv2.
    out1 = conv3x3_block(xb, w1f, b1.reshape(1, planes), stride=stride,
                         out_dtype=jnp.bfloat16)

    if stride != 1 or in_planes != planes:
        ss, bs = bn_fold(*params["bns"])
        wsf = (ste_quantize(params["ws"]) * ss).astype(jnp.bfloat16)   # (Cin, Cout)
        # conv2 + bn2 + (1x1 conv + bn shortcut) + add + relu fused in ONE kernel:
        # the projected shortcut never round-trips through HBM.
        out = conv3x3_block(out1, w2f, b2.reshape(1, planes), stride=1,
                            proj_input=xb, proj_w=wsf, proj_b=bs.reshape(1, planes),
                            proj_stride=stride, out_dtype=jnp.float32)
    else:
        out = conv3x3_block(out1, w2f, b2.reshape(1, planes), stride=1,
                            residual=xb, out_dtype=jnp.float32)
    return jnp.transpose(out, (0, 3, 1, 2))   # NHWC -> NCHW


# ------------------ pure-JAX reference (PyTorch semantics, f32) ---------------------
def ref_forward(x_nchw, params, in_planes, planes, stride=1):
    dn = ("NHWC", "HWIO", "NHWC")
    x = jnp.transpose(x_nchw, (0, 2, 3, 1)).astype(jnp.float32)

    def conv(a, w, s, pad):
        return jax.lax.conv_general_dilated(a, w, (s, s), ((pad, pad), (pad, pad)),
                                            dimension_numbers=dn)

    def bn(a, p):
        g, b, m, v = p
        return (a - m) / jnp.sqrt(v + 1e-5) * g + b

    out = jax.nn.relu(bn(conv(x, ste_quantize(params["w1"]), stride, 1), params["bn1"]))
    out = bn(conv(out, ste_quantize(params["w2"]), 1, 1), params["bn2"])
    if stride != 1 or in_planes != planes:
        ws = ste_quantize(params["ws"]).reshape(1, 1, in_planes, planes)
        sc = bn(conv(x, ws, stride, 0), params["bns"])
    else:
        sc = x
    out = jax.nn.relu(out + sc)
    return jnp.transpose(out, (0, 3, 1, 2))


def init_bn(key, c):
    k1, k2, k3, k4 = jax.random.split(key, 4)
    gamma = 1.0 + 0.1 * jax.random.normal(k1, (c,), jnp.float32)
    beta = 0.1 * jax.random.normal(k2, (c,), jnp.float32)
    mean = 0.1 * jax.random.normal(k3, (c,), jnp.float32)
    var = 1.0 + 0.1 * jnp.abs(jax.random.normal(k4, (c,), jnp.float32))
    return gamma, beta, mean, var


if __name__ == "__main__":
    key = jax.random.PRNGKey(0)

    def make_params(k, in_planes, planes, with_proj):
        ks = jax.random.split(k, 6)
        p = {
            "w1": 0.2 * jax.random.normal(ks[0], (3, 3, in_planes, planes), jnp.float32),  # HWIO
            "w2": 0.2 * jax.random.normal(ks[1], (3, 3, planes, planes), jnp.float32),
            "bn1": init_bn(ks[2], planes),
            "bn2": init_bn(ks[3], planes),
        }
        if with_proj:
            p["ws"] = 0.2 * jax.random.normal(ks[4], (in_planes, planes), jnp.float32)
            p["bns"] = init_bn(ks[5], planes)
        return p

    # (in_planes, planes, stride): fused 1x1 projection shortcut, then identity shortcut.
    configs = [(4, 8, 1), (8, 8, 1)]
    N, HW = 2, 16

    for (in_planes, planes, stride) in configs:
        kx, kp, key = jax.random.split(key, 3)
        with_proj = (stride != 1 or in_planes != planes)
        params = make_params(kp, in_planes, planes, with_proj)
        x = jax.random.normal(kx, (N, in_planes, HW, HW), jnp.float32)  # NCHW like PyTorch

        fwd = jax.jit(functools.partial(basic_block_forward,
                                        in_planes=in_planes, planes=planes, stride=stride))
        out = jax.block_until_ready(fwd(x, params))

        ref = ref_forward(x, params, in_planes, planes, stride)
        assert out.shape == (N, planes, HW // stride, HW // stride), out.shape
        max_err = float(jnp.max(jnp.abs(out - ref)))
        # Kernel uses bf16 MXU operands (f32 accumulation); reference is pure f32,
        # so the tolerance reflects bf16 operand rounding.
        assert jnp.allclose(out, ref, atol=5e-2, rtol=5e-2), (
            f"config {(in_planes, planes, stride)}: max abs err {max_err}")

    print("KERNEL_OK")
</pallas_src>

<mosaic_0001>
module attributes {stable_mosaic.version = 11 : i64} {
  func.func @_conv3x3_block_kernel(%arg0: i32, %arg1: i32, %arg2: memref<1x16x16x4xbf16, #tpu.memory_space<vmem>>, %arg3: memref<36x8xbf16, #tpu.memory_space<vmem>>, %arg4: memref<1x8xf32, #tpu.memory_space<vmem>>, %arg5: memref<1x8x16x8xbf16, #tpu.memory_space<vmem>>, %arg6: memref<18x18x4xf32, #tpu.memory_space<vmem>>) attributes {dimension_semantics = [#tpu.dimension_semantics<parallel>, #tpu.dimension_semantics<parallel>], iteration_bounds = array<i64: 2, 2>, scalar_prefetch = 0 : i64, scratch_operands = 1 : i64, tpu.core_type = #tpu.core_type<tc>, window_params = [{transform_indices = @transform_0, window_bounds = array<i64: 1, 16, 16, 4>}, {pipeline_mode = #tpu.pipeline_mode<synchronous>, transform_indices = @transform_1, window_bounds = array<i64: 36, 8>}, {pipeline_mode = #tpu.pipeline_mode<synchronous>, transform_indices = @transform_2, window_bounds = array<i64: 1, 8>}, {transform_indices = @transform_3, window_bounds = array<i64: 1, 8, 16, 8>}]} {
    %cst = arith.constant 0.000000e+00 : f32
    %0 = vector.broadcast %cst : f32 to vector<18x18x4xf32>
    %c0 = arith.constant 0 : index
    %c0_0 = arith.constant 0 : index
    %c0_1 = arith.constant 0 : index
    %1 = vector.load %arg6[%c0, %c0_0, %c0_1] : memref<18x18x4xf32, #tpu.memory_space<vmem>>, vector<18x18x4xf32>
    tpu.vector_store %arg6[%c0, %c0_0, %c0_1], %0 {strides = array<i32>} : memref<18x18x4xf32, #tpu.memory_space<vmem>>, vector<18x18x4xf32>,
    %c0_2 = arith.constant 0 : index
    %c0_3 = arith.constant 0 : index
    %c0_4 = arith.constant 0 : index
    %c0_5 = arith.constant 0 : index
    %2 = vector.load %arg2[%c0_2, %c0_3, %c0_4, %c0_5] : memref<1x16x16x4xbf16, #tpu.memory_space<vmem>>, vector<1x16x16x4xbf16>
    %3 = vector.shape_cast %2 : vector<1x16x16x4xbf16> to vector<16x16x4xbf16>
    %4 = arith.extf %3 : vector<16x16x4xbf16> to vector<16x16x4xf32>
    %c1 = arith.constant 1 : index
    %c1_6 = arith.constant 1 : index
    %c0_7 = arith.constant 0 : index
    %5 = vector.load %arg6[%c1, %c1_6, %c0_7] : memref<18x18x4xf32, #tpu.memory_space<vmem>>, vector<16x16x4xf32>
    tpu.vector_store %arg6[%c1, %c1_6, %c0_7], %4 {strides = array<i32>} : memref<18x18x4xf32, #tpu.memory_space<vmem>>, vector<16x16x4xf32>,
    %c8_i32 = arith.constant 8 : i32
    %6 = arith.muli %arg1, %c8_i32 : i32
    %7 = tpu.assume_multiple %6, 8 : i32
    %cst_8 = arith.constant 0.000000e+00 : f32
    %8 = vector.broadcast %cst_8 : f32 to vector<128x8xf32>
    %c0_i32 = arith.constant 0 : i32
    %9 = arith.addi %7, %c0_i32 : i32
    %10 = arith.index_cast %9 : i32 to index
    %c0_9 = arith.constant 0 : index
    %c0_10 = arith.constant 0 : index
    %11 = vector.load %arg6[%10, %c0_9, %c0_10] : memref<18x18x4xf32, #tpu.memory_space<vmem>>, vector<8x16x4xf32>
    %12 = vector.shape_cast %11 : vector<8x16x4xf32> to vector<128x4xf32>
    %13 = arith.truncf %12 : vector<128x4xf32> to vector<128x4xbf16>
    %c0_11 = arith.constant 0 : index
    %c0_12 = arith.constant 0 : index
    %14 = vector.load %arg3[%c0_11, %c0_12] : memref<36x8xbf16, #tpu.memory_space<vmem>>, vector<4x8xbf16>
    %cst_13 = arith.constant dense<0.000000e+00> : vector<128x8xf32>
    %15 = tpu.matmul %13, %14, %cst_13 {dimension_numbers = #tpu.dot_dimension_numbers<[1], [0], [0], [1], [0, 0, 1, 1], [], []>} : vector<128x4xbf16>, vector<4x8xbf16>, vector<128x8xf32> -> vector<128x8xf32>
    %16 = arith.addf %8, %15 : vector<128x8xf32>
    %c0_i32_14 = arith.constant 0 : i32
    %17 = arith.addi %7, %c0_i32_14 : i32
    %18 = arith.index_cast %17 : i32 to index
    %c1_15 = arith.constant 1 : index
    %c0_16 = arith.constant 0 : index
    %19 = vector.load %arg6[%18, %c1_15, %c0_16] : memref<18x18x4xf32, #tpu.memory_space<vmem>>, vector<8x16x4xf32>
    %20 = vector.shape_cast %19 : vector<8x16x4xf32> to vector<128x4xf32>
    %21 = arith.truncf %20 : vector<128x4xf32> to vector<128x4xbf16>
    %c4 = arith.constant 4 : index
    %c0_17 = arith.constant 0 : index
    %22 = vector.load %arg3[%c4, %c0_17] : memref<36x8xbf16, #tpu.memory_space<vmem>>, vector<4x8xbf16>
    %cst_18 = arith.constant dense<0.000000e+00> : vector<128x8xf32>
    %23 = tpu.matmul %21, %22, %cst_18 {dimension_numbers = #tpu.dot_dimension_numbers<[1], [0], [0], [1], [0, 0, 1, 1], [], []>} : vector<128x4xbf16>, vector<4x8xbf16>, vector<128x8xf32> -> vector<128x8xf32>
    %24 = arith.addf %16, %23 : vector<128x8xf32>
    %c0_i32_19 = arith.constant 0 : i32
    %25 = arith.addi %7, %c0_i32_19 : i32
    %26 = arith.index_cast %25 : i32 to index
    %c2 = arith.constant 2 : index
    %c0_20 = arith.constant 0 : index
    %27 = vector.load %arg6[%26, %c2, %c0_20] : memref<18x18x4xf32, #tpu.memory_space<vmem>>, vector<8x16x4xf32>
    %28 = vector.shape_cast %27 : vector<8x16x4xf32> to vector<128x4xf32>
    %29 = arith.truncf %28 : vector<128x4xf32> to vector<128x4xbf16>
    %c8 = arith.constant 8 : index
    %c0_21 = arith.constant 0 : index
    %30 = vector.load %arg3[%c8, %c0_21] : memref<36x8xbf16, #tpu.memory_space<vmem>>, vector<4x8xbf16>
    %cst_22 = arith.constant dense<0.000000e+00> : vector<128x8xf32>
    %31 = tpu.matmul %29, %30, %cst_22 {dimension_numbers = #tpu.dot_dimension_numbers<[1], [0], [0], [1], [0, 0, 1, 1], [], []>} : vector<128x4xbf16>, vector<4x8xbf16>, vector<128x8xf32> -> vector<128x8xf32>
    %32 = arith.addf %24, %31 : vector<128x8xf32>
    %c1_i32 = arith.constant 1 : i32
    %33 = arith.addi %7, %c1_i32 : i32
    %34 = arith.index_cast %33 : i32 to index
    %c0_23 = arith.constant 0 : index
    %c0_24 = arith.constant 0 : index
    %35 = vector.load %arg6[%34, %c0_23, %c0_24] : memref<18x18x4xf32, #tpu.memory_space<vmem>>, vector<8x16x4xf32>
    %36 = vector.shape_cast %35 : vector<8x16x4xf32> to vector<128x4xf32>
    %37 = arith.truncf %36 : vector<128x4xf32> to vector<128x4xbf16>
    %c12 = arith.constant 12 : index
    %c0_25 = arith.constant 0 : index
    %38 = vector.load %arg3[%c12, %c0_25] : memref<36x8xbf16, #tpu.memory_space<vmem>>, vector<4x8xbf16>
    %cst_26 = arith.constant dense<0.000000e+00> : vector<128x8xf32>
    %39 = tpu.matmul %37, %38, %cst_26 {dimension_numbers = #tpu.dot_dimension_numbers<[1], [0], [0], [1], [0, 0, 1, 1], [], []>} : vector<128x4xbf16>, vector<4x8xbf16>, vector<128x8xf32> -> vector<128x8xf32>
    %40 = arith.addf %32, %39 : vector<128x8xf32>
    %c1_i32_27 = arith.constant 1 : i32
    %41 = arith.addi %7, %c1_i32_27 : i32
    %42 = arith.index_cast %41 : i32 to index
    %c1_28 = arith.constant 1 : index
    %c0_29 = arith.constant 0 : index
    %43 = vector.load %arg6[%42, %c1_28, %c0_29] : memref<18x18x4xf32, #tpu.memory_space<vmem>>, vector<8x16x4xf32>
    %44 = vector.shape_cast %43 : vector<8x16x4xf32> to vector<128x4xf32>
    %45 = arith.truncf %44 : vector<128x4xf32> to vector<128x4xbf16>
    %c16 = arith.constant 16 : index
    %c0_30 = arith.constant 0 : index
    %46 = vector.load %arg3[%c16, %c0_30] : memref<36x8xbf16, #tpu.memory_space<vmem>>, vector<4x8xbf16>
    %cst_31 = arith.constant dense<0.000000e+00> : vector<128x8xf32>
    %47 = tpu.matmul %45, %46, %cst_31 {dimension_numbers = #tpu.dot_dimension_numbers<[1], [0], [0], [1], [0, 0, 1, 1], [], []>} : vector<128x4xbf16>, vector<4x8xbf16>, vector<128x8xf32> -> vector<128x8xf32>
    %48 = arith.addf %40, %47 : vector<128x8xf32>
    %c1_i32_32 = arith.constant 1 : i32
    %49 = arith.addi %7, %c1_i32_32 : i32
    %50 = arith.index_cast %49 : i32 to index
    %c2_33 = arith.constant 2 : index
    %c0_34 = arith.constant 0 : index
    %51 = vector.load %arg6[%50, %c2_33, %c0_34] : memref<18x18x4xf32, #tpu.memory_space<vmem>>, vector<8x16x4xf32>
    %52 = vector.shape_cast %51 : vector<8x16x4xf32> to vector<128x4xf32>
    %53 = arith.truncf %52 : vector<128x4xf32> to vector<128x4xbf16>
    %c20 = arith.constant 20 : index
    %c0_35 = arith.constant 0 : index
    %54 = vector.load %arg3[%c20, %c0_35] : memref<36x8xbf16, #tpu.memory_space<vmem>>, vector<4x8xbf16>
    %cst_36 = arith.constant dense<0.000000e+00> : vector<128x8xf32>
    %55 = tpu.matmul %53, %54, %cst_36 {dimension_numbers = #tpu.dot_dimension_numbers<[1], [0], [0], [1], [0, 0, 1, 1], [], []>} : vector<128x4xbf16>, vector<4x8xbf16>, vector<128x8xf32> -> vector<128x8xf32>
    %56 = arith.addf %48, %55 : vector<128x8xf32>
    %c2_i32 = arith.constant 2 : i32
    %57 = arith.addi %7, %c2_i32 : i32
    %58 = arith.index_cast %57 : i32 to index
    %c0_37 = arith.constant 0 : index
    %c0_38 = arith.constant 0 : index
    %59 = vector.load %arg6[%58, %c0_37, %c0_38] : memref<18x18x4xf32, #tpu.memory_space<vmem>>, vector<8x16x4xf32>
    %60 = vector.shape_cast %59 : vector<8x16x4xf32> to vector<128x4xf32>
    %61 = arith.truncf %60 : vector<128x4xf32> to vector<128x4xbf16>
    %c24 = arith.constant 24 : index
    %c0_39 = arith.constant 0 : index
    %62 = vector.load %arg3[%c24, %c0_39] : memref<36x8xbf16, #tpu.memory_space<vmem>>, vector<4x8xbf16>
    %cst_40 = arith.constant dense<0.000000e+00> : vector<128x8xf32>
    %63 = tpu.matmul %61, %62, %cst_40 {dimension_numbers = #tpu.dot_dimension_numbers<[1], [0], [0], [1], [0, 0, 1, 1], [], []>} : vector<128x4xbf16>, vector<4x8xbf16>, vector<128x8xf32> -> vector<128x8xf32>
    %64 = arith.addf %56, %63 : vector<128x8xf32>
    %c2_i32_41 = arith.constant 2 : i32
    %65 = arith.addi %7, %c2_i32_41 : i32
    %66 = arith.index_cast %65 : i32 to index
    %c1_42 = arith.constant 1 : index
    %c0_43 = arith.constant 0 : index
    %67 = vector.load %arg6[%66, %c1_42, %c0_43] : memref<18x18x4xf32, #tpu.memory_space<vmem>>, vector<8x16x4xf32>
    %68 = vector.shape_cast %67 : vector<8x16x4xf32> to vector<128x4xf32>
    %69 = arith.truncf %68 : vector<128x4xf32> to vector<128x4xbf16>
    %c28 = arith.constant 28 : index
    %c0_44 = arith.constant 0 : index
    %70 = vector.load %arg3[%c28, %c0_44] : memref<36x8xbf16, #tpu.memory_space<vmem>>, vector<4x8xbf16>
    %cst_45 = arith.constant dense<0.000000e+00> : vector<128x8xf32>
    %71 = tpu.matmul %69, %70, %cst_45 {dimension_numbers = #tpu.dot_dimension_numbers<[1], [0], [0], [1], [0, 0, 1, 1], [], []>} : vector<128x4xbf16>, vector<4x8xbf16>, vector<128x8xf32> -> vector<128x8xf32>
    %72 = arith.addf %64, %71 : vector<128x8xf32>
    %c2_i32_46 = arith.constant 2 : i32
    %73 = arith.addi %7, %c2_i32_46 : i32
    %74 = arith.index_cast %73 : i32 to index
    %c2_47 = arith.constant 2 : index
    %c0_48 = arith.constant 0 : index
    %75 = vector.load %arg6[%74, %c2_47, %c0_48] : memref<18x18x4xf32, #tpu.memory_space<vmem>>, vector<8x16x4xf32>
    %76 = vector.shape_cast %75 : vector<8x16x4xf32> to vector<128x4xf32>
    %77 = arith.truncf %76 : vector<128x4xf32> to vector<128x4xbf16>
    %c32 = arith.constant 32 : index
    %c0_49 = arith.constant 0 : index
    %78 = vector.load %arg3[%c32, %c0_49] : memref<36x8xbf16, #tpu.memory_space<vmem>>, vector<4x8xbf16>
    %cst_50 = arith.constant dense<0.000000e+00> : vector<128x8xf32>
    %79 = tpu.matmul %77, %78, %cst_50 {dimension_numbers = #tpu.dot_dimension_numbers<[1], [0], [0], [1], [0, 0, 1, 1], [], []>} : vector<128x4xbf16>, vector<4x8xbf16>, vector<128x8xf32> -> vector<128x8xf32>
    %80 = arith.addf %72, %79 : vector<128x8xf32>
    %c0_51 = arith.constant 0 : index
    %c0_52 = arith.constant 0 : index
    %81 = vector.load %arg4[%c0_51, %c0_52] : memref<1x8xf32, #tpu.memory_space<vmem>>, vector<1x8xf32>
    %82 = vector.broadcast %81 : vector<1x8xf32> to vector<128x8xf32>
    %83 = arith.addf %80, %82 : vector<128x8xf32>
    %cst_53 = arith.constant 0.000000e+00 : f32
    %84 = vector.broadcast %cst_53 : f32 to vector<128x8xf32>
    %85 = arith.maximumf %83, %84 : vector<128x8xf32>
    %86 = vector.shape_cast %85 : vector<128x8xf32> to vector<1x8x16x8xf32>
    %87 = arith.truncf %86 : vector<1x8x16x8xf32> to vector<1x8x16x8xbf16>
    %c0_54 = arith.constant 0 : index
    %c0_55 = arith.constant 0 : index
    %c0_56 = arith.constant 0 : index
    %c0_57 = arith.constant 0 : index
    %88 = vector.load %arg5[%c0_54, %c0_55, %c0_56, %c0_57] : memref<1x8x16x8xbf16, #tpu.memory_space<vmem>>, vector<1x8x16x8xbf16>
    tpu.vector_store %arg5[%c0_54, %c0_55, %c0_56, %c0_57], %87 {strides = array<i32>} : memref<1x8x16x8xbf16, #tpu.memory_space<vmem>>, vector<1x8x16x8xbf16>,
    return
  }
  func.func @transform_0(%arg0: i32, %arg1: i32) -> (i32, i32, i32, i32) {
    %c0_i32 = arith.constant 0 : i32
    %c0_i32_0 = arith.constant 0 : i32
    %c0_i32_1 = arith.constant 0 : i32
    %c0_i32_2 = arith.constant 0 : i32
    return %arg0, %c0_i32, %c0_i32_0, %c0_i32_1 : i32, i32, i32, i32
  }
  func.func @transform_1(%arg0: i32, %arg1: i32) -> (i32, i32) {
    %c0_i32 = arith.constant 0 : i32
    %c0_i32_0 = arith.constant 0 : i32
    %c0_i32_1 = arith.constant 0 : i32
    return %c0_i32, %c0_i32_0 : i32, i32
  }
  func.func @transform_2(%arg0: i32, %arg1: i32) -> (i32, i32) {
    %c0_i32 = arith.constant 0 : i32
    %c0_i32_0 = arith.constant 0 : i32
    %c0_i32_1 = arith.constant 0 : i32
    return %c0_i32, %c0_i32_0 : i32, i32
  }
  func.func @transform_3(%arg0: i32, %arg1: i32) -> (i32, i32, i32, i32) {
    %c0_i32 = arith.constant 0 : i32
    %c0_i32_0 = arith.constant 0 : i32
    %c0_i32_1 = arith.constant 0 : i32
    return %arg0, %arg1, %c0_i32, %c0_i32_0 : i32, i32, i32, i32
  }
}

module attributes {stable_mosaic.version = 11 : i64} {
  func.func @_conv3x3_block_kernel(%arg0: i32, %arg1: i32, %arg2: memref<1x16x16x8xbf16, #tpu.memory_space<vmem>>, %arg3: memref<72x8xbf16, #tpu.memory_space<vmem>>, %arg4: memref<1x8xf32, #tpu.memory_space<vmem>>, %arg5: memref<1x8x16x4xbf16, #tpu.memory_space<vmem>>, %arg6: memref<4x8xbf16, #tpu.memory_space<vmem>>, %arg7: memref<1x8xf32, #tpu.memory_space<vmem>>, %arg8: memref<1x8x16x8xf32, #tpu.memory_space<vmem>>, %arg9: memref<18x18x8xf32, #tpu.memory_space<vmem>>) attributes {dimension_semantics = [#tpu.dimension_semantics<parallel>, #tpu.dimension_semantics<parallel>], iteration_bounds = array<i64: 2, 2>, scalar_prefetch = 0 : i64, scratch_operands = 1 : i64, tpu.core_type = #tpu.core_type<tc>, window_params = [{transform_indices = @transform_0, window_bounds = array<i64: 1, 16, 16, 8>}, {pipeline_mode = #tpu.pipeline_mode<synchronous>, transform_indices = @transform_1, window_bounds = array<i64: 72, 8>}, {pipeline_mode = #tpu.pipeline_mode<synchronous>, transform_indices = @transform_2, window_bounds = array<i64: 1, 8>}, {transform_indices = @transform_3, window_bounds = array<i64: 1, 8, 16, 4>}, {pipeline_mode = #tpu.pipeline_mode<synchronous>, transform_indices = @transform_4, window_bounds = array<i64: 4, 8>}, {pipeline_mode = #tpu.pipeline_mode<synchronous>, transform_indices = @transform_5, window_bounds = array<i64: 1, 8>}, {transform_indices = @transform_6, window_bounds = array<i64: 1, 8, 16, 8>}]} {
    %cst = arith.constant 0.000000e+00 : f32
    %0 = vector.broadcast %cst : f32 to vector<18x18x8xf32>
    %c0 = arith.constant 0 : index
    %c0_0 = arith.constant 0 : index
    %c0_1 = arith.constant 0 : index
    %1 = vector.load %arg9[%c0, %c0_0, %c0_1] : memref<18x18x8xf32, #tpu.memory_space<vmem>>, vector<18x18x8xf32>
    tpu.vector_store %arg9[%c0, %c0_0, %c0_1], %0 {strides = array<i32>} : memref<18x18x8xf32, #tpu.memory_space<vmem>>, vector<18x18x8xf32>,
    %c0_2 = arith.constant 0 : index
    %c0_3 = arith.constant 0 : index
    %c0_4 = arith.constant 0 : index
    %c0_5 = arith.constant 0 : index
    %2 = vector.load %arg2[%c0_2, %c0_3, %c0_4, %c0_5] : memref<1x16x16x8xbf16, #tpu.memory_space<vmem>>, vector<1x16x16x8xbf16>
    %3 = vector.shape_cast %2 : vector<1x16x16x8xbf16> to vector<16x16x8xbf16>
    %4 = arith.extf %3 : vector<16x16x8xbf16> to vector<16x16x8xf32>
    %c1 = arith.constant 1 : index
    %c1_6 = arith.constant 1 : index
    %c0_7 = arith.constant 0 : index
    %5 = vector.load %arg9[%c1, %c1_6, %c0_7] : memref<18x18x8xf32, #tpu.memory_space<vmem>>, vector<16x16x8xf32>
    tpu.vector_store %arg9[%c1, %c1_6, %c0_7], %4 {strides = array<i32>} : memref<18x18x8xf32, #tpu.memory_space<vmem>>, vector<16x16x8xf32>,
    %c8_i32 = arith.constant 8 : i32
    %6 = arith.muli %arg1, %c8_i32 : i32
    %7 = tpu.assume_multiple %6, 8 : i32
    %cst_8 = arith.constant 0.000000e+00 : f32
    %8 = vector.broadcast %cst_8 : f32 to vector<128x8xf32>
    %c0_i32 = arith.constant 0 : i32
    %9 = arith.addi %7, %c0_i32 : i32
    %10 = arith.index_cast %9 : i32 to index
    %c0_9 = arith.constant 0 : index
    %c0_10 = arith.constant 0 : index
    %11 = vector.load %arg9[%10, %c0_9, %c0_10] : memref<18x18x8xf32, #tpu.memory_space<vmem>>, vector<8x16x8xf32>
    %12 = vector.shape_cast %11 : vector<8x16x8xf32> to vector<128x8xf32>
    %13 = arith.truncf %12 : vector<128x8xf32> to vector<128x8xbf16>
    %c0_11 = arith.constant 0 : index
    %c0_12 = arith.constant 0 : index
    %14 = vector.load %arg3[%c0_11, %c0_12] : memref<72x8xbf16, #tpu.memory_space<vmem>>, vector<8x8xbf16>
    %cst_13 = arith.constant dense<0.000000e+00> : vector<128x8xf32>
    %15 = tpu.matmul %13, %14, %cst_13 {dimension_numbers = #tpu.dot_dimension_numbers<[1], [0], [0], [1], [0, 0, 1, 1], [], []>} : vector<128x8xbf16>, vector<8x8xbf16>, vector<128x8xf32> -> vector<128x8xf32>
    %16 = arith.addf %8, %15 : vector<128x8xf32>
    %c0_i32_14 = arith.constant 0 : i32
    %17 = arith.addi %7, %c0_i32_14 : i32
    %18 = arith.index_cast %17 : i32 to index
    %c1_15 = arith.constant 1 : index
    %c0_16 = arith.constant 0 : index
    %19 = vector.load %arg9[%18, %c1_15, %c0_16] : memref<18x18x8xf32, #tpu.memory_space<vmem>>, vector<8x16x8xf32>
    %20 = vector.shape_cast %19 : vector<8x16x8xf32> to vector<128x8xf32>
    %21 = arith.truncf %20 : vector<128x8xf32> to vector<128x8xbf16>
    %c8 = arith.constant 8 : index
    %c0_17 = arith.constant 0 : index
    %22 = vector.load %arg3[%c8, %c0_17] : memref<72x8xbf16, #tpu.memory_space<vmem>>, vector<8x8xbf16>
    %cst_18 = arith.constant dense<0.000000e+00> : vector<128x8xf32>
    %23 = tpu.matmul %21, %22, %cst_18 {dimension_numbers = #tpu.dot_dimension_numbers<[1], [0], [0], [1], [0, 0, 1, 1], [], []>} : vector<128x8xbf16>, vector<8x8xbf16>, vector<128x8xf32> -> vector<128x8xf32>
    %24 = arith.addf %16, %23 : vector<128x8xf32>
    %c0_i32_19 = arith.constant 0 : i32
    %25 = arith.addi %7, %c0_i32_19 : i32
    %26 = arith.index_cast %25 : i32 to index
    %c2 = arith.constant 2 : index
    %c0_20 = arith.constant 0 : index
    %27 = vector.load %arg9[%26, %c2, %c0_20] : memref<18x18x8xf32, #tpu.memory_space<vmem>>, vector<8x16x8xf32>
    %28 = vector.shape_cast %27 : vector<8x16x8xf32> to vector<128x8xf32>
    %29 = arith.truncf %28 : vector<128x8xf32> to vector<128x8xbf16>
    %c16 = arith.constant 16 : index
    %c0_21 = arith.constant 0 : index
    %30 = vector.load %arg3[%c16, %c0_21] : memref<72x8xbf16, #tpu.memory_space<vmem>>, vector<8x8xbf16>
    %cst_22 = arith.constant dense<0.000000e+00> : vector<128x8xf32>
    %31 = tpu.matmul %29, %30, %cst_22 {dimension_numbers = #tpu.dot_dimension_numbers<[1], [0], [0], [1], [0, 0, 1, 1], [], []>} : vector<128x8xbf16>, vector<8x8xbf16>, vector<128x8xf32> -> vector<128x8xf32>
    %32 = arith.addf %24, %31 : vector<128x8xf32>
    %c1_i32 = arith.constant 1 : i32
    %33 = arith.addi %7, %c1_i32 : i32
    %34 = arith.index_cast %33 : i32 to index
    %c0_23 = arith.constant 0 : index
    %c0_24 = arith.constant 0 : index
    %35 = vector.load %arg9[%34, %c0_23, %c0_24] : memref<18x18x8xf32, #tpu.memory_space<vmem>>, vector<8x16x8xf32>
    %36 = vector.shape_cast %35 : vector<8x16x8xf32> to vector<128x8xf32>
    %37 = arith.truncf %36 : vector<128x8xf32> to vector<128x8xbf16>
    %c24 = arith.constant 24 : index
    %c0_25 = arith.constant 0 : index
    %38 = vector.load %arg3[%c24, %c0_25] : memref<72x8xbf16, #tpu.memory_space<vmem>>, vector<8x8xbf16>
    %cst_26 = arith.constant dense<0.000000e+00> : vector<128x8xf32>
    %39 = tpu.matmul %37, %38, %cst_26 {dimension_numbers = #tpu.dot_dimension_numbers<[1], [0], [0], [1], [0, 0, 1, 1], [], []>} : vector<128x8xbf16>, vector<8x8xbf16>, vector<128x8xf32> -> vector<128x8xf32>
    %40 = arith.addf %32, %39 : vector<128x8xf32>
    %c1_i32_27 = arith.constant 1 : i32
    %41 = arith.addi %7, %c1_i32_27 : i32
    %42 = arith.index_cast %41 : i32 to index
    %c1_28 = arith.constant 1 : index
    %c0_29 = arith.constant 0 : index
    %43 = vector.load %arg9[%42, %c1_28, %c0_29] : memref<18x18x8xf32, #tpu.memory_space<vmem>>, vector<8x16x8xf32>
    %44 = vector.shape_cast %43 : vector<8x16x8xf32> to vector<128x8xf32>
    %45 = arith.truncf %44 : vector<128x8xf32> to vector<128x8xbf16>
    %c32 = arith.constant 32 : index
    %c0_30 = arith.constant 0 : index
    %46 = vector.load %arg3[%c32, %c0_30] : memref<72x8xbf16, #tpu.memory_space<vmem>>, vector<8x8xbf16>
    %cst_31 = arith.constant dense<0.000000e+00> : vector<128x8xf32>
    %47 = tpu.matmul %45, %46, %cst_31 {dimension_numbers = #tpu.dot_dimension_numbers<[1], [0], [0], [1], [0, 0, 1, 1], [], []>} : vector<128x8xbf16>, vector<8x8xbf16>, vector<128x8xf32> -> vector<128x8xf32>
    %48 = arith.addf %40, %47 : vector<128x8xf32>
    %c1_i32_32 = arith.constant 1 : i32
    %49 = arith.addi %7, %c1_i32_32 : i32
    %50 = arith.index_cast %49 : i32 to index
    %c2_33 = arith.constant 2 : index
    %c0_34 = arith.constant 0 : index
    %51 = vector.load %arg9[%50, %c2_33, %c0_34] : memref<18x18x8xf32, #tpu.memory_space<vmem>>, vector<8x16x8xf32>
    %52 = vector.shape_cast %51 : vector<8x16x8xf32> to vector<128x8xf32>
    %53 = arith.truncf %52 : vector<128x8xf32> to vector<128x8xbf16>
    %c40 = arith.constant 40 : index
    %c0_35 = arith.constant 0 : index
    %54 = vector.load %arg3[%c40, %c0_35] : memref<72x8xbf16, #tpu.memory_space<vmem>>, vector<8x8xbf16>
    %cst_36 = arith.constant dense<0.000000e+00> : vector<128x8xf32>
    %55 = tpu.matmul %53, %54, %cst_36 {dimension_numbers = #tpu.dot_dimension_numbers<[1], [0], [0], [1], [0, 0, 1, 1], [], []>} : vector<128x8xbf16>, vector<8x8xbf16>, vector<128x8xf32> -> vector<128x8xf32>
    %56 = arith.addf %48, %55 : vector<128x8xf32>
    %c2_i32 = arith.constant 2 : i32
    %57 = arith.addi %7, %c2_i32 : i32
    %58 = arith.index_cast %57 : i32 to index
    %c0_37 = arith.constant 0 : index
    %c0_38 = arith.constant 0 : index
    %59 = vector.load %arg9[%58, %c0_37, %c0_38] : memref<18x18x8xf32, #tpu.memory_space<vmem>>, vector<8x16x8xf32>
    %60 = vector.shape_cast %59 : vector<8x16x8xf32> to vector<128x8xf32>
    %61 = arith.truncf %60 : vector<128x8xf32> to vector<128x8xbf16>
    %c48 = arith.constant 48 : index
    %c0_39 = arith.constant 0 : index
    %62 = vector.load %arg3[%c48, %c0_39] : memref<72x8xbf16, #tpu.memory_space<vmem>>, vector<8x8xbf16>
    %cst_40 = arith.constant dense<0.000000e+00> : vector<128x8xf32>
    %63 = tpu.matmul %61, %62, %cst_40 {dimension_numbers = #tpu.dot_dimension_numbers<[1], [0], [0], [1], [0, 0, 1, 1], [], []>} : vector<128x8xbf16>, vector<8x8xbf16>, vector<128x8xf32> -> vector<128x8xf32>
    %64 = arith.addf %56, %63 : vector<128x8xf32>
    %c2_i32_41 = arith.constant 2 : i32
    %65 = arith.addi %7, %c2_i32_41 : i32
    %66 = arith.index_cast %65 : i32 to index
    %c1_42 = arith.constant 1 : index
    %c0_43 = arith.constant 0 : index
    %67 = vector.load %arg9[%66, %c1_42, %c0_43] : memref<18x18x8xf32, #tpu.memory_space<vmem>>, vector<8x16x8xf32>
    %68 = vector.shape_cast %67 : vector<8x16x8xf32> to vector<128x8xf32>
    %69 = arith.truncf %68 : vector<128x8xf32> to vector<128x8xbf16>
    %c56 = arith.constant 56 : index
    %c0_44 = arith.constant 0 : index
    %70 = vector.load %arg3[%c56, %c0_44] : memref<72x8xbf16, #tpu.memory_space<vmem>>, vector<8x8xbf16>
    %cst_45 = arith.constant dense<0.000000e+00> : vector<128x8xf32>
    %71 = tpu.matmul %69, %70, %cst_45 {dimension_numbers = #tpu.dot_dimension_numbers<[1], [0], [0], [1], [0, 0, 1, 1], [], []>} : vector<128x8xbf16>, vector<8x8xbf16>, vector<128x8xf32> -> vector<128x8xf32>
    %72 = arith.addf %64, %71 : vector<128x8xf32>
    %c2_i32_46 = arith.constant 2 : i32
    %73 = arith.addi %7, %c2_i32_46 : i32
    %74 = arith.index_cast %73 : i32 to index
    %c2_47 = arith.constant 2 : index
    %c0_48 = arith.constant 0 : index
    %75 = vector.load %arg9[%74, %c2_47, %c0_48] : memref<18x18x8xf32, #tpu.memory_space<vmem>>, vector<8x16x8xf32>
    %76 = vector.shape_cast %75 : vector<8x16x8xf32> to vector<128x8xf32>
    %77 = arith.truncf %76 : vector<128x8xf32> to vector<128x8xbf16>
    %c64 = arith.constant 64 : index
    %c0_49 = arith.constant 0 : index
    %78 = vector.load %arg3[%c64, %c0_49] : memref<72x8xbf16, #tpu.memory_space<vmem>>, vector<8x8xbf16>
    %cst_50 = arith.constant dense<0.000000e+00> : vector<128x8xf32>
    %79 = tpu.matmul %77, %78, %cst_50 {dimension_numbers = #tpu.dot_dimension_numbers<[1], [0], [0], [1], [0, 0, 1, 1], [], []>} : vector<128x8xbf16>, vector<8x8xbf16>, vector<128x8xf32> -> vector<128x8xf32>
    %80 = arith.addf %72, %79 : vector<128x8xf32>
    %c0_51 = arith.constant 0 : index
    %c0_52 = arith.constant 0 : index
    %81 = vector.load %arg4[%c0_51, %c0_52] : memref<1x8xf32, #tpu.memory_space<vmem>>, vector<1x8xf32>
    %82 = vector.broadcast %81 : vector<1x8xf32> to vector<128x8xf32>
    %83 = arith.addf %80, %82 : vector<128x8xf32>
    %c0_53 = arith.constant 0 : index
    %c0_54 = arith.constant 0 : index
    %c0_55 = arith.constant 0 : index
    %c0_56 = arith.constant 0 : index
    %84 = vector.load %arg5[%c0_53, %c0_54, %c0_55, %c0_56] : memref<1x8x16x4xbf16, #tpu.memory_space<vmem>>, vector<1x8x16x4xbf16>
    %85 = vector.shape_cast %84 : vector<1x8x16x4xbf16> to vector<8x16x4xbf16>
    %86 = vector.shape_cast %85 : vector<8x16x4xbf16> to vector<128x4xbf16>
    %c0_57 = arith.constant 0 : index
    %c0_58 = arith.constant 0 : index
    %87 = vector.load %arg6[%c0_57, %c0_58] : memref<4x8xbf16, #tpu.memory_space<vmem>>, vector<4x8xbf16>
    %cst_59 = arith.constant dense<0.000000e+00> : vector<128x8xf32>
    %88 = tpu.matmul %86, %87, %cst_59 {dimension_numbers = #tpu.dot_dimension_numbers<[1], [0], [0], [1], [0, 0, 1, 1], [], []>} : vector<128x4xbf16>, vector<4x8xbf16>, vector<128x8xf32> -> vector<128x8xf32>
    %89 = arith.addf %83, %88 : vector<128x8xf32>
    %c0_60 = arith.constant 0 : index
    %c0_61 = arith.constant 0 : index
    %90 = vector.load %arg7[%c0_60, %c0_61] : memref<1x8xf32, #tpu.memory_space<vmem>>, vector<1x8xf32>
    %91 = vector.broadcast %90 : vector<1x8xf32> to vector<128x8xf32>
    %92 = arith.addf %89, %91 : vector<128x8xf32>
    %cst_62 = arith.constant 0.000000e+00 : f32
    %93 = vector.broadcast %cst_62 : f32 to vector<128x8xf32>
    %94 = arith.maximumf %92, %93 : vector<128x8xf32>
    %95 = vector.shape_cast %94 : vector<128x8xf32> to vector<1x8x16x8xf32>
    %c0_63 = arith.constant 0 : index
    %c0_64 = arith.constant 0 : index
    %c0_65 = arith.constant 0 : index
    %c0_66 = arith.constant 0 : index
    %96 = vector.load %arg8[%c0_63, %c0_64, %c0_65, %c0_66] : memref<1x8x16x8xf32, #tpu.memory_space<vmem>>, vector<1x8x16x8xf32>
    tpu.vector_store %arg8[%c0_63, %c0_64, %c0_65, %c0_66], %95 {strides = array<i32>} : memref<1x8x16x8xf32, #tpu.memory_space<vmem>>, vector<1x8x16x8xf32>,
    return
  }
  func.func @transform_0(%arg0: i32, %arg1: i32) -> (i32, i32, i32, i32) {
    %c0_i32 = arith.constant 0 : i32
    %c0_i32_0 = arith.constant 0 : i32
    %c0_i32_1 = arith.constant 0 : i32
    %c0_i32_2 = arith.constant 0 : i32
    return %arg0, %c0_i32, %c0_i32_0, %c0_i32_1 : i32, i32, i32, i32
  }
  func.func @transform_1(%arg0: i32, %arg1: i32) -> (i32, i32) {
    %c0_i32 = arith.constant 0 : i32
    %c0_i32_0 = arith.constant 0 : i32
    %c0_i32_1 = arith.constant 0 : i32
    return %c0_i32, %c0_i32_0 : i32, i32
  }
  func.func @transform_2(%arg0: i32, %arg1: i32) -> (i32, i32) {
    %c0_i32 = arith.constant 0 : i32
    %c0_i32_0 = arith.constant 0 : i32
    %c0_i32_1 = arith.constant 0 : i32
    return %c0_i32, %c0_i32_0 : i32, i32
  }
  func.func @transform_3(%arg0: i32, %arg1: i32) -> (i32, i32, i32, i32) {
    %c0_i32 = arith.constant 0 : i32
    %c0_i32_0 = arith.constant 0 : i32
    %c0_i32_1 = arith.constant 0 : i32
    return %arg0, %arg1, %c0_i32, %c0_i32_0 : i32, i32, i32, i32
  }
  func.func @transform_4(%arg0: i32, %arg1: i32) -> (i32, i32) {
    %c0_i32 = arith.constant 0 : i32
    %c0_i32_0 = arith.constant 0 : i32
    %c0_i32_1 = arith.constant 0 : i32
    return %c0_i32, %c0_i32_0 : i32, i32
  }
  func.func @transform_5(%arg0: i32, %arg1: i32) -> (i32, i32) {
    %c0_i32 = arith.constant 0 : i32
    %c0_i32_0 = arith.constant 0 : i32
    %c0_i32_1 = arith.constant 0 : i32
    return %c0_i32, %c0_i32_0 : i32, i32
  }
  func.func @transform_6(%arg0: i32, %arg1: i32) -> (i32, i32, i32, i32) {
    %c0_i32 = arith.constant 0 : i32
    %c0_i32_0 = arith.constant 0 : i32
    %c0_i32_1 = arith.constant 0 : i32
    return %arg0, %arg1, %c0_i32, %c0_i32_0 : i32, i32, i32, i32
  }
}

</mosaic_0001>

<llo_original>
// kernel: basic_block_forward.2
$region0: #{basic_block_forward.2}
  #allocation0 [shape = 'u32[]', space=smem, size = 0x4, offset = 0x4, fixed_abs, tag = 'smem constant byte address 0x4 - core index']
  #allocation1 [shape = 'u32[144,128]{1,0:T(1,128)}', space=vmem, size = 0x12000, scoped, tag = 'internal scratch']
  #allocation2 [shape = 'f32[18,18,4]{2,1,0:T(8,128)}', space=vmem, size = 0x36000, scoped, tag = 'scratch operand']
  %s0 = inlined_call_operand.vmem [shape: bf16[2,16,16,4], index: 0, kind: input, shape index: {}]
  %s1 = inlined_call_operand.vmem [shape: bf16[36,8], index: 1, kind: input, shape index: {}]
  %s2 = inlined_call_operand.vmem [shape: f32[1,8], index: 2, kind: input, shape index: {}]
  %s3 = inlined_call_operand.vmem [shape: bf16[2,16,16,8], index: 3, kind: output, shape index: {}]
  %s4 = sld [smem:[#allocation0]]
  $region45: #{basic_block_forward.2} parent=0
    _
  %s6 = ssub.s32 1, %s4
  %s7 = scalar_select 0, %s6, %s4
  loop: start=0, step=1, limit=6
  $region2: #{basic_block_forward.2} parent=0 // loop_pre_header
    _
  $region3: #{basic_block_forward.2} parent=0 // loop_header
    %s9 = sphi 0, %s13
    %p10 = scmp.ge.s32.totalorder %s9, 6
    %s16 = sphi 0, %s28
    %s17 = sphi 0, %s24
    %s18 = sphi 0, %s16
    %s19 = sphi 0, %s17
    %s20 = sphi 0, %s18
    %s21 = sphi 0, %s19
    %s31 = sphi 0, %s33
    %s34 = sphi 0, %s31
    %s35 = sphi 0, %s34
    %s51 = sphi 0, %s35
    %s55 = sphi 0, %s55
    %s57 = sphi 0, %s55
    %s58 = sphi 0, %s57
    %s72 = sphi 0, %s58
    %s76 = sphi 0, %s76
    %s78 = sphi 0, %s76
    %s79 = sphi 0, %s78
    %s93 = sphi 0, %s79
    %s101 = sphi 0, %s103
    %s104 = sphi 0, %s101
    %s105 = sphi 0, %s104
    %s121 = sphi 0, %s105
  $region4: #{basic_block_forward.2} parent=0 // loop_header_branch
    %12 = sbr.rel (%p10) target = $region8
  $region5: #{basic_block_forward.2} parent=0 // loop_body
    %s14 = ssub.s32 %s9, 1
    %s15 = ssub.s32 %s9, 2
    %s22 = sadd.s32 1, %s17
    %p23 = scmp.ge.s32.totalorder %s22, 2
    %s24 = scalar_select %p23, 0, %s22
    %s25 = sadd.s32 1, %s16
    %s26 = scalar_select %p23, %s25, %s16
    %p27 = scmp.ge.s32.totalorder %s26, 2
    %s28 = scalar_select %p27, 0, %s26
    %s29 = ssub.s32 %s16, %s28
    %p30 = scmp.eq.s32.totalorder %s29, 0
    %s32 = sadd.s32 %s31, 1
    %s33 = scalar_select %p30, %s31, %s32
    %p36 = pneg %p30
    %p37 = scmp.eq.s32.totalorder %s9, 3
    %p38 = por %p36, %p37
    %p39 = scmp.ne.s32.totalorder %s31, %s34
    %p40 = scmp.eq.s32.totalorder %s9, 0
    %p41 = por %p39, %p40
    %p42 = scmp.ne.s32.totalorder %s31, %s34
    %p43 = scmp.eq.s32.totalorder %s14, 3
    %p44 = por %p42, %p43
    %p45 = scmp.ne.s32.totalorder %s34, %s35
    %p46 = scmp.eq.s32.totalorder %s14, 0
    %p47 = por %p45, %p46
    %p48 = scmp.ne.s32.totalorder %s34, %s35
    %p49 = scmp.eq.s32.totalorder %s15, 3
    %p50 = por %p48, %p49
    %p52 = scmp.ne.s32.totalorder %s35, %s51
    %p53 = scmp.eq.s32.totalorder %s15, 0
    %p54 = por %p52, %p53
    %s56 = sadd.s32 %s55, 1
    %p59 = scmp.eq.s32.totalorder %s9, 3
    %p60 = scmp.ne.s32.totalorder %s55, %s57
    %p61 = scmp.eq.s32.totalorder %s9, 0
    %p62 = por %p60, %p61
    %p63 = scmp.ne.s32.totalorder %s55, %s57
    %p64 = scmp.eq.s32.totalorder %s14, 3
    %p65 = por %p63, %p64
    %p66 = scmp.ne.s32.totalorder %s57, %s58
    %p67 = scmp.eq.s32.totalorder %s14, 0
    %p68 = por %p66, %p67
    %p69 = scmp.ne.s32.totalorder %s57, %s58
    %p70 = scmp.eq.s32.totalorder %s15, 3
    %p71 = por %p69, %p70
    %p73 = scmp.ne.s32.totalorder %s58, %s72
    %p74 = scmp.eq.s32.totalorder %s15, 0
    %p75 = por %p73, %p74
    %s77 = sadd.s32 %s76, 1
    %p80 = scmp.eq.s32.totalorder %s9, 3
    %p81 = scmp.ne.s32.totalorder %s76, %s78
    %p82 = scmp.eq.s32.totalorder %s9, 0
    %p83 = por %p81, %p82
    %p84 = scmp.ne.s32.totalorder %s76, %s78
    %p85 = scmp.eq.s32.totalorder %s14, 3
    %p86 = por %p84, %p85
    %p87 = scmp.ne.s32.totalorder %s78, %s79
    %p88 = scmp.eq.s32.totalorder %s14, 0
    %p89 = por %p87, %p88
    %p90 = scmp.ne.s32.totalorder %s78, %s79
    %p91 = scmp.eq.s32.totalorder %s15, 3
    %p92 = por %p90, %p91
    %p94 = scmp.ne.s32.totalorder %s79, %s93
    %p95 = scmp.eq.s32.totalorder %s15, 0
    %p96 = por %p94, %p95
    %s97 = ssub.s32 %s16, %s28
    %s98 = ssub.s32 %s17, %s24
    %s99 = sor.u32 %s97, %s98
    %p100 = scmp.eq.s32.totalorder %s99, 0
    %s102 = sadd.s32 %s101, 1
    %s103 = scalar_select %p100, %s101, %s102
    %p106 = pneg %p100
    %p107 = scmp.eq.s32.totalorder %s9, 3
    %p108 = por %p106, %p107
    %p109 = scmp.ne.s32.totalorder %s101, %s104
    %p110 = scmp.eq.s32.totalorder %s9, 0
    %p111 = por %p109, %p110
    %p112 = scmp.ne.s32.totalorder %s101, %s104
    %p113 = scmp.eq.s32.totalorder %s14, 3
    %p114 = por %p112, %p113
    %p115 = scmp.ne.s32.totalorder %s104, %s105
    %p116 = scmp.eq.s32.totalorder %s14, 0
    %p117 = por %p115, %p116
    %p118 = scmp.ne.s32.totalorder %s104, %s105
    %p119 = scmp.eq.s32.totalorder %s15, 3
    %p120 = por %p118, %p119
    %p122 = scmp.ne.s32.totalorder %s105, %s121
    %p123 = scmp.eq.s32.totalorder %s15, 0
    %p124 = por %p122, %p123
    %p125 = scmp.le.s32.totalorder 1, %s9
    %p126 = scmp.lt.s32.totalorder %s9, 5
    %p127 = pnand %p125, %p126
    %p128 = pneg %p127
    // Predicated region
    $region9: #{basic_block_forward.2} parent=5 // pred_check
      _
    $region10: #{basic_block_forward.2} parent=5 // pred_check_branch
      %130 = sbr.rel (%p127) target = $region12
    $region11: #{basic_block_forward.2} parent=5 // pred_region
      %s131 = ssub.s32 %s9, 1
      // Predicated region
      $region13: #{basic_block_forward.2} parent=11 // pred_check
        %p132 = pneg %p68
      $region14: #{basic_block_forward.2} parent=11 // pred_check_branch
        %134 = sbr.rel (%p132) target = $region16
      $region15: #{basic_block_forward.2} parent=11 // pred_region
        _
      $region16: #{basic_block_forward.2} parent=11 // pred_fallthru
        _
      // Predicated region
      $region17: #{basic_block_forward.2} parent=11 // pred_check
        %p135 = pneg %p89
      $region18: #{basic_block_forward.2} parent=11 // pred_check_branch
        %137 = sbr.rel (%p135) target = $region20
      $region19: #{basic_block_forward.2} parent=11 // pred_region
        _
      $region20: #{basic_block_forward.2} parent=11 // pred_fallthru
        _
    $region12: #{basic_block_forward.2} parent=5 // pred_fallthru
      _
    %p138 = scmp.lt.s32.totalorder %s9, 4
    // Predicated region
    $region21: #{basic_block_forward.2} parent=5 // pred_check
      %p139 = pneg %p138
    $region22: #{basic_block_forward.2} parent=5 // pred_check_branch
      %141 = sbr.rel (%p139) target = $region24
    $region23: #{basic_block_forward.2} parent=5 // pred_region
      // Predicated region
      $region25: #{basic_block_forward.2} parent=23 // pred_check
        %p142 = pneg %p41
      $region26: #{basic_block_forward.2} parent=23 // pred_check_branch
        %144 = sbr.rel (%p142) target = $region28
      $region27: #{basic_block_forward.2} parent=23 // pred_region
        %p145 = scmp.lt.s32.totalorder %s16, 1
        %s146 = scalar_select %p145, %s16, 1
        %s147 = smul.addr %s146, 32
        %s148 = smul.addr %s147, 4
        %s149 = scalar_lea.vmem %s0, %s148
      $region28: #{basic_block_forward.2} parent=23 // pred_fallthru
        _
    $region24: #{basic_block_forward.2} parent=5 // pred_fallthru
      _
    %p150 = scmp.le.s32.totalorder 1, %s9
    %p151 = scmp.lt.s32.totalorder %s9, 5
    %p152 = pnand %p150, %p151
    %p153 = pneg %p152
    // Predicated region
    $region29: #{basic_block_forward.2} parent=5 // pred_check
      _
    $region30: #{basic_block_forward.2} parent=5 // pred_check_branch
      %155 = sbr.rel (%p152) target = $region32
    $region31: #{basic_block_forward.2} parent=5 // pred_region
      %s156 = ssub.s32 %s9, 1
      %p157 = scmp.lt.s32.totalorder %s18, 1
      %s158 = scalar_select %p157, %s18, 1
      %s159 = smul.addr %s158, 32
      %s160 = smul.addr %s159, 4
      %s161 = scalar_lea.vmem %s0, %s160
      %p162 = pneg %p47
      %p163 = pneg %p44
      %p164 = pneg %p68
      %p165 = pneg %p65
      %p166 = pneg %p89
      %p167 = pneg %p86
      %p168 = pneg %p117
      %p169 = pneg %p114
      %s170 = smul.u32 8, %s19
      %p171 = scmp.lt.s32.totalorder %s18, 1
      %s172 = scalar_select %p171, %s18, 1
      %p173 = scmp.lt.s32.totalorder %s170, 15
      %s174 = scalar_select %p173, %s170, 15
      %s175 = smul.addr %s174, 2
      %s176 = smul.addr %s172, 32
      %s177 = sadd.s32 %s175, %s176
      %s178 = smul.addr %s177, 4
      %s179 = scalar_lea.vmem %s3, %s178
      %p180 = scmp.lt.s32.totalorder %s18, 1
      %s181 = scalar_select %p180, %s18, 1
      %s182 = smul.addr %s181, 32
      %s183 = smul.addr %s182, 4
      %s184 = scalar_lea.vmem %s0, %s183
      %s185 = smul.u32 8, %s19
      %p186 = scmp.lt.s32.totalorder %s18, 1
      %s187 = scalar_select %p186, %s18, 1
      %p188 = scmp.lt.s32.totalorder %s185, 15
      %s189 = scalar_select %p188, %s185, 15
      %s190 = smul.addr %s189, 2
      %s191 = smul.addr %s187, 32
      %s192 = sadd.s32 %s190, %s191
      %s193 = smul.addr %s192, 4
      %s194 = scalar_lea.vmem %s3, %s193
      %s195 = smul.u32 8, %s19
      %vm197 = vcmask 31744
      %198 = vst.msk [vmem:[#allocation2] sm:$0xff] %vm197, 0.0
      %199 = vst.msk [vmem:[#allocation2 + $0x8] sm:$0xff] %vm197, 0.0
      %vm200 = vcmask 25600
      %201 = vst.msk [vmem:[#allocation2 + $0x10] sm:$0x3] %vm200, 0.0
      %202 = vst.msk [vmem:[#allocation2 + $0x18] sm:$0xff] %vm197, 0.0
      %203 = vst.msk [vmem:[#allocation2 + $0x20] sm:$0xff] %vm197, 0.0
      %204 = vst.msk [vmem:[#allocation2 + $0x28] sm:$0x3] %vm200, 0.0
      %205 = vst.msk [vmem:[#allocation2 + $0x30] sm:$0xff] %vm197, 0.0
      %206 = vst.msk [vmem:[#allocation2 + $0x38] sm:$0xff] %vm197, 0.0
      %207 = vst.msk [vmem:[#allocation2 + $0x40] sm:$0x3] %vm200, 0.0
      %208 = vst.msk [vmem:[#allocation2 + $0x48] sm:$0xff] %vm197, 0.0
      %209 = vst.msk [vmem:[#allocation2 + $0x50] sm:$0xff] %vm197, 0.0
      %210 = vst.msk [vmem:[#allocation2 + $0x58] sm:$0x3] %vm200, 0.0
      %211 = vst.msk [vmem:[#allocation2 + $0x60] sm:$0xff] %vm197, 0.0
      %212 = vst.msk [vmem:[#allocation2 + $0x68] sm:$0xff] %vm197, 0.0
      %213 = vst.msk [vmem:[#allocation2 + $0x70] sm:$0x3] %vm200, 0.0
      %214 = vst.msk [vmem:[#allocation2 + $0x78] sm:$0xff] %vm197, 0.0
      %215 = vst.msk [vmem:[#allocation2 + $0x80] sm:$0xff] %vm197, 0.0
      %216 = vst.msk [vmem:[#allocation2 + $0x88] sm:$0x3] %vm200, 0.0
      %217 = vst.msk [vmem:[#allocation2 + $0x90] sm:$0xff] %vm197, 0.0
      %218 = vst.msk [vmem:[#allocation2 + $0x98] sm:$0xff] %vm197, 0.0
      %219 = vst.msk [vmem:[#allocation2 + $0xa0] sm:$0x3] %vm200, 0.0
      %220 = vst.msk [vmem:[#allocation2 + $0xa8] sm:$0xff] %vm197, 0.0
      %221 = vst.msk [vmem:[#allocation2 + $0xb0] sm:$0xff] %vm197, 0.0
      %222 = vst.msk [vmem:[#allocation2 + $0xb8] sm:$0x3] %vm200, 0.0
      %223 = vst.msk [vmem:[#allocation2 + $0xc0] sm:$0xff] %vm197, 0.0
      %224 = vst.msk [vmem:[#allocation2 + $0xc8] sm:$0xff] %vm197, 0.0
      %225 = vst.msk [vmem:[#allocation2 + $0xd0] sm:$0x3] %vm200, 0.0
      %226 = vst.msk [vmem:[#allocation2 + $0xd8] sm:$0xff] %vm197, 0.0
      %227 = vst.msk [vmem:[#allocation2 + $0xe0] sm:$0xff] %vm197, 0.0
      %228 = vst.msk [vmem:[#allocation2 + $0xe8] sm:$0x3] %vm200, 0.0
      %229 = vst.msk [vmem:[#allocation2 + $0xf0] sm:$0xff] %vm197, 0.0
      %230 = vst.msk [vmem:[#allocation2 + $0xf8] sm:$0xff] %vm197, 0.0
      %231 = vst.msk [vmem:[#allocation2 + $0x100] sm:$0x3] %vm200, 0.0
      %232 = vst.msk [vmem:[#allocation2 + $0x108] sm:$0xff] %vm197, 0.0
      %233 = vst.msk [vmem:[#allocation2 + $0x110] sm:$0xff] %vm197, 0.0
      %234 = vst.msk [vmem:[#allocation2 + $0x118] sm:$0x3] %vm200, 0.0
      %235 = vst.msk [vmem:[#allocation2 + $0x120] sm:$0xff] %vm197, 0.0
      %236 = vst.msk [vmem:[#allocation2 + $0x128] sm:$0xff] %vm197, 0.0
      %237 = vst.msk [vmem:[#allocation2 + $0x130] sm:$0x3] %vm200, 0.0
      %238 = vst.msk [vmem:[#allocation2 + $0x138] sm:$0xff] %vm197, 0.0
      %239 = vst.msk [vmem:[#allocation2 + $0x140] sm:$0xff] %vm197, 0.0
      %240 = vst.msk [vmem:[#allocation2 + $0x148] sm:$0x3] %vm200, 0.0
      %241 = vst.msk [vmem:[#allocation2 + $0x150] sm:$0xff] %vm197, 0.0
      %242 = vst.msk [vmem:[#allocation2 + $0x158] sm:$0xff] %vm197, 0.0
      %243 = vst.msk [vmem:[#allocation2 + $0x160] sm:$0x3] %vm200, 0.0
      %244 = vst.msk [vmem:[#allocation2 + $0x168] sm:$0xff] %vm197, 0.0
      %245 = vst.msk [vmem:[#allocation2 + $0x170] sm:$0xff] %vm197, 0.0
      %246 = vst.msk [vmem:[#allocation2 + $0x178] sm:$0x3] %vm200, 0.0
      %247 = vst.msk [vmem:[#allocation2 + $0x180] sm:$0xff] %vm197, 0.0
      %248 = vst.msk [vmem:[#allocation2 + $0x188] sm:$0xff] %vm197, 0.0
      %249 = vst.msk [vmem:[#allocation2 + $0x190] sm:$0x3] %vm200, 0.0
      %250 = vst.msk [vmem:[#allocation2 + $0x198] sm:$0xff] %vm197, 0.0
      %251 = vst.msk [vmem:[#allocation2 + $0x1a0] sm:$0xff] %vm197, 0.0
      %252 = vst.msk [vmem:[#allocation2 + $0x1a8] sm:$0x3] %vm200, 0.0
      %v253 = vld [vmem:[%s184] sm:$0xf]
      %v254 = vld [vmem:[%s184 + $0x4] sm:$0xf]
      %v255 = vld [vmem:[%s184 + $0x8] sm:$0xf]
      %v256 = vld [vmem:[%s184 + $0xc] sm:$0xf]
      %v257 = vld [vmem:[%s184 + $0x10] sm:$0xf]
      %v258 = vld [vmem:[%s184 + $0x14] sm:$0xf]
      %v259 = vld [vmem:[%s184 + $0x18] sm:$0xf]
      %v260 = vld [vmem:[%s184 + $0x1c] sm:$0xf]
      %v261 = vld [vmem:[%s184 + $0x20] sm:$0xf]
      %v262 = vld [vmem:[%s184 + $0x24] sm:$0xf]
      %v263 = vld [vmem:[%s184 + $0x28] sm:$0xf]
      %v264 = vld [vmem:[%s184 + $0x2c] sm:$0xf]
      %v265 = vld [vmem:[%s184 + $0x30] sm:$0xf]
      %v266 = vld [vmem:[%s184 + $0x34] sm:$0xf]
      %v267 = vld [vmem:[%s184 + $0x38] sm:$0xf]
      %v268 = vld [vmem:[%s184 + $0x3c] sm:$0xf]
      %v269 = vld [vmem:[%s184 + $0x40] sm:$0xf]
      %v270 = vld [vmem:[%s184 + $0x44] sm:$0xf]
      %v271 = vld [vmem:[%s184 + $0x48] sm:$0xf]
      %v272 = vld [vmem:[%s184 + $0x4c] sm:$0xf]
      %v273 = vld [vmem:[%s184 + $0x50] sm:$0xf]
      %v274 = vld [vmem:[%s184 + $0x54] sm:$0xf]
      %v275 = vld [vmem:[%s184 + $0x58] sm:$0xf]
      %v276 = vld [vmem:[%s184 + $0x5c] sm:$0xf]
      %v277 = vld [vmem:[%s184 + $0x60] sm:$0xf]
      %v278 = vld [vmem:[%s184 + $0x64] sm:$0xf]
      %v279 = vld [vmem:[%s184 + $0x68] sm:$0xf]
      %v280 = vld [vmem:[%s184 + $0x6c] sm:$0xf]
      %v281 = vld [vmem:[%s184 + $0x70] sm:$0xf]
      %v282 = vld [vmem:[%s184 + $0x74] sm:$0xf]
      %v283 = vld [vmem:[%s184 + $0x78] sm:$0xf]
      %v284 = vld [vmem:[%s184 + $0x7c] sm:$0xf]
      %v285 = vunpack.c.l.bf16 %v253
      %v286 = vunpack.c.l.bf16 %v254
      %v287 = vunpack.c.l.bf16 %v255
      %v288 = vunpack.c.l.bf16 %v256
      %v289 = vunpack.c.l.bf16 %v257
      %v290 = vunpack.c.l.bf16 %v258
      %v291 = vunpack.c.l.bf16 %v259
      %v292 = vunpack.c.l.bf16 %v260
      %v293 = vunpack.c.l.bf16 %v261
      %v294 = vunpack.c.l.bf16 %v262
      %v295 = vunpack.c.l.bf16 %v263
      %v296 = vunpack.c.l.bf16 %v264
      %v297 = vunpack.c.l.bf16 %v265
      %v298 = vunpack.c.l.bf16 %v266
      %v299 = vunpack.c.l.bf16 %v267
      %v300 = vunpack.c.l.bf16 %v268
      %v301 = vunpack.c.l.bf16 %v269
      %v302 = vunpack.c.l.bf16 %v270
      %v303 = vunpack.c.l.bf16 %v271
      %v304 = vunpack.c.l.bf16 %v272
      %v305 = vunpack.c.l.bf16 %v273
      %v306 = vunpack.c.l.bf16 %v274
      %v307 = vunpack.c.l.bf16 %v275
      %v308 = vunpack.c.l.bf16 %v276
      %v309 = vunpack.c.l.bf16 %v277
      %v310 = vunpack.c.l.bf16 %v278
      %v311 = vunpack.c.l.bf16 %v279
      %v312 = vunpack.c.l.bf16 %v280
      %v313 = vunpack.c.l.bf16 %v281
      %v314 = vunpack.c.l.bf16 %v282
      %v315 = vunpack.c.l.bf16 %v283
      %v316 = vunpack.c.l.bf16 %v284
      %s317 = scalar_lea.vmem [#allocation2], 24
      %318 = vst.msk [vmem:[%s317 + $0x1] sm:$0xff] %vm197, %v285
      %319 = vst.msk [vmem:[%s317 + $0x9] sm:$0xff] %vm197, %v286
      %320 = vst.msk [vmem:[%s317 + $0x19] sm:$0xff] %vm197, %v287
      %321 = vst.msk [vmem:[%s317 + $0x21] sm:$0xff] %vm197, %v288
      %322 = vst.msk [vmem:[%s317 + $0x31] sm:$0xff] %vm197, %v289
      %323 = vst.msk [vmem:[%s317 + $0x39] sm:$0xff] %vm197, %v290
      %324 = vst.msk [vmem:[%s317 + $0x49] sm:$0xff] %vm197, %v291
      %325 = vst.msk [vmem:[%s317 + $0x51] sm:$0xff] %vm197, %v292
      %326 = vst.msk [vmem:[%s317 + $0x61] sm:$0xff] %vm197, %v293
      %327 = vst.msk [vmem:[%s317 + $0x69] sm:$0xff] %vm197, %v294
      %328 = vst.msk [vmem:[%s317 + $0x79] sm:$0xff] %vm197, %v295
      %329 = vst.msk [vmem:[%s317 + $0x81] sm:$0xff] %vm197, %v296
      %330 = vst.msk [vmem:[%s317 + $0x91] sm:$0xff] %vm197, %v297
      %331 = vst.msk [vmem:[%s317 + $0x99] sm:$0xff] %vm197, %v298
      %332 = vst.msk [vmem:[%s317 + $0xa9] sm:$0xff] %vm197, %v299
      %333 = vst.msk [vmem:[%s317 + $0xb1] sm:$0xff] %vm197, %v300
      %334 = vst.msk [vmem:[%s317 + $0xc1] sm:$0xff] %vm197, %v301
      %335 = vst.msk [vmem:[%s317 + $0xc9] sm:$0xff] %vm197, %v302
      %336 = vst.msk [vmem:[%s317 + $0xd9] sm:$0xff] %vm197, %v303
      %337 = vst.msk [vmem:[%s317 + $0xe1] sm:$0xff] %vm197, %v304
      %338 = vst.msk [vmem:[%s317 + $0xf1] sm:$0xff] %vm197, %v305
      %339 = vst.msk [vmem:[%s317 + $0xf9] sm:$0xff] %vm197, %v306
      %340 = vst.msk [vmem:[%s317 + $0x109] sm:$0xff] %vm197, %v307
      %341 = vst.msk [vmem:[%s317 + $0x111] sm:$0xff] %vm197, %v308
      %342 = vst.msk [vmem:[%s317 + $0x121] sm:$0xff] %vm197, %v309
      %343 = vst.msk [vmem:[%s317 + $0x129] sm:$0xff] %vm197, %v310
      %344 = vst.msk [vmem:[%s317 + $0x139] sm:$0xff] %vm197, %v311
      %345 = vst.msk [vmem:[%s317 + $0x141] sm:$0xff] %vm197, %v312
      %346 = vst.msk [vmem:[%s317 + $0x151] sm:$0xff] %vm197, %v313
      %347 = vst.msk [vmem:[%s317 + $0x159] sm:$0xff] %vm197, %v314
      %348 = vst.msk [vmem:[%s317 + $0x169] sm:$0xff] %vm197, %v315
      %349 = vst.msk [vmem:[%s317 + $0x171] sm:$0xff] %vm197, %v316
      %s350 = smul.u32 %s19, 8
      %s351 = smul.u32 %s350, 24
      %s352 = scalar_lea.vmem [#allocation2], %s351
      %v353 = vld [vmem:[%s352] sm:$0xff]
      %v354 = vld [vmem:[%s352 + $0x8] sm:$0xff]
      %v355 = vld [vmem:[%s352 + $0x18] sm:$0xff]
      %v356 = vld [vmem:[%s352 + $0x20] sm:$0xff]
      %v357 = vld [vmem:[%s352 + $0x30] sm:$0xff]
      %v358 = vld [vmem:[%s352 + $0x38] sm:$0xff]
      %v359 = vld [vmem:[%s352 + $0x48] sm:$0xff]
      %v360 = vld [vmem:[%s352 + $0x50] sm:$0xff]
      %v361 = vld [vmem:[%s352 + $0x60] sm:$0xff]
      %v362 = vld [vmem:[%s352 + $0x68] sm:$0xff]
      %v363 = vld [vmem:[%s352 + $0x78] sm:$0xff]
      %v364 = vld [vmem:[%s352 + $0x80] sm:$0xff]
      %v365 = vld [vmem:[%s352 + $0x90] sm:$0xff]
      %v366 = vld [vmem:[%s352 + $0x98] sm:$0xff]
      %v367 = vld [vmem:[%s352 + $0xa8] sm:$0xff]
      %v368 = vld [vmem:[%s352 + $0xb0] sm:$0xff]
      %v369 = vpack.c.bf16 %v354, %v353
      %v370 = vpack.c.bf16 %v356, %v355
      %v371 = vpack.c.bf16 %v358, %v357
      %v372 = vpack.c.bf16 %v360, %v359
      %v373 = vpack.c.bf16 %v362, %v361
      %v374 = vpack.c.bf16 %v364, %v363
      %v375 = vpack.c.bf16 %v366, %v365
      %v376 = vpack.c.bf16 %v368, %v367
      %v377 = vld [vmem:[%s1] sm:$0x3]
      %v378 = vld [vmem:[%s352 + $0x1] sm:$0xff]
      %v379 = vld [vmem:[%s352 + $0x9] sm:$0xff]
      %v380 = vld [vmem:[%s352 + $0x19] sm:$0xff]
      %v381 = vld [vmem:[%s352 + $0x21] sm:$0xff]
      %v382 = vld [vmem:[%s352 + $0x31] sm:$0xff]
      %v383 = vld [vmem:[%s352 + $0x39] sm:$0xff]
      %v384 = vld [vmem:[%s352 + $0x49] sm:$0xff]
      %v385 = vld [vmem:[%s352 + $0x51] sm:$0xff]
      %v386 = vld [vmem:[%s352 + $0x61] sm:$0xff]
      %v387 = vld [vmem:[%s352 + $0x69] sm:$0xff]
      %v388 = vld [vmem:[%s352 + $0x79] sm:$0xff]
      %v389 = vld [vmem:[%s352 + $0x81] sm:$0xff]
      %v390 = vld [vmem:[%s352 + $0x91] sm:$0xff]
      %v391 = vld [vmem:[%s352 + $0x99] sm:$0xff]
      %v392 = vld [vmem:[%s352 + $0xa9] sm:$0xff]
      %v393 = vld [vmem:[%s352 + $0xb1] sm:$0xff]
      %v394 = vpack.c.bf16 %v379, %v378
      %v395 = vpack.c.bf16 %v381, %v380
      %v396 = vpack.c.bf16 %v383, %v382
      %v397 = vpack.c.bf16 %v385, %v384
      %v398 = vpack.c.bf16 %v387, %v386
      %v399 = vpack.c.bf16 %v389, %v388
      %v400 = vpack.c.bf16 %v391, %v390
      %v401 = vpack.c.bf16 %v393, %v392
      %v402 = vld [vmem:[%s1] sm:$0xc]
      %v404 = vunpack.c.l.b16 %v402
      %v405 = vpack.c.b16 %v404, %v404
      %v406 = vrot.slane %v405, 2
      %v408 = vsel %vm197, %v394, 0
      %v411 = vsel %vm197, %v395, 0
      %v414 = vsel %vm197, %v396, 0
      %v417 = vsel %vm197, %v397, 0
      %v420 = vsel %vm197, %v398, 0
      %v423 = vsel %vm197, %v399, 0
      %v426 = vsel %vm197, %v400, 0
      %v429 = vsel %vm197, %v401, 0
      %vm431 = vcmask 1041408
      %v433 = vsel %vm431, %v406, 0
      %435 = vmatprep.subr.bf16.mxu0 0
      %436 = vmatpush1.bf16.msra.mxu0 0
      %437 = vmatprep.subr.bf16.mxu0 0
      %438 = vmatpush1.bf16.msra.mxu0 0
      %439 = vmatprep.subr.bf16.mxu0 0
      %440 = vmatpush1.bf16.msra.mxu0 0
      %441 = vmatprep.subr.bf16.mxu0 0
      %442 = vmatpush1.bf16.msra.mxu0 0
      %443 = vmatprep.subr.bf16.mxu0 0
      %444 = vmatpush1.bf16.msra.mxu0 0
      %445 = vmatprep.subr.bf16.mxu0 0
      %446 = vmatpush1.bf16.msra.mxu0 0
      %447 = vmatprep.subr.bf16.mxu0 0
      %448 = vmatpush1.bf16.msra.mxu0 0
      %449 = vmatprep.subr.bf16.mxu0 0
      %450 = vmatpush1.bf16.msra.mxu0 %v433
      %451 = vmatprep.subr.bf16.mxu0 0
      %452 = vmatpush2.bf16.msra.mxu0 0
      %453 = vmatprep.subr.bf16.mxu0 0
      %454 = vmatpush2.bf16.msra.mxu0 0
      %455 = vmatprep.subr.bf16.mxu0 0
      %456 = vmatpush2.bf16.msra.mxu0 0
      %457 = vmatprep.subr.bf16.mxu0 0
      %458 = vmatpush2.bf16.msra.mxu0 0
      %459 = vmatprep.subr.bf16.mxu0 0
      %460 = vmatpush2.bf16.msra.mxu0 0
      %461 = vmatprep.subr.bf16.mxu0 0
      %462 = vmatpush2.bf16.msra.mxu0 0
      %463 = vmatprep.subr.bf16.mxu0 0
      %464 = vmatpush2.bf16.msra.mxu0 0
      %465 = vmatprep.subr.bf16.mxu0 0
      %466 = vmatpush2.bf16.msra.mxu0 0
      %467 = vmatprep.mubr.bf16.mxu0 0
      %468 = vmatmul.mubr.bf16.gmra.mxu0 %v408
      %v469 = vpop.f32.mrf.mxu0
      %v470 = vadd.f32 0.0, %v469
      %v471 = vpop.f32.mrf.mxu0
      %v472 = vpop.f32.mrf.mxu0
      %v473 = vadd.f32 0.0, %v472
      %v474 = vpop.f32.mrf.mxu0
      %475 = vmatprep.mubr.bf16.mxu0 0
      %476 = vmatmul.mubr.bf16.gmra.mxu0 %v411
      %v477 = vpop.f32.mrf.mxu0
      %v478 = vadd.f32 0.0, %v477
      %v479 = vpop.f32.mrf.mxu0
      %v480 = vpop.f32.mrf.mxu0
      %v481 = vadd.f32 0.0, %v480
      %v482 = vpop.f32.mrf.mxu0
      %483 = vmatprep.mubr.bf16.mxu0 0
      %484 = vmatmul.mubr.bf16.gmra.mxu0 %v414
      %v485 = vpop.f32.mrf.mxu0
      %v486 = vadd.f32 0.0, %v485
      %v487 = vpop.f32.mrf.mxu0
      %v488 = vpop.f32.mrf.mxu0
      %v489 = vadd.f32 0.0, %v488
      %v490 = vpop.f32.mrf.mxu0
      %491 = vmatprep.mubr.bf16.mxu0 0
      %492 = vmatmul.mubr.bf16.gmra.mxu0 %v417
      %v493 = vpop.f32.mrf.mxu0
      %v494 = vadd.f32 0.0, %v493
      %v495 = vpop.f32.mrf.mxu0
      %v496 = vpop.f32.mrf.mxu0
      %v497 = vadd.f32 0.0, %v496
      %v498 = vpop.f32.mrf.mxu0
      %499 = vmatprep.mubr.bf16.mxu0 0
      %500 = vmatmul.mubr.bf16.gmra.mxu0 %v420
      %v501 = vpop.f32.mrf.mxu0
      %v502 = vadd.f32 0.0, %v501
      %v503 = vpop.f32.mrf.mxu0
      %v504 = vpop.f32.mrf.mxu0
      %v505 = vadd.f32 0.0, %v504
      %v506 = vpop.f32.mrf.mxu0
      %507 = vmatprep.mubr.bf16.mxu0 0
      %508 = vmatmul.mubr.bf16.gmra.mxu0 %v423
      %v509 = vpop.f32.mrf.mxu0
      %v510 = vadd.f32 0.0, %v509
      %v511 = vpop.f32.mrf.mxu0
      %v512 = vpop.f32.mrf.mxu0
      %v513 = vadd.f32 0.0, %v512
      %v514 = vpop.f32.mrf.mxu0
      %515 = vmatprep.mubr.bf16.mxu0 0
      %516 = vmatmul.mubr.bf16.gmra.mxu0 %v426
      %v517 = vpop.f32.mrf.mxu0
      %v518 = vadd.f32 0.0, %v517
      %v519 = vpop.f32.mrf.mxu0
      %v520 = vpop.f32.mrf.mxu0
      %v521 = vadd.f32 0.0, %v520
      %v522 = vpop.f32.mrf.mxu0
      %523 = vmatprep.mubr.bf16.mxu0 0
      %524 = vmatmul.mubr.bf16.gmra.mxu0 %v429
      %v525 = vpop.f32.mrf.mxu0
      %v526 = vadd.f32 0.0, %v525
      %v527 = vpop.f32.mrf.mxu0
      %v528 = vpop.f32.mrf.mxu0
      %v529 = vadd.f32 0.0, %v528
      %v530 = vpop.f32.mrf.mxu0
      %531 = vdwg.mxu0
      %v533 = vsel %vm197, %v369, 0
      %v536 = vsel %vm197, %v370, 0
      %v539 = vsel %vm197, %v371, 0
      %v542 = vsel %vm197, %v372, 0
      %v545 = vsel %vm197, %v373, 0
      %v548 = vsel %vm197, %v374, 0
      %v551 = vsel %vm197, %v375, 0
      %v554 = vsel %vm197, %v376, 0
      %v557 = vsel %vm431, %v377, 0
      %559 = vmatprep.subr.bf16.mxu0 0
      %560 = vmatpush1.bf16.msra.mxu0 0
      %561 = vmatprep.subr.bf16.mxu0 0
      %562 = vmatpush1.bf16.msra.mxu0 0
      %563 = vmatprep.subr.bf16.mxu0 0
      %564 = vmatpush1.bf16.msra.mxu0 0
      %565 = vmatprep.subr.bf16.mxu0 0
      %566 = vmatpush1.bf16.msra.mxu0 0
      %567 = vmatprep.subr.bf16.mxu0 0
      %568 = vmatpush1.bf16.msra.mxu0 0
      %569 = vmatprep.subr.bf16.mxu0 0
      %570 = vmatpush1.bf16.msra.mxu0 0
      %571 = vmatprep.subr.bf16.mxu0 0
      %572 = vmatpush1.bf16.msra.mxu0 0
      %573 = vmatprep.subr.bf16.mxu0 0
      %574 = vmatpush1.bf16.msra.mxu0 %v557
      %575 = vmatprep.subr.bf16.mxu0 0
      %576 = vmatpush2.bf16.msra.mxu0 0
      %577 = vmatprep.subr.bf16.mxu0 0
      %578 = vmatpush2.bf16.msra.mxu0 0
      %579 = vmatprep.subr.bf16.mxu0 0
      %580 = vmatpush2.bf16.msra.mxu0 0
      %581 = vmatprep.subr.bf16.mxu0 0
      %582 = vmatpush2.bf16.msra.mxu0 0
      %583 = vmatprep.subr.bf16.mxu0 0
      %584 = vmatpush2.bf16.msra.mxu0 0
      %585 = vmatprep.subr.bf16.mxu0 0
      %586 = vmatpush2.bf16.msra.mxu0 0
      %587 = vmatprep.subr.bf16.mxu0 0
      %588 = vmatpush2.bf16.msra.mxu0 0
      %589 = vmatprep.subr.bf16.mxu0 0
      %590 = vmatpush2.bf16.msra.mxu0 0
      %591 = vmatprep.mubr.bf16.mxu0 0
      %592 = vmatmul.mubr.bf16.gmra.mxu0 %v533
      %v593 = vpop.f32.mrf.mxu0
      %v594 = vadd.f32 %v470, %v593
      %v595 = vpop.f32.mrf.mxu0
      %v596 = vpop.f32.mrf.mxu0
      %v597 = vadd.f32 %v473, %v596
      %v598 = vpop.f32.mrf.mxu0
      %599 = vmatprep.mubr.bf16.mxu0 0
      %600 = vmatmul.mubr.bf16.gmra.mxu0 %v536
      %v601 = vpop.f32.mrf.mxu0
      %v602 = vadd.f32 %v478, %v601
      %v603 = vpop.f32.mrf.mxu0
      %v604 = vpop.f32.mrf.mxu0
      %v605 = vadd.f32 %v481, %v604
      %v606 = vpop.f32.mrf.mxu0
      %607 = vmatprep.mubr.bf16.mxu0 0
      %608 = vmatmul.mubr.bf16.gmra.mxu0 %v539
      %v609 = vpop.f32.mrf.mxu0
      %v610 = vadd.f32 %v486, %v609
      %v611 = vpop.f32.mrf.mxu0
      %v612 = vpop.f32.mrf.mxu0
      %v613 = vadd.f32 %v489, %v612
      %v614 = vpop.f32.mrf.mxu0
      %615 = vmatprep.mubr.bf16.mxu0 0
      %616 = vmatmul.mubr.bf16.gmra.mxu0 %v542
      %v617 = vpop.f32.mrf.mxu0
      %v618 = vadd.f32 %v494, %v617
      %v619 = vpop.f32.mrf.mxu0
      %v620 = vpop.f32.mrf.mxu0
      %v621 = vadd.f32 %v497, %v620
      %v622 = vpop.f32.mrf.mxu0
      %623 = vmatprep.mubr.bf16.mxu0 0
      %624 = vmatmul.mubr.bf16.gmra.mxu0 %v545
      %v625 = vpop.f32.mrf.mxu0
      %v626 = vadd.f32 %v502, %v625
      %v627 = vpop.f32.mrf.mxu0
      %v628 = vpop.f32.mrf.mxu0
      %v629 = vadd.f32 %v505, %v628
      %v630 = vpop.f32.mrf.mxu0
      %631 = vmatprep.mubr.bf16.mxu0 0
      %632 = vmatmul.mubr.bf16.gmra.mxu0 %v548
      %v633 = vpop.f32.mrf.mxu0
      %v634 = vadd.f32 %v510, %v633
      %v635 = vpop.f32.mrf.mxu0
      %v636 = vpop.f32.mrf.mxu0
      %v637 = vadd.f32 %v513, %v636
      %v638 = vpop.f32.mrf.mxu0
      %639 = vmatprep.mubr.bf16.mxu0 0
      %640 = vmatmul.mubr.bf16.gmra.mxu0 %v551
      %v641 = vpop.f32.mrf.mxu0
      %v642 = vadd.f32 %v518, %v641
      %v643 = vpop.f32.mrf.mxu0
      %v644 = vpop.f32.mrf.mxu0
      %v645 = vadd.f32 %v521, %v644
      %v646 = vpop.f32.mrf.mxu0
      %647 = vmatprep.mubr.bf16.mxu0 0
      %648 = vmatmul.mubr.bf16.gmra.mxu0 %v554
      %v649 = vpop.f32.mrf.mxu0
      %v650 = vadd.f32 %v526, %v649
      %v651 = vpop.f32.mrf.mxu0
      %v652 = vpop.f32.mrf.mxu0
      %v653 = vadd.f32 %v529, %v652
      %v654 = vpop.f32.mrf.mxu0
      %655 = vdwg.mxu0
      %v656 = vld [vmem:[%s352 + $0x2] sm:$0xff]
      %v657 = vld [vmem:[%s352 + $0xa] sm:$0xff]
      %v658 = vld [vmem:[%s352 + $0x1a] sm:$0xff]
      %v659 = vld [vmem:[%s352 + $0x22] sm:$0xff]
      %v660 = vld [vmem:[%s352 + $0x32] sm:$0xff]
      %v661 = vld [vmem:[%s352 + $0x3a] sm:$0xff]
      %v662 = vld [vmem:[%s352 + $0x4a] sm:$0xff]
      %v663 = vld [vmem:[%s352 + $0x52] sm:$0xff]
      %v664 = vld [vmem:[%s352 + $0x62] sm:$0xff]
      %v665 = vld [vmem:[%s352 + $0x6a] sm:$0xff]
      %v666 = vld [vmem:[%s352 + $0x7a] sm:$0xff]
      %v667 = vld [vmem:[%s352 + $0x82] sm:$0xff]
      %v668 = vld [vmem:[%s352 + $0x92] sm:$0xff]
      %v669 = vld [vmem:[%s352 + $0x9a] sm:$0xff]
      %v670 = vld [vmem:[%s352 + $0xaa] sm:$0xff]
      %v671 = vld [vmem:[%s352 + $0xb2] sm:$0xff]
      %v672 = vpack.c.bf16 %v657, %v656
      %v673 = vpack.c.bf16 %v659, %v658
      %v674 = vpack.c.bf16 %v661, %v660
      %v675 = vpack.c.bf16 %v663, %v662
      %v676 = vpack.c.bf16 %v665, %v664
      %v677 = vpack.c.bf16 %v667, %v666
      %v678 = vpack.c.bf16 %v669, %v668
      %v679 = vpack.c.bf16 %v671, %v670
      %v680 = vld [vmem:[%s1 + $0x4] sm:$0x3]
      %v682 = vsel %vm197, %v672, 0
      %v685 = vsel %vm197, %v673, 0
      %v688 = vsel %vm197, %v674, 0
      %v691 = vsel %vm197, %v675, 0
      %v694 = vsel %vm197, %v676, 0
      %v697 = vsel %vm197, %v677, 0
      %v700 = vsel %vm197, %v678, 0
      %v703 = vsel %vm197, %v679, 0
      %v706 = vsel %vm431, %v680, 0
      %708 = vmatprep.subr.bf16.mxu0 0
      %709 = vmatpush1.bf16.msra.mxu0 0
      %710 = vmatprep.subr.bf16.mxu0 0
      %711 = vmatpush1.bf16.msra.mxu0 0
      %712 = vmatprep.subr.bf16.mxu0 0
      %713 = vmatpush1.bf16.msra.mxu0 0
      %714 = vmatprep.subr.bf16.mxu0 0
      %715 = vmatpush1.bf16.msra.mxu0 0
      %716 = vmatprep.subr.bf16.mxu0 0
      %717 = vmatpush1.bf16.msra.mxu0 0
      %718 = vmatprep.subr.bf16.mxu0 0
      %719 = vmatpush1.bf16.msra.mxu0 0
      %720 = vmatprep.subr.bf16.mxu0 0
      %721 = vmatpush1.bf16.msra.mxu0 0
      %722 = vmatprep.subr.bf16.mxu0 0
      %723 = vmatpush1.bf16.msra.mxu0 %v706
      %724 = vmatprep.subr.bf16.mxu0 0
      %725 = vmatpush2.bf16.msra.mxu0 0
      %726 = vmatprep.subr.bf16.mxu0 0
      %727 = vmatpush2.bf16.msra.mxu0 0
      %728 = vmatprep.subr.bf16.mxu0 0
      %729 = vmatpush2.bf16.msra.mxu0 0
      %730 = vmatprep.subr.bf16.mxu0 0
      %731 = vmatpush2.bf16.msra.mxu0 0
      %732 = vmatprep.subr.bf16.mxu0 0
      %733 = vmatpush2.bf16.msra.mxu0 0
      %734 = vmatprep.subr.bf16.mxu0 0
      %735 = vmatpush2.bf16.msra.mxu0 0
      %736 = vmatprep.subr.bf16.mxu0 0
      %737 = vmatpush2.bf16.msra.mxu0 0
      %738 = vmatprep.subr.bf16.mxu0 0
      %739 = vmatpush2.bf16.msra.mxu0 0
      %740 = vmatprep.mubr.bf16.mxu0 0
      %741 = vmatmul.mubr.bf16.gmra.mxu0 %v682
      %v742 = vpop.f32.mrf.mxu0
      %v743 = vadd.f32 0.0, %v742
      %v744 = vpop.f32.mrf.mxu0
      %v745 = vpop.f32.mrf.mxu0
      %v746 = vadd.f32 0.0, %v745
      %v747 = vpop.f32.mrf.mxu0
      %748 = vmatprep.mubr.bf16.mxu0 0
      %749 = vmatmul.mubr.bf16.gmra.mxu0 %v685
      %v750 = vpop.f32.mrf.mxu0
      %v751 = vadd.f32 0.0, %v750
      %v752 = vpop.f32.mrf.mxu0
      %v753 = vpop.f32.mrf.mxu0
      %v754 = vadd.f32 0.0, %v753
      %v755 = vpop.f32.mrf.mxu0
      %756 = vmatprep.mubr.bf16.mxu0 0
      %757 = vmatmul.mubr.bf16.gmra.mxu0 %v688
      %v758 = vpop.f32.mrf.mxu0
      %v759 = vadd.f32 0.0, %v758
      %v760 = vpop.f32.mrf.mxu0
      %v761 = vpop.f32.mrf.mxu0
      %v762 = vadd.f32 0.0, %v761
      %v763 = vpop.f32.mrf.mxu0
      %764 = vmatprep.mubr.bf16.mxu0 0
      %765 = vmatmul.mubr.bf16.gmra.mxu0 %v691
      %v766 = vpop.f32.mrf.mxu0
      %v767 = vadd.f32 0.0, %v766
      %v768 = vpop.f32.mrf.mxu0
      %v769 = vpop.f32.mrf.mxu0
      %v770 = vadd.f32 0.0, %v769
      %v771 = vpop.f32.mrf.mxu0
      %772 = vmatprep.mubr.bf16.mxu0 0
      %773 = vmatmul.mubr.bf16.gmra.mxu0 %v694
      %v774 = vpop.f32.mrf.mxu0
      %v775 = vadd.f32 0.0, %v774
      %v776 = vpop.f32.mrf.mxu0
      %v777 = vpop.f32.mrf.mxu0
      %v778 = vadd.f32 0.0, %v777
      %v779 = vpop.f32.mrf.mxu0
      %780 = vmatprep.mubr.bf16.mxu0 0
      %781 = vmatmul.mubr.bf16.gmra.mxu0 %v697
      %v782 = vpop.f32.mrf.mxu0
      %v783 = vadd.f32 0.0, %v782
      %v784 = vpop.f32.mrf.mxu0
      %v785 = vpop.f32.mrf.mxu0
      %v786 = vadd.f32 0.0, %v785
      %v787 = vpop.f32.mrf.mxu0
      %788 = vmatprep.mubr.bf16.mxu0 0
      %789 = vmatmul.mubr.bf16.gmra.mxu0 %v700
      %v790 = vpop.f32.mrf.mxu0
      %v791 = vadd.f32 0.0, %v790
      %v792 = vpop.f32.mrf.mxu0
      %v793 = vpop.f32.mrf.mxu0
      %v794 = vadd.f32 0.0, %v793
      %v795 = vpop.f32.mrf.mxu0
      %796 = vmatprep.mubr.bf16.mxu0 0
      %797 = vmatmul.mubr.bf16.gmra.mxu0 %v703
      %v798 = vpop.f32.mrf.mxu0
      %v799 = vadd.f32 0.0, %v798
      %v800 = vpop.f32.mrf.mxu0
      %v801 = vpop.f32.mrf.mxu0
      %v802 = vadd.f32 0.0, %v801
      %v803 = vpop.f32.mrf.mxu0
      %804 = vdwg.mxu0
      %v805 = vadd.f32 %v594, %v743
      %v806 = vadd.f32 %v597, %v746
      %v807 = vadd.f32 %v602, %v751
      %v808 = vadd.f32 %v605, %v754
      %v809 = vadd.f32 %v610, %v759
      %v810 = vadd.f32 %v613, %v762
      %v811 = vadd.f32 %v618, %v767
      %v812 = vadd.f32 %v621, %v770
      %v813 = vadd.f32 %v626, %v775
      %v814 = vadd.f32 %v629, %v778
      %v815 = vadd.f32 %v634, %v783
      %v816 = vadd.f32 %v637, %v786
      %v817 = vadd.f32 %v642, %v791
      %v818 = vadd.f32 %v645, %v794
      %v819 = vadd.f32 %v650, %v799
      %v820 = vadd.f32 %v653, %v802
      %s821 = sadd.s32 %s350, 1
      %s822 = smul.u32 %s821, 24
      %s823 = scalar_lea.vmem [#allocation2], %s822
      %v824 = vld [vmem:[%s823] sm:$0xff]
      %v825 = vld [vmem:[%s823 + $0x8] sm:$0xff]
      %v826 = vld [vmem:[%s823 + $0x18] sm:$0xff]
      %v827 = vld [vmem:[%s823 + $0x20] sm:$0xff]
      %v828 = vld [vmem:[%s823 + $0x30] sm:$0xff]
      %v829 = vld [vmem:[%s823 + $0x38] sm:$0xff]
      %v830 = vld [vmem:[%s823 + $0x48] sm:$0xff]
      %v831 = vld [vmem:[%s823 + $0x50] sm:$0xff]
      %v832 = vld [vmem:[%s823 + $0x60] sm:$0xff]
      %v833 = vld [vmem:[%s823 + $0x68] sm:$0xff]
      %v834 = vld [vmem:[%s823 + $0x78] sm:$0xff]
      %v835 = vld [vmem:[%s823 + $0x80] sm:$0xff]
      %v836 = vld [vmem:[%s823 + $0x90] sm:$0xff]
      %v837 = vld [vmem:[%s823 + $0x98] sm:$0xff]
      %v838 = vld [vmem:[%s823 + $0xa8] sm:$0xff]
      %v839 = vld [vmem:[%s823 + $0xb0] sm:$0xff]
      %v840 = vpack.c.bf16 %v825, %v824
      %v841 = vpack.c.bf16 %v827, %v826
      %v842 = vpack.c.bf16 %v829, %v828
      %v843 = vpack.c.bf16 %v831, %v830
      %v844 = vpack.c.bf16 %v833, %v832
      %v845 = vpack.c.bf16 %v835, %v834
      %v846 = vpack.c.bf16 %v837, %v836
      %v847 = vpack.c.bf16 %v839, %v838
      %v848 = vld [vmem:[%s1 + $0x4] sm:$0xc]
      %v850 = vunpack.c.l.b16 %v848
      %v851 = vpack.c.b16 %v850, %v850
      %v852 = vrot.slane %v851, 2
      %v854 = vsel %vm197, %v840, 0
      %v857 = vsel %vm197, %v841, 0
      %v860 = vsel %vm197, %v842, 0
      %v863 = vsel %vm197, %v843, 0
      %v866 = vsel %vm197, %v844, 0
      %v869 = vsel %vm197, %v845, 0
      %v872 = vsel %vm197, %v846, 0
      %v875 = vsel %vm197, %v847, 0
      %v878 = vsel %vm431, %v852, 0
      %880 = vmatprep.subr.bf16.mxu0 0
      %881 = vmatpush1.bf16.msra.mxu0 0
      %882 = vmatprep.subr.bf16.mxu0 0
      %883 = vmatpush1.bf16.msra.mxu0 0
      %884 = vmatprep.subr.bf16.mxu0 0
      %885 = vmatpush1.bf16.msra.mxu0 0
      %886 = vmatprep.subr.bf16.mxu0 0
      %887 = vmatpush1.bf16.msra.mxu0 0
      %888 = vmatprep.subr.bf16.mxu0 0
      %889 = vmatpush1.bf16.msra.mxu0 0
      %890 = vmatprep.subr.bf16.mxu0 0
      %891 = vmatpush1.bf16.msra.mxu0 0
      %892 = vmatprep.subr.bf16.mxu0 0
      %893 = vmatpush1.bf16.msra.mxu0 0
      %894 = vmatprep.subr.bf16.mxu0 0
      %895 = vmatpush1.bf16.msra.mxu0 %v878
      %896 = vmatprep.subr.bf16.mxu0 0
      %897 = vmatpush2.bf16.msra.mxu0 0
      %898 = vmatprep.subr.bf16.mxu0 0
      %899 = vmatpush2.bf16.msra.mxu0 0
      %900 = vmatprep.subr.bf16.mxu0 0
      %901 = vmatpush2.bf16.msra.mxu0 0
      %902 = vmatprep.subr.bf16.mxu0 0
      %903 = vmatpush2.bf16.msra.mxu0 0
      %904 = vmatprep.subr.bf16.mxu0 0
      %905 = vmatpush2.bf16.msra.mxu0 0
      %906 = vmatprep.subr.bf16.mxu0 0
      %907 = vmatpush2.bf16.msra.mxu0 0
      %908 = vmatprep.subr.bf16.mxu0 0
      %909 = vmatpush2.bf16.msra.mxu0 0
      %910 = vmatprep.subr.bf16.mxu0 0
      %911 = vmatpush2.bf16.msra.mxu0 0
      %912 = vmatprep.mubr.bf16.mxu0 0
      %913 = vmatmul.mubr.bf16.gmra.mxu0 %v854
      %v914 = vpop.f32.mrf.mxu0
      %v915 = vadd.f32 0.0, %v914
      %v916 = vpop.f32.mrf.mxu0
      %v917 = vpop.f32.mrf.mxu0
      %v918 = vadd.f32 0.0, %v917
      %v919 = vpop.f32.mrf.mxu0
      %920 = vmatprep.mubr.bf16.mxu0 0
      %921 = vmatmul.mubr.bf16.gmra.mxu0 %v857
      %v922 = vpop.f32.mrf.mxu0
      %v923 = vadd.f32 0.0, %v922
      %v924 = vpop.f32.mrf.mxu0
      %v925 = vpop.f32.mrf.mxu0
      %v926 = vadd.f32 0.0, %v925
      %v927 = vpop.f32.mrf.mxu0
      %928 = vmatprep.mubr.bf16.mxu0 0
      %929 = vmatmul.mubr.bf16.gmra.mxu0 %v860
      %v930 = vpop.f32.mrf.mxu0
      %v931 = vadd.f32 0.0, %v930
      %v932 = vpop.f32.mrf.mxu0
      %v933 = vpop.f32.mrf.mxu0
      %v934 = vadd.f32 0.0, %v933
      %v935 = vpop.f32.mrf.mxu0
      %936 = vmatprep.mubr.bf16.mxu0 0
      %937 = vmatmul.mubr.bf16.gmra.mxu0 %v863
      %v938 = vpop.f32.mrf.mxu0
      %v939 = vadd.f32 0.0, %v938
      %v940 = vpop.f32.mrf.mxu0
      %v941 = vpop.f32.mrf.mxu0
      %v942 = vadd.f32 0.0, %v941
      %v943 = vpop.f32.mrf.mxu0
      %944 = vmatprep.mubr.bf16.mxu0 0
      %945 = vmatmul.mubr.bf16.gmra.mxu0 %v866
      %v946 = vpop.f32.mrf.mxu0
      %v947 = vadd.f32 0.0, %v946
      %v948 = vpop.f32.mrf.mxu0
      %v949 = vpop.f32.mrf.mxu0
      %v950 = vadd.f32 0.0, %v949
      %v951 = vpop.f32.mrf.mxu0
      %952 = vmatprep.mubr.bf16.mxu0 0
      %953 = vmatmul.mubr.bf16.gmra.mxu0 %v869
      %v954 = vpop.f32.mrf.mxu0
      %v955 = vadd.f32 0.0, %v954
      %v956 = vpop.f32.mrf.mxu0
      %v957 = vpop.f32.mrf.mxu0
      %v958 = vadd.f32 0.0, %v957
      %v959 = vpop.f32.mrf.mxu0
      %960 = vmatprep.mubr.bf16.mxu0 0
      %961 = vmatmul.mubr.bf16.gmra.mxu0 %v872
      %v962 = vpop.f32.mrf.mxu0
      %v963 = vadd.f32 0.0, %v962
      %v964 = vpop.f32.mrf.mxu0
      %v965 = vpop.f32.mrf.mxu0
      %v966 = vadd.f32 0.0, %v965
      %v967 = vpop.f32.mrf.mxu0
      %968 = vmatprep.mubr.bf16.mxu0 0
      %969 = vmatmul.mubr.bf16.gmra.mxu0 %v875
      %v970 = vpop.f32.mrf.mxu0
      %v971 = vadd.f32 0.0, %v970
      %v972 = vpop.f32.mrf.mxu0
      %v973 = vpop.f32.mrf.mxu0
      %v974 = vadd.f32 0.0, %v973
      %v975 = vpop.f32.mrf.mxu0
      %976 = vdwg.mxu0
      %v977 = vadd.f32 %v805, %v915
      %v978 = vadd.f32 %v806, %v918
      %v979 = vadd.f32 %v807, %v923
      %v980 = vadd.f32 %v808, %v926
      %v981 = vadd.f32 %v809, %v931
      %v982 = vadd.f32 %v810, %v934
      %v983 = vadd.f32 %v811, %v939
      %v984 = vadd.f32 %v812, %v942
      %v985 = vadd.f32 %v813, %v947
      %v986 = vadd.f32 %v814, %v950
      %v987 = vadd.f32 %v815, %v955
      %v988 = vadd.f32 %v816, %v958
      %v989 = vadd.f32 %v817, %v963
      %v990 = vadd.f32 %v818, %v966
      %v991 = vadd.f32 %v819, %v971
      %v992 = vadd.f32 %v820, %v974
      %v993 = vld [vmem:[%s823 + $0x1] sm:$0xff]
      %v994 = vld [vmem:[%s823 + $0x9] sm:$0xff]
      %v995 = vld [vmem:[%s823 + $0x19] sm:$0xff]
      %v996 = vld [vmem:[%s823 + $0x21] sm:$0xff]
      %v997 = vld [vmem:[%s823 + $0x31] sm:$0xff]
      %v998 = vld [vmem:[%s823 + $0x39] sm:$0xff]
      %v999 = vld [vmem:[%s823 + $0x49] sm:$0xff]
      %v1000 = vld [vmem:[%s823 + $0x51] sm:$0xff]
      %v1001 = vld [vmem:[%s823 + $0x61] sm:$0xff]
      %v1002 = vld [vmem:[%s823 + $0x69] sm:$0xff]
      %v1003 = vld [vmem:[%s823 + $0x79] sm:$0xff]
      %v1004 = vld [vmem:[%s823 + $0x81] sm:$0xff]
      %v1005 = vld [vmem:[%s823 + $0x91] sm:$0xff]
      %v1006 = vld [vmem:[%s823 + $0x99] sm:$0xff]
      %v1007 = vld [vmem:[%s823 + $0xa9] sm:$0xff]
      %v1008 = vld [vmem:[%s823 + $0xb1] sm:$0xff]
      %v1009 = vpack.c.bf16 %v994, %v993
      %v1010 = vpack.c.bf16 %v996, %v995
      %v1011 = vpack.c.bf16 %v998, %v997
      %v1012 = vpack.c.bf16 %v1000, %v999
      %v1013 = vpack.c.bf16 %v1002, %v1001
      %v1014 = vpack.c.bf16 %v1004, %v1003
      %v1015 = vpack.c.bf16 %v1006, %v1005
      %v1016 = vpack.c.bf16 %v1008, %v1007
      %v1017 = vld [vmem:[%s1 + $0x8] sm:$0x3]
      %v1019 = vsel %vm197, %v1009, 0
      %v1022 = vsel %vm197, %v1010, 0
      %v1025 = vsel %vm197, %v1011, 0
      %v1028 = vsel %vm197, %v1012, 0
      %v1031 = vsel %vm197, %v1013, 0
      %v1034 = vsel %vm197, %v1014, 0
      %v1037 = vsel %vm197, %v1015, 0
      %v1040 = vsel %vm197, %v1016, 0
      %v1043 = vsel %vm431, %v1017, 0
      %1045 = vmatprep.subr.bf16.mxu0 0
      %1046 = vmatpush1.bf16.msra.mxu0 0
      %1047 = vmatprep.subr.bf16.mxu0 0
      %1048 = vmatpush1.bf16.msra.mxu0 0
      %1049 = vmatprep.subr.bf16.mxu0 0
      %1050 = vmatpush1.bf16.msra.mxu0 0
      %1051 = vmatprep.subr.bf16.mxu0 0
      %1052 = vmatpush1.bf16.msra.mxu0 0
      %1053 = vmatprep.subr.bf16.mxu0 0
      %1054 = vmatpush1.bf16.msra.mxu0 0
      %1055 = vmatprep.subr.bf16.mxu0 0
      %1056 = vmatpush1.bf16.msra.mxu0 0
      %1057 = vmatprep.subr.bf16.mxu0 0
      %1058 = vmatpush1.bf16.msra.mxu0 0
      %1059 = vmatprep.subr.bf16.mxu0 0
      %1060 = vmatpush1.bf16.msra.mxu0 %v1043
      %1061 = vmatprep.subr.bf16.mxu0 0
      %1062 = vmatpush2.bf16.msra.mxu0 0
      %1063 = vmatprep.subr.bf16.mxu0 0
      %1064 = vmatpush2.bf16.msra.mxu0 0
      %1065 = vmatprep.subr.bf16.mxu0 0
      %1066 = vmatpush2.bf16.msra.mxu0 0
      %1067 = vmatprep.subr.bf16.mxu0 0
      %1068 = vmatpush2.bf16.msra.mxu0 0
      %1069 = vmatprep.subr.bf16.mxu0 0
      %1070 = vmatpush2.bf16.msra.mxu0 0
      %1071 = vmatprep.subr.bf16.mxu0 0
      %1072 = vmatpush2.bf16.msra.mxu0 0
      %1073 = vmatprep.subr.bf16.mxu0 0
      %1074 = vmatpush2.bf16.msra.mxu0 0
      %1075 = vmatprep.subr.bf16.mxu0 0
      %1076 = vmatpush2.bf16.msra.mxu0 0
      %1077 = vmatprep.mubr.bf16.mxu0 0
      %1078 = vmatmul.mubr.bf16.gmra.mxu0 %v1019
      %v1079 = vpop.f32.mrf.mxu0
      %v1080 = vadd.f32 0.0, %v1079
      %v1081 = vpop.f32.mrf.mxu0
      %v1082 = vpop.f32.mrf.mxu0
      %v1083 = vadd.f32 0.0, %v1082
      %v1084 = vpop.f32.mrf.mxu0
      %1085 = vmatprep.mubr.bf16.mxu0 0
      %1086 = vmatmul.mubr.bf16.gmra.mxu0 %v1022
      %v1087 = vpop.f32.mrf.mxu0
      %v1088 = vadd.f32 0.0, %v1087
      %v1089 = vpop.f32.mrf.mxu0
      %v1090 = vpop.f32.mrf.mxu0
      %v1091 = vadd.f32 0.0, %v1090
      %v1092 = vpop.f32.mrf.mxu0
      %1093 = vmatprep.mubr.bf16.mxu0 0
      %1094 = vmatmul.mubr.bf16.gmra.mxu0 %v1025
      %v1095 = vpop.f32.mrf.mxu0
      %v1096 = vadd.f32 0.0, %v1095
      %v1097 = vpop.f32.mrf.mxu0
      %v1098 = vpop.f32.mrf.mxu0
      %v1099 = vadd.f32 0.0, %v1098
      %v1100 = vpop.f32.mrf.mxu0
      %1101 = vmatprep.mubr.bf16.mxu0 0
      %1102 = vmatmul.mubr.bf16.gmra.mxu0 %v1028
      %v1103 = vpop.f32.mrf.mxu0
      %v1104 = vadd.f32 0.0, %v1103
      %v1105 = vpop.f32.mrf.mxu0
      %v1106 = vpop.f32.mrf.mxu0
      %v1107 = vadd.f32 0.0, %v1106
      %v1108 = vpop.f32.mrf.mxu0
      %1109 = vmatprep.mubr.bf16.mxu0 0
      %1110 = vmatmul.mubr.bf16.gmra.mxu0 %v1031
      %v1111 = vpop.f32.mrf.mxu0
      %v1112 = vadd.f32 0.0, %v1111
      %v1113 = vpop.f32.mrf.mxu0
      %v1114 = vpop.f32.mrf.mxu0
      %v1115 = vadd.f32 0.0, %v1114
      %v1116 = vpop.f32.mrf.mxu0
      %1117 = vmatprep.mubr.bf16.mxu0 0
      %1118 = vmatmul.mubr.bf16.gmra.mxu0 %v1034
      %v1119 = vpop.f32.mrf.mxu0
      %v1120 = vadd.f32 0.0, %v1119
      %v1121 = vpop.f32.mrf.mxu0
      %v1122 = vpop.f32.mrf.mxu0
      %v1123 = vadd.f32 0.0, %v1122
      %v1124 = vpop.f32.mrf.mxu0
      %1125 = vmatprep.mubr.bf16.mxu0 0
      %1126 = vmatmul.mubr.bf16.gmra.mxu0 %v1037
      %v1127 = vpop.f32.mrf.mxu0
      %v1128 = vadd.f32 0.0, %v1127
      %v1129 = vpop.f32.mrf.mxu0
      %v1130 = vpop.f32.mrf.mxu0
      %v1131 = vadd.f32 0.0, %v1130
      %v1132 = vpop.f32.mrf.mxu0
      %1133 = vmatprep.mubr.bf16.mxu0 0
      %1134 = vmatmul.mubr.bf16.gmra.mxu0 %v1040
      %v1135 = vpop.f32.mrf.mxu0
      %v1136 = vadd.f32 0.0, %v1135
      %v1137 = vpop.f32.mrf.mxu0
      %v1138 = vpop.f32.mrf.mxu0
      %v1139 = vadd.f32 0.0, %v1138
      %v1140 = vpop.f32.mrf.mxu0
      %1141 = vdwg.mxu0
      %v1142 = vadd.f32 %v977, %v1080
      %v1143 = vadd.f32 %v978, %v1083
      %v1144 = vadd.f32 %v979, %v1088
      %v1145 = vadd.f32 %v980, %v1091
      %v1146 = vadd.f32 %v981, %v1096
      %v1147 = vadd.f32 %v982, %v1099
      %v1148 = vadd.f32 %v983, %v1104
      %v1149 = vadd.f32 %v984, %v1107
      %v1150 = vadd.f32 %v985, %v1112
      %v1151 = vadd.f32 %v986, %v1115
      %v1152 = vadd.f32 %v987, %v1120
      %v1153 = vadd.f32 %v988, %v1123
      %v1154 = vadd.f32 %v989, %v1128
      %v1155 = vadd.f32 %v990, %v1131
      %v1156 = vadd.f32 %v991, %v1136
      %v1157 = vadd.f32 %v992, %v1139
      %v1158 = vld [vmem:[%s823 + $0x2] sm:$0xff]
      %v1159 = vld [vmem:[%s823 + $0xa] sm:$0xff]
      %v1160 = vld [vmem:[%s823 + $0x1a] sm:$0xff]
      %v1161 = vld [vmem:[%s823 + $0x22] sm:$0xff]
      %v1162 = vld [vmem:[%s823 + $0x32] sm:$0xff]
      %v1163 = vld [vmem:[%s823 + $0x3a] sm:$0xff]
      %v1164 = vld [vmem:[%s823 + $0x4a] sm:$0xff]
      %v1165 = vld [vmem:[%s823 + $0x52] sm:$0xff]
      %v1166 = vld [vmem:[%s823 + $0x62] sm:$0xff]
      %v1167 = vld [vmem:[%s823 + $0x6a] sm:$0xff]
      %v1168 = vld [vmem:[%s823 + $0x7a] sm:$0xff]
      %v1169 = vld [vmem:[%s823 + $0x82] sm:$0xff]
      %v1170 = vld [vmem:[%s823 + $0x92] sm:$0xff]
      %v1171 = vld [vmem:[%s823 + $0x9a] sm:$0xff]
      %v1172 = vld [vmem:[%s823 + $0xaa] sm:$0xff]
      %v1173 = vld [vmem:[%s823 + $0xb2] sm:$0xff]
      %v1174 = vpack.c.bf16 %v1159, %v1158
      %v1175 = vpack.c.bf16 %v1161, %v1160
      %v1176 = vpack.c.bf16 %v1163, %v1162
      %v1177 = vpack.c.bf16 %v1165, %v1164
      %v1178 = vpack.c.bf16 %v1167, %v1166
      %v1179 = vpack.c.bf16 %v1169, %v1168
      %v1180 = vpack.c.bf16 %v1171, %v1170
      %v1181 = vpack.c.bf16 %v1173, %v1172
      %v1182 = vld [vmem:[%s1 + $0x8] sm:$0xc]
      %v1184 = vunpack.c.l.b16 %v1182
      %v1185 = vpack.c.b16 %v1184, %v1184
      %v1186 = vrot.slane %v1185, 2
      %v1188 = vsel %vm197, %v1174, 0
      %v1191 = vsel %vm197, %v1175, 0
      %v1194 = vsel %vm197, %v1176, 0
      %v1197 = vsel %vm197, %v1177, 0
      %v1200 = vsel %vm197, %v1178, 0
      %v1203 = vsel %vm197, %v1179, 0
      %v1206 = vsel %vm197, %v1180, 0
      %v1209 = vsel %vm197, %v1181, 0
      %v1212 = vsel %vm431, %v1186, 0
      %1214 = vmatprep.subr.bf16.mxu0 0
      %1215 = vmatpush1.bf16.msra.mxu0 0
      %1216 = vmatprep.subr.bf16.mxu0 0
      %1217 = vmatpush1.bf16.msra.mxu0 0
      %1218 = vmatprep.subr.bf16.mxu0 0
      %1219 = vmatpush1.bf16.msra.mxu0 0
      %1220 = vmatprep.subr.bf16.mxu0 0
      %1221 = vmatpush1.bf16.msra.mxu0 0
      %1222 = vmatprep.subr.bf16.mxu0 0
      %1223 = vmatpush1.bf16.msra.mxu0 0
      %1224 = vmatprep.subr.bf16.mxu0 0
      %1225 = vmatpush1.bf16.msra.mxu0 0
      %1226 = vmatprep.subr.bf16.mxu0 0
      %1227 = vmatpush1.bf16.msra.mxu0 0
      %1228 = vmatprep.subr.bf16.mxu0 0
      %1229 = vmatpush1.bf16.msra.mxu0 %v1212
      %1230 = vmatprep.subr.bf16.mxu0 0
      %1231 = vmatpush2.bf16.msra.mxu0 0
      %1232 = vmatprep.subr.bf16.mxu0 0
      %1233 = vmatpush2.bf16.msra.mxu0 0
      %1234 = vmatprep.subr.bf16.mxu0 0
      %1235 = vmatpush2.bf16.msra.mxu0 0
      %1236 = vmatprep.subr.bf16.mxu0 0
      %1237 = vmatpush2.bf16.msra.mxu0 0
      %1238 = vmatprep.subr.bf16.mxu0 0
      %1239 = vmatpush2.bf16.msra.mxu0 0
      %1240 = vmatprep.subr.bf16.mxu0 0
      %1241 = vmatpush2.bf16.msra.mxu0 0
      %1242 = vmatprep.subr.bf16.mxu0 0
      %1243 = vmatpush2.bf16.msra.mxu0 0
      %1244 = vmatprep.subr.bf16.mxu0 0
      %1245 = vmatpush2.bf16.msra.mxu0 0
      %1246 = vmatprep.mubr.bf16.mxu0 0
      %1247 = vmatmul.mubr.bf16.gmra.mxu0 %v1188
      %v1248 = vpop.f32.mrf.mxu0
      %v1249 = vadd.f32 0.0, %v1248
      %v1250 = vpop.f32.mrf.mxu0
      %v1251 = vpop.f32.mrf.mxu0
      %v1252 = vadd.f32 0.0, %v1251
      %v1253 = vpop.f32.mrf.mxu0
      %1254 = vmatprep.mubr.bf16.mxu0 0
      %1255 = vmatmul.mubr.bf16.gmra.mxu0 %v1191
      %v1256 = vpop.f32.mrf.mxu0
      %v1257 = vadd.f32 0.0, %v1256
      %v1258 = vpop.f32.mrf.mxu0
      %v1259 = vpop.f32.mrf.mxu0
      %v1260 = vadd.f32 0.0, %v1259
      %v1261 = vpop.f32.mrf.mxu0
      %1262 = vmatprep.mubr.bf16.mxu0 0
      %1263 = vmatmul.mubr.bf16.gmra.mxu0 %v1194
      %v1264 = vpop.f32.mrf.mxu0
      %v1265 = vadd.f32 0.0, %v1264
      %v1266 = vpop.f32.mrf.mxu0
      %v1267 = vpop.f32.mrf.mxu0
      %v1268 = vadd.f32 0.0, %v1267
      %v1269 = vpop.f32.mrf.mxu0
      %1270 = vmatprep.mubr.bf16.mxu0 0
      %1271 = vmatmul.mubr.bf16.gmra.mxu0 %v1197
      %v1272 = vpop.f32.mrf.mxu0
      %v1273 = vadd.f32 0.0, %v1272
      %v1274 = vpop.f32.mrf.mxu0
      %v1275 = vpop.f32.mrf.mxu0
      %v1276 = vadd.f32 0.0, %v1275
      %v1277 = vpop.f32.mrf.mxu0
      %1278 = vmatprep.mubr.bf16.mxu0 0
      %1279 = vmatmul.mubr.bf16.gmra.mxu0 %v1200
      %v1280 = vpop.f32.mrf.mxu0
      %v1281 = vadd.f32 0.0, %v1280
      %v1282 = vpop.f32.mrf.mxu0
      %v1283 = vpop.f32.mrf.mxu0
      %v1284 = vadd.f32 0.0, %v1283
      %v1285 = vpop.f32.mrf.mxu0
      %1286 = vmatprep.mubr.bf16.mxu0 0
      %1287 = vmatmul.mubr.bf16.gmra.mxu0 %v1203
      %v1288 = vpop.f32.mrf.mxu0
      %v1289 = vadd.f32 0.0, %v1288
      %v1290 = vpop.f32.mrf.mxu0
      %v1291 = vpop.f32.mrf.mxu0
      %v1292 = vadd.f32 0.0, %v1291
      %v1293 = vpop.f32.mrf.mxu0
      %1294 = vmatprep.mubr.bf16.mxu0 0
      %1295 = vmatmul.mubr.bf16.gmra.mxu0 %v1206
      %v1296 = vpop.f32.mrf.mxu0
      %v1297 = vadd.f32 0.0, %v1296
      %v1298 = vpop.f32.mrf.mxu0
      %v1299 = vpop.f32.mrf.mxu0
      %v1300 = vadd.f32 0.0, %v1299
      %v1301 = vpop.f32.mrf.mxu0
      %1302 = vmatprep.mubr.bf16.mxu0 0
      %1303 = vmatmul.mubr.bf16.gmra.mxu0 %v1209
      %v1304 = vpop.f32.mrf.mxu0
      %v1305 = vadd.f32 0.0, %v1304
      %v1306 = vpop.f32.mrf.mxu0
      %v1307 = vpop.f32.mrf.mxu0
      %v1308 = vadd.f32 0.0, %v1307
      %v1309 = vpop.f32.mrf.mxu0
      %1310 = vdwg.mxu0
      %v1311 = vadd.f32 %v1142, %v1249
      %v1312 = vadd.f32 %v1143, %v1252
      %v1313 = vadd.f32 %v1144, %v1257
      %v1314 = vadd.f32 %v1145, %v1260
      %v1315 = vadd.f32 %v1146, %v1265
      %v1316 = vadd.f32 %v1147, %v1268
      %v1317 = vadd.f32 %v1148, %v1273
      %v1318 = vadd.f32 %v1149, %v1276
      %v1319 = vadd.f32 %v1150, %v1281
      %v1320 = vadd.f32 %v1151, %v1284
      %v1321 = vadd.f32 %v1152, %v1289
      %v1322 = vadd.f32 %v1153, %v1292
      %v1323 = vadd.f32 %v1154, %v1297
      %v1324 = vadd.f32 %v1155, %v1300
      %v1325 = vadd.f32 %v1156, %v1305
      %v1326 = vadd.f32 %v1157, %v1308
      %s1327 = sadd.s32 %s350, 2
      %s1328 = smul.u32 %s1327, 24
      %s1329 = scalar_lea.vmem [#allocation2], %s1328
      %v1330 = vld [vmem:[%s1329] sm:$0xff]
      %v1331 = vld [vmem:[%s1329 + $0x8] sm:$0xff]
      %v1332 = vld [vmem:[%s1329 + $0x18] sm:$0xff]
      %v1333 = vld [vmem:[%s1329 + $0x20] sm:$0xff]
      %v1334 = vld [vmem:[%s1329 + $0x30] sm:$0xff]
      %v1335 = vld [vmem:[%s1329 + $0x38] sm:$0xff]
      %v1336 = vld [vmem:[%s1329 + $0x48] sm:$0xff]
      %v1337 = vld [vmem:[%s1329 + $0x50] sm:$0xff]
      %v1338 = vld [vmem:[%s1329 + $0x60] sm:$0xff]
      %v1339 = vld [vmem:[%s1329 + $0x68] sm:$0xff]
      %v1340 = vld [vmem:[%s1329 + $0x78] sm:$0xff]
      %v1341 = vld [vmem:[%s1329 + $0x80] sm:$0xff]
      %v1342 = vld [vmem:[%s1329 + $0x90] sm:$0xff]
      %v1343 = vld [vmem:[%s1329 + $0x98] sm:$0xff]
      %v1344 = vld [vmem:[%s1329 + $0xa8] sm:$0xff]
      %v1345 = vld [vmem:[%s1329 + $0xb0] sm:$0xff]
      %v1346 = vpack.c.bf16 %v1331, %v1330
      %v1347 = vpack.c.bf16 %v1333, %v1332
      %v1348 = vpack.c.bf16 %v1335, %v1334
      %v1349 = vpack.c.bf16 %v1337, %v1336
      %v1350 = vpack.c.bf16 %v1339, %v1338
      %v1351 = vpack.c.bf16 %v1341, %v1340
      %v1352 = vpack.c.bf16 %v1343, %v1342
      %v1353 = vpack.c.bf16 %v1345, %v1344
      %v1354 = vld [vmem:[%s1 + $0xc] sm:$0x3]
      %v1356 = vsel %vm197, %v1346, 0
      %v1359 = vsel %vm197, %v1347, 0
      %v1362 = vsel %vm197, %v1348, 0
      %v1365 = vsel %vm197, %v1349, 0
      %v1368 = vsel %vm197, %v1350, 0
      %v1371 = vsel %vm197, %v1351, 0
      %v1374 = vsel %vm197, %v1352, 0
      %v1377 = vsel %vm197, %v1353, 0
      %v1380 = vsel %vm431, %v1354, 0
      %1382 = vmatprep.subr.bf16.mxu0 0
      %1383 = vmatpush1.bf16.msra.mxu0 0
      %1384 = vmatprep.subr.bf16.mxu0 0
      %1385 = vmatpush1.bf16.msra.mxu0 0
      %1386 = vmatprep.subr.bf16.mxu0 0
      %1387 = vmatpush1.bf16.msra.mxu0 0
      %1388 = vmatprep.subr.bf16.mxu0 0
      %1389 = vmatpush1.bf16.msra.mxu0 0
      %1390 = vmatprep.subr.bf16.mxu0 0
      %1391 = vmatpush1.bf16.msra.mxu0 0
      %1392 = vmatprep.subr.bf16.mxu0 0
      %1393 = vmatpush1.bf16.msra.mxu0 0
      %1394 = vmatprep.subr.bf16.mxu0 0
      %1395 = vmatpush1.bf16.msra.mxu0 0
      %1396 = vmatprep.subr.bf16.mxu0 0
      %1397 = vmatpush1.bf16.msra.mxu0 %v1380
      %1398 = vmatprep.subr.bf16.mxu0 0
      %1399 = vmatpush2.bf16.msra.mxu0 0
      %1400 = vmatprep.subr.bf16.mxu0 0
      %1401 = vmatpush2.bf16.msra.mxu0 0
      %1402 = vmatprep.subr.bf16.mxu0 0
      %1403 = vmatpush2.bf16.msra.mxu0 0
      %1404 = vmatprep.subr.bf16.mxu0 0
      %1405 = vmatpush2.bf16.msra.mxu0 0
      %1406 = vmatprep.subr.bf16.mxu0 0
      %1407 = vmatpush2.bf16.msra.mxu0 0
      %1408 = vmatprep.subr.bf16.mxu0 0
      %1409 = vmatpush2.bf16.msra.mxu0 0
      %1410 = vmatprep.subr.bf16.mxu0 0
      %1411 = vmatpush2.bf16.msra.mxu0 0
      %1412 = vmatprep.subr.bf16.mxu0 0
      %1413 = vmatpush2.bf16.msra.mxu0 0
      %1414 = vmatprep.mubr.bf16.mxu0 0
      %1415 = vmatmul.mubr.bf16.gmra.mxu0 %v1356
      %v1416 = vpop.f32.mrf.mxu0
      %v1417 = vadd.f32 0.0, %v1416
      %v1418 = vpop.f32.mrf.mxu0
      %v1419 = vpop.f32.mrf.mxu0
      %v1420 = vadd.f32 0.0, %v1419
      %v1421 = vpop.f32.mrf.mxu0
      %1422 = vmatprep.mubr.bf16.mxu0 0
      %1423 = vmatmul.mubr.bf16.gmra.mxu0 %v1359
      %v1424 = vpop.f32.mrf.mxu0
      %v1425 = vadd.f32 0.0, %v1424
      %v1426 = vpop.f32.mrf.mxu0
      %v1427 = vpop.f32.mrf.mxu0
      %v1428 = vadd.f32 0.0, %v1427
      %v1429 = vpop.f32.mrf.mxu0
      %1430 = vmatprep.mubr.bf16.mxu0 0
      %1431 = vmatmul.mubr.bf16.gmra.mxu0 %v1362
      %v1432 = vpop.f32.mrf.mxu0
      %v1433 = vadd.f32 0.0, %v1432
      %v1434 = vpop.f32.mrf.mxu0
      %v1435 = vpop.f32.mrf.mxu0
      %v1436 = vadd.f32 0.0, %v1435
      %v1437 = vpop.f32.mrf.mxu0
      %1438 = vmatprep.mubr.bf16.mxu0 0
      %1439 = vmatmul.mubr.bf16.gmra.mxu0 %v1365
      %v1440 = vpop.f32.mrf.mxu0
      %v1441 = vadd.f32 0.0, %v1440
      %v1442 = vpop.f32.mrf.mxu0
      %v1443 = vpop.f32.mrf.mxu0
      %v1444 = vadd.f32 0.0, %v1443
      %v1445 = vpop.f32.mrf.mxu0
      %1446 = vmatprep.mubr.bf16.mxu0 0
      %1447 = vmatmul.mubr.bf16.gmra.mxu0 %v1368
      %v1448 = vpop.f32.mrf.mxu0
      %v1449 = vadd.f32 0.0, %v1448
      %v1450 = vpop.f32.mrf.mxu0
      %v1451 = vpop.f32.mrf.mxu0
      %v1452 = vadd.f32 0.0, %v1451
      %v1453 = vpop.f32.mrf.mxu0
      %1454 = vmatprep.mubr.bf16.mxu0 0
      %1455 = vmatmul.mubr.bf16.gmra.mxu0 %v1371
      %v1456 = vpop.f32.mrf.mxu0
      %v1457 = vadd.f32 0.0, %v1456
      %v1458 = vpop.f32.mrf.mxu0
      %v1459 = vpop.f32.mrf.mxu0
      %v1460 = vadd.f32 0.0, %v1459
      %v1461 = vpop.f32.mrf.mxu0
      %1462 = vmatprep.mubr.bf16.mxu0 0
      %1463 = vmatmul.mubr.bf16.gmra.mxu0 %v1374
      %v1464 = vpop.f32.mrf.mxu0
      %v1465 = vadd.f32 0.0, %v1464
      %v1466 = vpop.f32.mrf.mxu0
      %v1467 = vpop.f32.mrf.mxu0
      %v1468 = vadd.f32 0.0, %v1467
      %v1469 = vpop.f32.mrf.mxu0
      %1470 = vmatprep.mubr.bf16.mxu0 0
      %1471 = vmatmul.mubr.bf16.gmra.mxu0 %v1377
      %v1472 = vpop.f32.mrf.mxu0
      %v1473 = vadd.f32 0.0, %v1472
      %v1474 = vpop.f32.mrf.mxu0
      %v1475 = vpop.f32.mrf.mxu0
      %v1476 = vadd.f32 0.0, %v1475
      %v1477 = vpop.f32.mrf.mxu0
      %1478 = vdwg.mxu0
      %v1479 = vadd.f32 %v1311, %v1417
      %v1480 = vadd.f32 %v1312, %v1420
      %v1481 = vadd.f32 %v1313, %v1425
      %v1482 = vadd.f32 %v1314, %v1428
      %v1483 = vadd.f32 %v1315, %v1433
      %v1484 = vadd.f32 %v1316, %v1436
      %v1485 = vadd.f32 %v1317, %v1441
      %v1486 = vadd.f32 %v1318, %v1444
      %v1487 = vadd.f32 %v1319, %v1449
      %v1488 = vadd.f32 %v1320, %v1452
      %v1489 = vadd.f32 %v1321, %v1457
      %v1490 = vadd.f32 %v1322, %v1460
      %v1491 = vadd.f32 %v1323, %v1465
      %v1492 = vadd.f32 %v1324, %v1468
      %v1493 = vadd.f32 %v1325, %v1473
      %v1494 = vadd.f32 %v1326, %v1476
      %v1495 = vld [vmem:[%s1329 + $0x1] sm:$0xff]
      %v1496 = vld [vmem:[%s1329 + $0x9] sm:$0xff]
      %v1497 = vld [vmem:[%s1329 + $0x19] sm:$0xff]
      %v1498 = vld [vmem:[%s1329 + $0x21] sm:$0xff]
      %v1499 = vld [vmem:[%s1329 + $0x31] sm:$0xff]
      %v1500 = vld [vmem:[%s1329 + $0x39] sm:$0xff]
      %v1501 = vld [vmem:[%s1329 + $0x49] sm:$0xff]
      %v1502 = vld [vmem:[%s1329 + $0x51] sm:$0xff]
      %v1503 = vld [vmem:[%s1329 + $0x61] sm:$0xff]
      %v1504 = vld [vmem:[%s1329 + $0x69] sm:$0xff]
      %v1505 = vld [vmem:[%s1329 + $0x79] sm:$0xff]
      %v1506 = vld [vmem:[%s1329 + $0x81] sm:$0xff]
      %v1507 = vld [vmem:[%s1329 + $0x91] sm:$0xff]
      %v1508 = vld [vmem:[%s1329 + $0x99] sm:$0xff]
      %v1509 = vld [vmem:[%s1329 + $0xa9] sm:$0xff]
      %v1510 = vld [vmem:[%s1329 + $0xb1] sm:$0xff]
      %v1511 = vpack.c.bf16 %v1496, %v1495
      %v1512 = vpack.c.bf16 %v1498, %v1497
      %v1513 = vpack.c.bf16 %v1500, %v1499
      %v1514 = vpack.c.bf16 %v1502, %v1501
      %v1515 = vpack.c.bf16 %v1504, %v1503
      %v1516 = vpack.c.bf16 %v1506, %v1505
      %v1517 = vpack.c.bf16 %v1508, %v1507
      %v1518 = vpack.c.bf16 %v1510, %v1509
      %v1519 = vld [vmem:[%s1 + $0xc] sm:$0xc]
      %v1521 = vunpack.c.l.b16 %v1519
      %v1522 = vpack.c.b16 %v1521, %v1521
      %v1523 = vrot.slane %v1522, 2
      %v1525 = vsel %vm197, %v1511, 0
      %v1528 = vsel %vm197, %v1512, 0
      %v1531 = vsel %vm197, %v1513, 0
      %v1534 = vsel %vm197, %v1514, 0
      %v1537 = vsel %vm197, %v1515, 0
      %v1540 = vsel %vm197, %v1516, 0
      %v1543 = vsel %vm197, %v1517, 0
      %v1546 = vsel %vm197, %v1518, 0
      %v1549 = vsel %vm431, %v1523, 0
      %1551 = vmatprep.subr.bf16.mxu0 0
      %1552 = vmatpush1.bf16.msra.mxu0 0
      %1553 = vmatprep.subr.bf16.mxu0 0
      %1554 = vmatpush1.bf16.msra.mxu0 0
      %1555 = vmatprep.subr.bf16.mxu0 0
      %1556 = vmatpush1.bf16.msra.mxu0 0
      %1557 = vmatprep.subr.bf16.mxu0 0
      %1558 = vmatpush1.bf16.msra.mxu0 0
      %1559 = vmatprep.subr.bf16.mxu0 0
      %1560 = vmatpush1.bf16.msra.mxu0 0
      %1561 = vmatprep.subr.bf16.mxu0 0
      %1562 = vmatpush1.bf16.msra.mxu0 0
      %1563 = vmatprep.subr.bf16.mxu0 0
      %1564 = vmatpush1.bf16.msra.mxu0 0
      %1565 = vmatprep.subr.bf16.mxu0 0
      %1566 = vmatpush1.bf16.msra.mxu0 %v1549
      %1567 = vmatprep.subr.bf16.mxu0 0
      %1568 = vmatpush2.bf16.msra.mxu0 0
      %1569 = vmatprep.subr.bf16.mxu0 0
      %1570 = vmatpush2.bf16.msra.mxu0 0
      %1571 = vmatprep.subr.bf16.mxu0 0
      %1572 = vmatpush2.bf16.msra.mxu0 0
      %1573 = vmatprep.subr.bf16.mxu0 0
      %1574 = vmatpush2.bf16.msra.mxu0 0
      %1575 = vmatprep.subr.bf16.mxu0 0
      %1576 = vmatpush2.bf16.msra.mxu0 0
      %1577 = vmatprep.subr.bf16.mxu0 0
      %1578 = vmatpush2.bf16.msra.mxu0 0
      %1579 = vmatprep.subr.bf16.mxu0 0
      %1580 = vmatpush2.bf16.msra.mxu0 0
      %1581 = vmatprep.subr.bf16.mxu0 0
      %1582 = vmatpush2.bf16.msra.mxu0 0
      %1583 = vmatprep.mubr.bf16.mxu0 0
      %1584 = vmatmul.mubr.bf16.gmra.mxu0 %v1525
      %v1585 = vpop.f32.mrf.mxu0
      %v1586 = vadd.f32 0.0, %v1585
      %v1587 = vpop.f32.mrf.mxu0
      %v1588 = vpop.f32.mrf.mxu0
      %v1589 = vadd.f32 0.0, %v1588
      %v1590 = vpop.f32.mrf.mxu0
      %1591 = vmatprep.mubr.bf16.mxu0 0
      %1592 = vmatmul.mubr.bf16.gmra.mxu0 %v1528
      %v1593 = vpop.f32.mrf.mxu0
      %v1594 = vadd.f32 0.0, %v1593
      %v1595 = vpop.f32.mrf.mxu0
      %v1596 = vpop.f32.mrf.mxu0
      %v1597 = vadd.f32 0.0, %v1596
      %v1598 = vpop.f32.mrf.mxu0
      %1599 = vmatprep.mubr.bf16.mxu0 0
      %1600 = vmatmul.mubr.bf16.gmra.mxu0 %v1531
      %v1601 = vpop.f32.mrf.mxu0
      %v1602 = vadd.f32 0.0, %v1601
      %v1603 = vpop.f32.mrf.mxu0
      %v1604 = vpop.f32.mrf.mxu0
      %v1605 = vadd.f32 0.0, %v1604
      %v1606 = vpop.f32.mrf.mxu0
      %1607 = vmatprep.mubr.bf16.mxu0 0
      %1608 = vmatmul.mubr.bf16.gmra.mxu0 %v1534
      %v1609 = vpop.f32.mrf.mxu0
      %v1610 = vadd.f32 0.0, %v1609
      %v1611 = vpop.f32.mrf.mxu0
      %v1612 = vpop.f32.mrf.mxu0
      %v1613 = vadd.f32 0.0, %v1612
      %v1614 = vpop.f32.mrf.mxu0
      %1615 = vmatprep.mubr.bf16.mxu0 0
      %1616 = vmatmul.mubr.bf16.gmra.mxu0 %v1537
      %v1617 = vpop.f32.mrf.mxu0
      %v1618 = vadd.f32 0.0, %v1617
      %v1619 = vpop.f32.mrf.mxu0
      %v1620 = vpop.f32.mrf.mxu0
      %v1621 = vadd.f32 0.0, %v1620
      %v1622 = vpop.f32.mrf.mxu0
      %1623 = vmatprep.mubr.bf16.mxu0 0
      %1624 = vmatmul.mubr.bf16.gmra.mxu0 %v1540
      %v1625 = vpop.f32.mrf.mxu0
      %v1626 = vadd.f32 0.0, %v1625
      %v1627 = vpop.f32.mrf.mxu0
      %v1628 = vpop.f32.mrf.mxu0
      %v1629 = vadd.f32 0.0, %v1628
      %v1630 = vpop.f32.mrf.mxu0
      %1631 = vmatprep.mubr.bf16.mxu0 0
      %1632 = vmatmul.mubr.bf16.gmra.mxu0 %v1543
      %v1633 = vpop.f32.mrf.mxu0
      %v1634 = vadd.f32 0.0, %v1633
      %v1635 = vpop.f32.mrf.mxu0
      %v1636 = vpop.f32.mrf.mxu0
      %v1637 = vadd.f32 0.0, %v1636
      %v1638 = vpop.f32.mrf.mxu0
      %1639 = vmatprep.mubr.bf16.mxu0 0
      %1640 = vmatmul.mubr.bf16.gmra.mxu0 %v1546
      %v1641 = vpop.f32.mrf.mxu0
      %v1642 = vadd.f32 0.0, %v1641
      %v1643 = vpop.f32.mrf.mxu0
      %v1644 = vpop.f32.mrf.mxu0
      %v1645 = vadd.f32 0.0, %v1644
      %v1646 = vpop.f32.mrf.mxu0
      %1647 = vdwg.mxu0
      %v1648 = vadd.f32 %v1479, %v1586
      %v1649 = vadd.f32 %v1480, %v1589
      %v1650 = vadd.f32 %v1481, %v1594
      %v1651 = vadd.f32 %v1482, %v1597
      %v1652 = vadd.f32 %v1483, %v1602
      %v1653 = vadd.f32 %v1484, %v1605
      %v1654 = vadd.f32 %v1485, %v1610
      %v1655 = vadd.f32 %v1486, %v1613
      %v1656 = vadd.f32 %v1487, %v1618
      %v1657 = vadd.f32 %v1488, %v1621
      %v1658 = vadd.f32 %v1489, %v1626
      %v1659 = vadd.f32 %v1490, %v1629
      %v1660 = vadd.f32 %v1491, %v1634
      %v1661 = vadd.f32 %v1492, %v1637
      %v1662 = vadd.f32 %v1493, %v1642
      %v1663 = vadd.f32 %v1494, %v1645
      %v1664 = vld [vmem:[%s1329 + $0x2] sm:$0xff]
      %v1665 = vld [vmem:[%s1329 + $0xa] sm:$0xff]
      %v1666 = vld [vmem:[%s1329 + $0x1a] sm:$0xff]
      %v1667 = vld [vmem:[%s1329 + $0x22] sm:$0xff]
      %v1668 = vld [vmem:[%s1329 + $0x32] sm:$0xff]
      %v1669 = vld [vmem:[%s1329 + $0x3a] sm:$0xff]
      %v1670 = vld [vmem:[%s1329 + $0x4a] sm:$0xff]
      %v1671 = vld [vmem:[%s1329 + $0x52] sm:$0xff]
      %v1672 = vld [vmem:[%s1329 + $0x62] sm:$0xff]
      %v1673 = vld [vmem:[%s1329 + $0x6a] sm:$0xff]
      %v1674 = vld [vmem:[%s1329 + $0x7a] sm:$0xff]
      %v1675 = vld [vmem:[%s1329 + $0x82] sm:$0xff]
      %v1676 = vld [vmem:[%s1329 + $0x92] sm:$0xff]
      %v1677 = vld [vmem:[%s1329 + $0x9a] sm:$0xff]
      %v1678 = vld [vmem:[%s1329 + $0xaa] sm:$0xff]
      %v1679 = vld [vmem:[%s1329 + $0xb2] sm:$0xff]
      %v1680 = vpack.c.bf16 %v1665, %v1664
      %v1681 = vpack.c.bf16 %v1667, %v1666
      %v1682 = vpack.c.bf16 %v1669, %v1668
      %v1683 = vpack.c.bf16 %v1671, %v1670
      %v1684 = vpack.c.bf16 %v1673, %v1672
      %v1685 = vpack.c.bf16 %v1675, %v1674
      %v1686 = vpack.c.bf16 %v1677, %v1676
      %v1687 = vpack.c.bf16 %v1679, %v1678
      %v1688 = vld [vmem:[%s1 + $0x10] sm:$0x3]
      %v1690 = vsel %vm197, %v1680, 0
      %v1693 = vsel %vm197, %v1681, 0
      %v1696 = vsel %vm197, %v1682, 0
      %v1699 = vsel %vm197, %v1683, 0
      %v1702 = vsel %vm197, %v1684, 0
      %v1705 = vsel %vm197, %v1685, 0
      %v1708 = vsel %vm197, %v1686, 0
      %v1711 = vsel %vm197, %v1687, 0
      %v1714 = vsel %vm431, %v1688, 0
      %1716 = vmatprep.subr.bf16.mxu0 0
      %1717 = vmatpush1.bf16.msra.mxu0 0
      %1718 = vmatprep.subr.bf16.mxu0 0
      %1719 = vmatpush1.bf16.msra.mxu0 0
      %1720 = vmatprep.subr.bf16.mxu0 0
      %1721 = vmatpush1.bf16.msra.mxu0 0
      %1722 = vmatprep.subr.bf16.mxu0 0
      %1723 = vmatpush1.bf16.msra.mxu0 0
      %1724 = vmatprep.subr.bf16.mxu0 0
      %1725 = vmatpush1.bf16.msra.mxu0 0
      %1726 = vmatprep.subr.bf16.mxu0 0
      %1727 = vmatpush1.bf16.msra.mxu0 0
      %1728 = vmatprep.subr.bf16.mxu0 0
      %1729 = vmatpush1.bf16.msra.mxu0 0
      %1730 = vmatprep.subr.bf16.mxu0 0
      %1731 = vmatpush1.bf16.msra.mxu0 %v1714
      %1732 = vmatprep.subr.bf16.mxu0 0
      %1733 = vmatpush2.bf16.msra.mxu0 0
      %1734 = vmatprep.subr.bf16.mxu0 0
      %1735 = vmatpush2.bf16.msra.mxu0 0
      %1736 = vmatprep.subr.bf16.mxu0 0
      %1737 = vmatpush2.bf16.msra.mxu0 0
      %1738 = vmatprep.subr.bf16.mxu0 0
      %1739 = vmatpush2.bf16.msra.mxu0 0
      %1740 = vmatprep.subr.bf16.mxu0 0
      %1741 = vmatpush2.bf16.msra.mxu0 0
      %1742 = vmatprep.subr.bf16.mxu0 0
      %1743 = vmatpush2.bf16.msra.mxu0 0
      %1744 = vmatprep.subr.bf16.mxu0 0
      %1745 = vmatpush2.bf16.msra.mxu0 0
      %1746 = vmatprep.subr.bf16.mxu0 0
      %1747 = vmatpush2.bf16.msra.mxu0 0
      %1748 = vmatprep.mubr.bf16.mxu0 0
      %1749 = vmatmul.mubr.bf16.gmra.mxu0 %v1690
      %v1750 = vpop.f32.mrf.mxu0
      %v1751 = vadd.f32 0.0, %v1750
      %v1752 = vpop.f32.mrf.mxu0
      %v1753 = vpop.f32.mrf.mxu0
      %v1754 = vadd.f32 0.0, %v1753
      %v1755 = vpop.f32.mrf.mxu0
      %1756 = vmatprep.mubr.bf16.mxu0 0
      %1757 = vmatmul.mubr.bf16.gmra.mxu0 %v1693
      %v1758 = vpop.f32.mrf.mxu0
      %v1759 = vadd.f32 0.0, %v1758
      %v1760 = vpop.f32.mrf.mxu0
      %v1761 = vpop.f32.mrf.mxu0
      %v1762 = vadd.f32 0.0, %v1761
      %v1763 = vpop.f32.mrf.mxu0
      %1764 = vmatprep.mubr.bf16.mxu0 0
      %1765 = vmatmul.mubr.bf16.gmra.mxu0 %v1696
      %v1766 = vpop.f32.mrf.mxu0
      %v1767 = vadd.f32 0.0, %v1766
      %v1768 = vpop.f32.mrf.mxu0
      %v1769 = vpop.f32.mrf.mxu0
      %v1770 = vadd.f32 0.0, %v1769
      %v1771 = vpop.f32.mrf.mxu0
      %1772 = vmatprep.mubr.bf16.mxu0 0
      %1773 = vmatmul.mubr.bf16.gmra.mxu0 %v1699
      %v1774 = vpop.f32.mrf.mxu0
      %v1775 = vadd.f32 0.0, %v1774
      %v1776 = vpop.f32.mrf.mxu0
      %v1777 = vpop.f32.mrf.mxu0
      %v1778 = vadd.f32 0.0, %v1777
      %v1779 = vpop.f32.mrf.mxu0
      %1780 = vmatprep.mubr.bf16.mxu0 0
      %1781 = vmatmul.mubr.bf16.gmra.mxu0 %v1702
      %v1782 = vpop.f32.mrf.mxu0
      %v1783 = vadd.f32 0.0, %v1782
      %v1784 = vpop.f32.mrf.mxu0
      %v1785 = vpop.f32.mrf.mxu0
      %v1786 = vadd.f32 0.0, %v1785
      %v1787 = vpop.f32.mrf.mxu0
      %1788 = vmatprep.mubr.bf16.mxu0 0
      %1789 = vmatmul.mubr.bf16.gmra.mxu0 %v1705
      %v1790 = vpop.f32.mrf.mxu0
      %v1791 = vadd.f32 0.0, %v1790
      %v1792 = vpop.f32.mrf.mxu0
      %v1793 = vpop.f32.mrf.mxu0
      %v1794 = vadd.f32 0.0, %v1793
      %v1795 = vpop.f32.mrf.mxu0
      %1796 = vmatprep.mubr.bf16.mxu0 0
      %1797 = vmatmul.mubr.bf16.gmra.mxu0 %v1708
      %v1798 = vpop.f32.mrf.mxu0
      %v1799 = vadd.f32 0.0, %v1798
      %v1800 = vpop.f32.mrf.mxu0
      %v1801 = vpop.f32.mrf.mxu0
      %v1802 = vadd.f32 0.0, %v1801
      %v1803 = vpop.f32.mrf.mxu0
      %1804 = vmatprep.mubr.bf16.mxu0 0
      %1805 = vmatmul.mubr.bf16.gmra.mxu0 %v1711
      %v1806 = vpop.f32.mrf.mxu0
      %v1807 = vadd.f32 0.0, %v1806
      %v1808 = vpop.f32.mrf.mxu0
      %v1809 = vpop.f32.mrf.mxu0
      %v1810 = vadd.f32 0.0, %v1809
      %v1811 = vpop.f32.mrf.mxu0
      %1812 = vdwg.mxu0
      %v1813 = vadd.f32 %v1648, %v1751
      %v1814 = vadd.f32 %v1649, %v1754
      %v1815 = vadd.f32 %v1650, %v1759
      %v1816 = vadd.f32 %v1651, %v1762
      %v1817 = vadd.f32 %v1652, %v1767
      %v1818 = vadd.f32 %v1653, %v1770
      %v1819 = vadd.f32 %v1654, %v1775
      %v1820 = vadd.f32 %v1655, %v1778
      %v1821 = vadd.f32 %v1656, %v1783
      %v1822 = vadd.f32 %v1657, %v1786
      %v1823 = vadd.f32 %v1658, %v1791
      %v1824 = vadd.f32 %v1659, %v1794
      %v1825 = vadd.f32 %v1660, %v1799
      %v1826 = vadd.f32 %v1661, %v1802
      %v1827 = vadd.f32 %v1662, %v1807
      %v1828 = vadd.f32 %v1663, %v1810
      %v1829 = vld [vmem:[%s2] sm:$0x1]
      %v1831 = vlaneseq
      %v1832 = vshrl.u32 %v1831, 7
      %v1833 = vsub.s32 0, %v1832
      %v1834 = vrot.slane %v1829, %v1833
      %v1836 = vadd.f32 %v1813, %v1834
      %v1837 = vadd.f32 %v1814, %v1834
      %v1838 = vadd.f32 %v1815, %v1834
      %v1839 = vadd.f32 %v1816, %v1834
      %v1840 = vadd.f32 %v1817, %v1834
      %v1841 = vadd.f32 %v1818, %v1834
      %v1842 = vadd.f32 %v1819, %v1834
      %v1843 = vadd.f32 %v1820, %v1834
      %v1844 = vadd.f32 %v1821, %v1834
      %v1845 = vadd.f32 %v1822, %v1834
      %v1846 = vadd.f32 %v1823, %v1834
      %v1847 = vadd.f32 %v1824, %v1834
      %v1848 = vadd.f32 %v1825, %v1834
      %v1849 = vadd.f32 %v1826, %v1834
      %v1850 = vadd.f32 %v1827, %v1834
      %v1851 = vadd.f32 %v1828, %v1834
      %v1852 = vmax.f32 %v1836, 0.0
      %v1853 = vmax.f32 %v1837, 0.0
      %v1854 = vmax.f32 %v1838, 0.0
      %v1855 = vmax.f32 %v1839, 0.0
      %v1856 = vmax.f32 %v1840, 0.0
      %v1857 = vmax.f32 %v1841, 0.0
      %v1858 = vmax.f32 %v1842, 0.0
      %v1859 = vmax.f32 %v1843, 0.0
      %v1860 = vmax.f32 %v1844, 0.0
      %v1861 = vmax.f32 %v1845, 0.0
      %v1862 = vmax.f32 %v1846, 0.0
      %v1863 = vmax.f32 %v1847, 0.0
      %v1864 = vmax.f32 %v1848, 0.0
      %v1865 = vmax.f32 %v1849, 0.0
      %v1866 = vmax.f32 %v1850, 0.0
      %v1867 = vmax.f32 %v1851, 0.0
      %v1868 = vpack.c.bf16 %v1853, %v1852
      %v1869 = vpack.c.bf16 %v1855, %v1854
      %v1870 = vpack.c.bf16 %v1857, %v1856
      %v1871 = vpack.c.bf16 %v1859, %v1858
      %v1872 = vpack.c.bf16 %v1861, %v1860
      %v1873 = vpack.c.bf16 %v1863, %v1862
      %v1874 = vpack.c.bf16 %v1865, %v1864
      %v1875 = vpack.c.bf16 %v1867, %v1866
      %v1884 = vunpack.c.l.b16 %v1868
      %v1885 = vunpack.c.h.b16 %v1868
      %v1886 = vunpack.c.l.b16 %v1869
      %v1887 = vunpack.c.h.b16 %v1869
      %v1888 = vunpack.c.l.b16 %v1870
      %v1889 = vunpack.c.h.b16 %v1870
      %v1890 = vunpack.c.l.b16 %v1871
      %v1891 = vunpack.c.h.b16 %v1871
      %v1892 = vunpack.c.l.b16 %v1872
      %v1893 = vunpack.c.h.b16 %v1872
      %v1894 = vunpack.c.l.b16 %v1873
      %v1895 = vunpack.c.h.b16 %v1873
      %v1896 = vunpack.c.l.b16 %v1874
      %v1897 = vunpack.c.h.b16 %v1874
      %v1898 = vunpack.c.l.b16 %v1875
      %v1899 = vunpack.c.h.b16 %v1875
      %v1900 = vpack.c.b16 %v1884, %v1884
      %v1901 = vpack.c.b16 %v1885, %v1885
      %v1902 = vpack.c.b16 %v1886, %v1886
      %v1903 = vpack.c.b16 %v1887, %v1887
      %v1904 = vpack.c.b16 %v1888, %v1888
      %v1905 = vpack.c.b16 %v1889, %v1889
      %v1906 = vpack.c.b16 %v1890, %v1890
      %v1907 = vpack.c.b16 %v1891, %v1891
      %v1908 = vpack.c.b16 %v1892, %v1892
      %v1909 = vpack.c.b16 %v1893, %v1893
      %v1910 = vpack.c.b16 %v1894, %v1894
      %v1911 = vpack.c.b16 %v1895, %v1895
      %v1912 = vpack.c.b16 %v1896, %v1896
      %v1913 = vpack.c.b16 %v1897, %v1897
      %v1914 = vpack.c.b16 %v1898, %v1898
      %v1915 = vpack.c.b16 %v1899, %v1899
      %vm1932 = vcmask 60416
      %1933 = vst.msk [vmem:[%s194] sm:$0xf] %vm1932, %v1900
      %1934 = vst.msk [vmem:[%s194 + $0x4] sm:$0xf] %vm1932, %v1901
      %1935 = vst.msk [vmem:[%s194 + $0x8] sm:$0xf] %vm1932, %v1902
      %1936 = vst.msk [vmem:[%s194 + $0xc] sm:$0xf] %vm1932, %v1903
      %1937 = vst.msk [vmem:[%s194 + $0x10] sm:$0xf] %vm1932, %v1904
      %1938 = vst.msk [vmem:[%s194 + $0x14] sm:$0xf] %vm1932, %v1905
      %1939 = vst.msk [vmem:[%s194 + $0x18] sm:$0xf] %vm1932, %v1906
      %1940 = vst.msk [vmem:[%s194 + $0x1c] sm:$0xf] %vm1932, %v1907
      %1941 = vst.msk [vmem:[%s194 + $0x20] sm:$0xf] %vm1932, %v1908
      %1942 = vst.msk [vmem:[%s194 + $0x24] sm:$0xf] %vm1932, %v1909
      %1943 = vst.msk [vmem:[%s194 + $0x28] sm:$0xf] %vm1932, %v1910
      %1944 = vst.msk [vmem:[%s194 + $0x2c] sm:$0xf] %vm1932, %v1911
      %1945 = vst.msk [vmem:[%s194 + $0x30] sm:$0xf] %vm1932, %v1912
      %1946 = vst.msk [vmem:[%s194 + $0x34] sm:$0xf] %vm1932, %v1913
      %1947 = vst.msk [vmem:[%s194 + $0x38] sm:$0xf] %vm1932, %v1914
      %1948 = vst.msk [vmem:[%s194 + $0x3c] sm:$0xf] %vm1932, %v1915
      %s1949 = smul.u32 8, %s19
      %p1950 = scmp.lt.s32.totalorder %s18, 1
      %s1951 = scalar_select %p1950, %s18, 1
      %p1952 = scmp.lt.s32.totalorder %s1949, 15
      %s1953 = scalar_select %p1952, %s1949, 15
      %s1954 = smul.addr %s1953, 2
      %s1955 = smul.addr %s1951, 32
      %s1956 = sadd.s32 %s1954, %s1955
      %s1957 = smul.addr %s1956, 4
      %s1958 = scalar_lea.vmem %s3, %s1957
      // Predicated region
      $region33: #{basic_block_forward.2} parent=31 // pred_check
        %p1959 = pneg %p114
      $region34: #{basic_block_forward.2} parent=31 // pred_check_branch
        %1961 = sbr.rel (%p1959) target = $region36
      $region35: #{basic_block_forward.2} parent=31 // pred_region
        %s1962 = smul.u32 8, %s19
      $region36: #{basic_block_forward.2} parent=31 // pred_fallthru
        _
    $region32: #{basic_block_forward.2} parent=5 // pred_fallthru
      _
    %p1963 = scmp.le.s32.totalorder 2, %s9
    // Predicated region
    $region37: #{basic_block_forward.2} parent=5 // pred_check
      %p1964 = pneg %p1963
    $region38: #{basic_block_forward.2} parent=5 // pred_check_branch
      %1966 = sbr.rel (%p1964) target = $region40
    $region39: #{basic_block_forward.2} parent=5 // pred_region
      %s1967 = ssub.s32 %s9, 2
      // Predicated region
      $region41: #{basic_block_forward.2} parent=39 // pred_check
        %p1968 = pneg %p120
      $region42: #{basic_block_forward.2} parent=39 // pred_check_branch
        %1970 = sbr.rel (%p1968) target = $region44
      $region43: #{basic_block_forward.2} parent=39 // pred_region
        %s1971 = smul.u32 8, %s21
        %p1972 = scmp.lt.s32.totalorder %s20, 1
        %s1973 = scalar_select %p1972, %s20, 1
        %p1974 = scmp.lt.s32.totalorder %s1971, 15
        %s1975 = scalar_select %p1974, %s1971, 15
        %s1976 = smul.addr %s1975, 2
        %s1977 = smul.addr %s1973, 32
        %s1978 = sadd.s32 %s1976, %s1977
        %s1979 = smul.addr %s1978, 4
        %s1980 = scalar_lea.vmem %s3, %s1979
      $region44: #{basic_block_forward.2} parent=39 // pred_fallthru
        _
    $region40: #{basic_block_forward.2} parent=5 // pred_fallthru
      _
  $region6: #{basic_block_forward.2} parent=0 // loop_footer
    %s13 = sadd.s32 1, %s9
  $region7: #{basic_block_forward.2} parent=0 // loop_footer_branch
    %8 = sbr.rel target = $region3
  $region8: #{basic_block_forward.2} parent=0 // loop_exit
    _

// kernel: basic_block_forward.3
$region0: #{basic_block_forward.3}
  #allocation0 [shape = 'u32[]', space=smem, size = 0x4, offset = 0x4, fixed_abs, tag = 'smem constant byte address 0x4 - core index']
  #allocation1 [shape = 'u32[144,128]{1,0:T(1,128)}', space=vmem, size = 0x12000, scoped, tag = 'internal scratch']
  #allocation2 [shape = 'f32[18,18,8]{2,1,0:T(8,128)}', space=vmem, size = 0x36000, scoped, tag = 'scratch operand']
  %s0 = inlined_call_operand.vmem [shape: bf16[2,16,16,8], index: 0, kind: input, shape index: {}]
  %s1 = inlined_call_operand.vmem [shape: bf16[72,8], index: 1, kind: input, shape index: {}]
  %s2 = inlined_call_operand.vmem [shape: f32[1,8], index: 2, kind: input, shape index: {}]
  %s3 = inlined_call_operand.vmem [shape: bf16[2,16,16,4], index: 3, kind: input, shape index: {}]
  %s4 = inlined_call_operand.vmem [shape: bf16[4,8], index: 4, kind: input, shape index: {}]
  %s5 = inlined_call_operand.vmem [shape: f32[1,8], index: 5, kind: input, shape index: {}]
  %s6 = inlined_call_operand.vmem [shape: f32[2,16,16,8], index: 6, kind: output, shape index: {}]
  %s7 = sld [smem:[#allocation0]]
  $region57: #{basic_block_forward.3} parent=0
    _
  %s9 = ssub.s32 1, %s7
  %s10 = scalar_select 0, %s9, %s7
  loop: start=0, step=1, limit=6
  $region2: #{basic_block_forward.3} parent=0 // loop_pre_header
    _
  $region3: #{basic_block_forward.3} parent=0 // loop_header
    %s12 = sphi 0, %s16
    %p13 = scmp.ge.s32.totalorder %s12, 6
    %s19 = sphi 0, %s31
    %s20 = sphi 0, %s27
    %s21 = sphi 0, %s19
    %s22 = sphi 0, %s20
    %s23 = sphi 0, %s21
    %s24 = sphi 0, %s22
    %s34 = sphi 0, %s36
    %s37 = sphi 0, %s34
    %s38 = sphi 0, %s37
    %s54 = sphi 0, %s38
    %s58 = sphi 0, %s58
    %s60 = sphi 0, %s58
    %s61 = sphi 0, %s60
    %s75 = sphi 0, %s61
    %s79 = sphi 0, %s79
    %s81 = sphi 0, %s79
    %s82 = sphi 0, %s81
    %s96 = sphi 0, %s82
    %s104 = sphi 0, %s106
    %s107 = sphi 0, %s104
    %s108 = sphi 0, %s107
    %s124 = sphi 0, %s108
    %s128 = sphi 0, %s128
    %s130 = sphi 0, %s128
    %s131 = sphi 0, %s130
    %s145 = sphi 0, %s131
    %s149 = sphi 0, %s149
    %s151 = sphi 0, %s149
    %s152 = sphi 0, %s151
    %s166 = sphi 0, %s152
    %s174 = sphi 0, %s176
    %s177 = sphi 0, %s174
    %s178 = sphi 0, %s177
    %s194 = sphi 0, %s178
  $region4: #{basic_block_forward.3} parent=0 // loop_header_branch
    %15 = sbr.rel (%p13) target = $region8
  $region5: #{basic_block_forward.3} parent=0 // loop_body
    %s17 = ssub.s32 %s12, 1
    %s18 = ssub.s32 %s12, 2
    %s25 = sadd.s32 1, %s20
    %p26 = scmp.ge.s32.totalorder %s25, 2
    %s27 = scalar_select %p26, 0, %s25
    %s28 = sadd.s32 1, %s19
    %s29 = scalar_select %p26, %s28, %s19
    %p30 = scmp.ge.s32.totalorder %s29, 2
    %s31 = scalar_select %p30, 0, %s29
    %s32 = ssub.s32 %s19, %s31
    %p33 = scmp.eq.s32.totalorder %s32, 0
    %s35 = sadd.s32 %s34, 1
    %s36 = scalar_select %p33, %s34, %s35
    %p39 = pneg %p33
    %p40 = scmp.eq.s32.totalorder %s12, 3
    %p41 = por %p39, %p40
    %p42 = scmp.ne.s32.totalorder %s34, %s37
    %p43 = scmp.eq.s32.totalorder %s12, 0
    %p44 = por %p42, %p43
    %p45 = scmp.ne.s32.totalorder %s34, %s37
    %p46 = scmp.eq.s32.totalorder %s17, 3
    %p47 = por %p45, %p46
    %p48 = scmp.ne.s32.totalorder %s37, %s38
    %p49 = scmp.eq.s32.totalorder %s17, 0
    %p50 = por %p48, %p49
    %p51 = scmp.ne.s32.totalorder %s37, %s38
    %p52 = scmp.eq.s32.totalorder %s18, 3
    %p53 = por %p51, %p52
    %p55 = scmp.ne.s32.totalorder %s38, %s54
    %p56 = scmp.eq.s32.totalorder %s18, 0
    %p57 = por %p55, %p56
    %s59 = sadd.s32 %s58, 1
    %p62 = scmp.eq.s32.totalorder %s12, 3
    %p63 = scmp.ne.s32.totalorder %s58, %s60
    %p64 = scmp.eq.s32.totalorder %s12, 0
    %p65 = por %p63, %p64
    %p66 = scmp.ne.s32.totalorder %s58, %s60
    %p67 = scmp.eq.s32.totalorder %s17, 3
    %p68 = por %p66, %p67
    %p69 = scmp.ne.s32.totalorder %s60, %s61
    %p70 = scmp.eq.s32.totalorder %s17, 0
    %p71 = por %p69, %p70
    %p72 = scmp.ne.s32.totalorder %s60, %s61
    %p73 = scmp.eq.s32.totalorder %s18, 3
    %p74 = por %p72, %p73
    %p76 = scmp.ne.s32.totalorder %s61, %s75
    %p77 = scmp.eq.s32.totalorder %s18, 0
    %p78 = por %p76, %p77
    %s80 = sadd.s32 %s79, 1
    %p83 = scmp.eq.s32.totalorder %s12, 3
    %p84 = scmp.ne.s32.totalorder %s79, %s81
    %p85 = scmp.eq.s32.totalorder %s12, 0
    %p86 = por %p84, %p85
    %p87 = scmp.ne.s32.totalorder %s79, %s81
    %p88 = scmp.eq.s32.totalorder %s17, 3
    %p89 = por %p87, %p88
    %p90 = scmp.ne.s32.totalorder %s81, %s82
    %p91 = scmp.eq.s32.totalorder %s17, 0
    %p92 = por %p90, %p91
    %p93 = scmp.ne.s32.totalorder %s81, %s82
    %p94 = scmp.eq.s32.totalorder %s18, 3
    %p95 = por %p93, %p94
    %p97 = scmp.ne.s32.totalorder %s82, %s96
    %p98 = scmp.eq.s32.totalorder %s18, 0
    %p99 = por %p97, %p98
    %s100 = ssub.s32 %s19, %s31
    %s101 = ssub.s32 %s20, %s27
    %s102 = sor.u32 %s100, %s101
    %p103 = scmp.eq.s32.totalorder %s102, 0
    %s105 = sadd.s32 %s104, 1
    %s106 = scalar_select %p103, %s104, %s105
    %p109 = pneg %p103
    %p110 = scmp.eq.s32.totalorder %s12, 3
    %p111 = por %p109, %p110
    %p112 = scmp.ne.s32.totalorder %s104, %s107
    %p113 = scmp.eq.s32.totalorder %s12, 0
    %p114 = por %p112, %p113
    %p115 = scmp.ne.s32.totalorder %s104, %s107
    %p116 = scmp.eq.s32.totalorder %s17, 3
    %p117 = por %p115, %p116
    %p118 = scmp.ne.s32.totalorder %s107, %s108
    %p119 = scmp.eq.s32.totalorder %s17, 0
    %p120 = por %p118, %p119
    %p121 = scmp.ne.s32.totalorder %s107, %s108
    %p122 = scmp.eq.s32.totalorder %s18, 3
    %p123 = por %p121, %p122
    %p125 = scmp.ne.s32.totalorder %s108, %s124
    %p126 = scmp.eq.s32.totalorder %s18, 0
    %p127 = por %p125, %p126
    %s129 = sadd.s32 %s128, 1
    %p132 = scmp.eq.s32.totalorder %s12, 3
    %p133 = scmp.ne.s32.totalorder %s128, %s130
    %p134 = scmp.eq.s32.totalorder %s12, 0
    %p135 = por %p133, %p134
    %p136 = scmp.ne.s32.totalorder %s128, %s130
    %p137 = scmp.eq.s32.totalorder %s17, 3
    %p138 = por %p136, %p137
    %p139 = scmp.ne.s32.totalorder %s130, %s131
    %p140 = scmp.eq.s32.totalorder %s17, 0
    %p141 = por %p139, %p140
    %p142 = scmp.ne.s32.totalorder %s130, %s131
    %p143 = scmp.eq.s32.totalorder %s18, 3
    %p144 = por %p142, %p143
    %p146 = scmp.ne.s32.totalorder %s131, %s145
    %p147 = scmp.eq.s32.totalorder %s18, 0
    %p148 = por %p146, %p147
    %s150 = sadd.s32 %s149, 1
    %p153 = scmp.eq.s32.totalorder %s12, 3
    %p154 = scmp.ne.s32.totalorder %s149, %s151
    %p155 = scmp.eq.s32.totalorder %s12, 0
    %p156 = por %p154, %p155
    %p157 = scmp.ne.s32.totalorder %s149, %s151
    %p158 = scmp.eq.s32.totalorder %s17, 3
    %p159 = por %p157, %p158
    %p160 = scmp.ne.s32.totalorder %s151, %s152
    %p161 = scmp.eq.s32.totalorder %s17, 0
    %p162 = por %p160, %p161
    %p163 = scmp.ne.s32.totalorder %s151, %s152
    %p164 = scmp.eq.s32.totalorder %s18, 3
    %p165 = por %p163, %p164
    %p167 = scmp.ne.s32.totalorder %s152, %s166
    %p168 = scmp.eq.s32.totalorder %s18, 0
    %p169 = por %p167, %p168
    %s170 = ssub.s32 %s19, %s31
    %s171 = ssub.s32 %s20, %s27
    %s172 = sor.u32 %s170, %s171
    %p173 = scmp.eq.s32.totalorder %s172, 0
    %s175 = sadd.s32 %s174, 1
    %s176 = scalar_select %p173, %s174, %s175
    %p179 = pneg %p173
    %p180 = scmp.eq.s32.totalorder %s12, 3
    %p181 = por %p179, %p180
    %p182 = scmp.ne.s32.totalorder %s174, %s177
    %p183 = scmp.eq.s32.totalorder %s12, 0
    %p184 = por %p182, %p183
    %p185 = scmp.ne.s32.totalorder %s174, %s177
    %p186 = scmp.eq.s32.totalorder %s17, 3
    %p187 = por %p185, %p186
    %p188 = scmp.ne.s32.totalorder %s177, %s178
    %p189 = scmp.eq.s32.totalorder %s17, 0
    %p190 = por %p188, %p189
    %p191 = scmp.ne.s32.totalorder %s177, %s178
    %p192 = scmp.eq.s32.totalorder %s18, 3
    %p193 = por %p191, %p192
    %p195 = scmp.ne.s32.totalorder %s178, %s194
    %p196 = scmp.eq.s32.totalorder %s18, 0
    %p197 = por %p195, %p196
    %p198 = scmp.le.s32.totalorder 1, %s12
    %p199 = scmp.lt.s32.totalorder %s12, 5
    %p200 = pnand %p198, %p199
    %p201 = pneg %p200
    // Predicated region
    $region9: #{basic_block_forward.3} parent=5 // pred_check
      _
    $region10: #{basic_block_forward.3} parent=5 // pred_check_branch
      %203 = sbr.rel (%p200) target = $region12
    $region11: #{basic_block_forward.3} parent=5 // pred_region
      %s204 = ssub.s32 %s12, 1
      // Predicated region
      $region13: #{basic_block_forward.3} parent=11 // pred_check
        %p205 = pneg %p71
      $region14: #{basic_block_forward.3} parent=11 // pred_check_branch
        %207 = sbr.rel (%p205) target = $region16
      $region15: #{basic_block_forward.3} parent=11 // pred_region
        _
      $region16: #{basic_block_forward.3} parent=11 // pred_fallthru
        _
      // Predicated region
      $region17: #{basic_block_forward.3} parent=11 // pred_check
        %p208 = pneg %p92
      $region18: #{basic_block_forward.3} parent=11 // pred_check_branch
        %210 = sbr.rel (%p208) target = $region20
      $region19: #{basic_block_forward.3} parent=11 // pred_region
        _
      $region20: #{basic_block_forward.3} parent=11 // pred_fallthru
        _
      // Predicated region
      $region21: #{basic_block_forward.3} parent=11 // pred_check
        %p211 = pneg %p141
      $region22: #{basic_block_forward.3} parent=11 // pred_check_branch
        %213 = sbr.rel (%p211) target = $region24
      $region23: #{basic_block_forward.3} parent=11 // pred_region
        _
      $region24: #{basic_block_forward.3} parent=11 // pred_fallthru
        _
      // Predicated region
      $region25: #{basic_block_forward.3} parent=11 // pred_check
        %p214 = pneg %p162
      $region26: #{basic_block_forward.3} parent=11 // pred_check_branch
        %216 = sbr.rel (%p214) target = $region28
      $region27: #{basic_block_forward.3} parent=11 // pred_region
        _
      $region28: #{basic_block_forward.3} parent=11 // pred_fallthru
        _
    $region12: #{basic_block_forward.3} parent=5 // pred_fallthru
      _
    %p217 = scmp.lt.s32.totalorder %s12, 4
    // Predicated region
    $region29: #{basic_block_forward.3} parent=5 // pred_check
      %p218 = pneg %p217
    $region30: #{basic_block_forward.3} parent=5 // pred_check_branch
      %220 = sbr.rel (%p218) target = $region32
    $region31: #{basic_block_forward.3} parent=5 // pred_region
      // Predicated region
      $region33: #{basic_block_forward.3} parent=31 // pred_check
        %p221 = pneg %p44
      $region34: #{basic_block_forward.3} parent=31 // pred_check_branch
        %223 = sbr.rel (%p221) target = $region36
      $region35: #{basic_block_forward.3} parent=31 // pred_region
        %p224 = scmp.lt.s32.totalorder %s19, 1
        %s225 = scalar_select %p224, %s19, 1
        %s226 = smul.addr %s225, 32
        %s227 = smul.addr %s226, 4
        %s228 = scalar_lea.vmem %s0, %s227
      $region36: #{basic_block_forward.3} parent=31 // pred_fallthru
        _
      // Predicated region
      $region37: #{basic_block_forward.3} parent=31 // pred_check
        %p229 = pneg %p114
      $region38: #{basic_block_forward.3} parent=31 // pred_check_branch
        %231 = sbr.rel (%p229) target = $region40
      $region39: #{basic_block_forward.3} parent=31 // pred_region
        %s232 = smul.u32 8, %s20
        %p233 = scmp.lt.s32.totalorder %s19, 1
        %s234 = scalar_select %p233, %s19, 1
        %p235 = scmp.lt.s32.totalorder %s232, 15
        %s236 = scalar_select %p235, %s232, 15
        %s237 = smul.addr %s236, 2
        %s238 = smul.addr %s234, 32
        %s239 = sadd.s32 %s237, %s238
        %s240 = smul.addr %s239, 4
        %s241 = scalar_lea.vmem %s3, %s240
        %s242 = smul.u32 8, %s20
      $region40: #{basic_block_forward.3} parent=31 // pred_fallthru
        _
    $region32: #{basic_block_forward.3} parent=5 // pred_fallthru
      _
    %p243 = scmp.le.s32.totalorder 1, %s12
    %p244 = scmp.lt.s32.totalorder %s12, 5
    %p245 = pnand %p243, %p244
    %p246 = pneg %p245
    // Predicated region
    $region41: #{basic_block_forward.3} parent=5 // pred_check
      _
    $region42: #{basic_block_forward.3} parent=5 // pred_check_branch
      %248 = sbr.rel (%p245) target = $region44
    $region43: #{basic_block_forward.3} parent=5 // pred_region
      %s249 = ssub.s32 %s12, 1
      %p250 = scmp.lt.s32.totalorder %s21, 1
      %s251 = scalar_select %p250, %s21, 1
      %s252 = smul.addr %s251, 32
      %s253 = smul.addr %s252, 4
      %s254 = scalar_lea.vmem %s0, %s253
      %p255 = pneg %p50
      %p256 = pneg %p47
      %p257 = pneg %p71
      %p258 = pneg %p68
      %p259 = pneg %p92
      %p260 = pneg %p89
      %s261 = smul.u32 8, %s22
      %p262 = scmp.lt.s32.totalorder %s21, 1
      %s263 = scalar_select %p262, %s21, 1
      %p264 = scmp.lt.s32.totalorder %s261, 15
      %s265 = scalar_select %p264, %s261, 15
      %s266 = smul.addr %s265, 2
      %s267 = smul.addr %s263, 32
      %s268 = sadd.s32 %s266, %s267
      %s269 = smul.addr %s268, 4
      %s270 = scalar_lea.vmem %s3, %s269
      %p271 = pneg %p120
      %p272 = pneg %p117
      %p273 = pneg %p141
      %p274 = pneg %p138
      %p275 = pneg %p162
      %p276 = pneg %p159
      %p277 = pneg %p190
      %p278 = pneg %p187
      %s279 = smul.u32 8, %s22
      %p280 = scmp.lt.s32.totalorder %s21, 1
      %s281 = scalar_select %p280, %s21, 1
      %p282 = scmp.lt.s32.totalorder %s279, 15
      %s283 = scalar_select %p282, %s279, 15
      %s284 = smul.addr %s283, 2
      %s285 = smul.addr %s281, 32
      %s286 = sadd.s32 %s284, %s285
      %s287 = smul.addr %s286, 8
      %s288 = scalar_lea.vmem %s6, %s287
      %p289 = scmp.lt.s32.totalorder %s21, 1
      %s290 = scalar_select %p289, %s21, 1
      %s291 = smul.addr %s290, 32
      %s292 = smul.addr %s291, 4
      %s293 = scalar_lea.vmem %s0, %s292
      %s294 = smul.u32 8, %s22
      %p295 = scmp.lt.s32.totalorder %s21, 1
      %s296 = scalar_select %p295, %s21, 1
      %p297 = scmp.lt.s32.totalorder %s294, 15
      %s298 = scalar_select %p297, %s294, 15
      %s299 = smul.addr %s298, 2
      %s300 = smul.addr %s296, 32
      %s301 = sadd.s32 %s299, %s300
      %s302 = smul.addr %s301, 4
      %s303 = scalar_lea.vmem %s3, %s302
      %s304 = smul.u32 8, %s22
      %s305 = smul.u32 8, %s22
      %p306 = scmp.lt.s32.totalorder %s21, 1
      %s307 = scalar_select %p306, %s21, 1
      %p308 = scmp.lt.s32.totalorder %s305, 15
      %s309 = scalar_select %p308, %s305, 15
      %s310 = smul.addr %s309, 2
      %s311 = smul.addr %s307, 32
      %s312 = sadd.s32 %s310, %s311
      %s313 = smul.addr %s312, 8
      %s314 = scalar_lea.vmem %s6, %s313
      %s315 = smul.u32 8, %s22
      %vm317 = vcmask 64512
      %318 = vst.msk [vmem:[#allocation2] sm:$0xff] %vm317, 0.0
      %319 = vst.msk [vmem:[#allocation2 + $0x8] sm:$0xff] %vm317, 0.0
      %vm320 = vcmask 58368
      %321 = vst.msk [vmem:[#allocation2 + $0x10] sm:$0x3] %vm320, 0.0
      %322 = vst.msk [vmem:[#allocation2 + $0x18] sm:$0xff] %vm317, 0.0
      %323 = vst.msk [vmem:[#allocation2 + $0x20] sm:$0xff] %vm317, 0.0
      %324 = vst.msk [vmem:[#allocation2 + $0x28] sm:$0x3] %vm320, 0.0
      %325 = vst.msk [vmem:[#allocation2 + $0x30] sm:$0xff] %vm317, 0.0
      %326 = vst.msk [vmem:[#allocation2 + $0x38] sm:$0xff] %vm317, 0.0
      %327 = vst.msk [vmem:[#allocation2 + $0x40] sm:$0x3] %vm320, 0.0
      %328 = vst.msk [vmem:[#allocation2 + $0x48] sm:$0xff] %vm317, 0.0
      %329 = vst.msk [vmem:[#allocation2 + $0x50] sm:$0xff] %vm317, 0.0
      %330 = vst.msk [vmem:[#allocation2 + $0x58] sm:$0x3] %vm320, 0.0
      %331 = vst.msk [vmem:[#allocation2 + $0x60] sm:$0xff] %vm317, 0.0
      %332 = vst.msk [vmem:[#allocation2 + $0x68] sm:$0xff] %vm317, 0.0
      %333 = vst.msk [vmem:[#allocation2 + $0x70] sm:$0x3] %vm320, 0.0
      %334 = vst.msk [vmem:[#allocation2 + $0x78] sm:$0xff] %vm317, 0.0
      %335 = vst.msk [vmem:[#allocation2 + $0x80] sm:$0xff] %vm317, 0.0
      %336 = vst.msk [vmem:[#allocation2 + $0x88] sm:$0x3] %vm320, 0.0
      %337 = vst.msk [vmem:[#allocation2 + $0x90] sm:$0xff] %vm317, 0.0
      %338 = vst.msk [vmem:[#allocation2 + $0x98] sm:$0xff] %vm317, 0.0
      %339 = vst.msk [vmem:[#allocation2 + $0xa0] sm:$0x3] %vm320, 0.0
      %340 = vst.msk [vmem:[#allocation2 + $0xa8] sm:$0xff] %vm317, 0.0
      %341 = vst.msk [vmem:[#allocation2 + $0xb0] sm:$0xff] %vm317, 0.0
      %342 = vst.msk [vmem:[#allocation2 + $0xb8] sm:$0x3] %vm320, 0.0
      %343 = vst.msk [vmem:[#allocation2 + $0xc0] sm:$0xff] %vm317, 0.0
      %344 = vst.msk [vmem:[#allocation2 + $0xc8] sm:$0xff] %vm317, 0.0
      %345 = vst.msk [vmem:[#allocation2 + $0xd0] sm:$0x3] %vm320, 0.0
      %346 = vst.msk [vmem:[#allocation2 + $0xd8] sm:$0xff] %vm317, 0.0
      %347 = vst.msk [vmem:[#allocation2 + $0xe0] sm:$0xff] %vm317, 0.0
      %348 = vst.msk [vmem:[#allocation2 + $0xe8] sm:$0x3] %vm320, 0.0
      %349 = vst.msk [vmem:[#allocation2 + $0xf0] sm:$0xff] %vm317, 0.0
      %350 = vst.msk [vmem:[#allocation2 + $0xf8] sm:$0xff] %vm317, 0.0
      %351 = vst.msk [vmem:[#allocation2 + $0x100] sm:$0x3] %vm320, 0.0
      %352 = vst.msk [vmem:[#allocation2 + $0x108] sm:$0xff] %vm317, 0.0
      %353 = vst.msk [vmem:[#allocation2 + $0x110] sm:$0xff] %vm317, 0.0
      %354 = vst.msk [vmem:[#allocation2 + $0x118] sm:$0x3] %vm320, 0.0
      %355 = vst.msk [vmem:[#allocation2 + $0x120] sm:$0xff] %vm317, 0.0
      %356 = vst.msk [vmem:[#allocation2 + $0x128] sm:$0xff] %vm317, 0.0
      %357 = vst.msk [vmem:[#allocation2 + $0x130] sm:$0x3] %vm320, 0.0
      %358 = vst.msk [vmem:[#allocation2 + $0x138] sm:$0xff] %vm317, 0.0
      %359 = vst.msk [vmem:[#allocation2 + $0x140] sm:$0xff] %vm317, 0.0
      %360 = vst.msk [vmem:[#allocation2 + $0x148] sm:$0x3] %vm320, 0.0
      %361 = vst.msk [vmem:[#allocation2 + $0x150] sm:$0xff] %vm317, 0.0
      %362 = vst.msk [vmem:[#allocation2 + $0x158] sm:$0xff] %vm317, 0.0
      %363 = vst.msk [vmem:[#allocation2 + $0x160] sm:$0x3] %vm320, 0.0
      %364 = vst.msk [vmem:[#allocation2 + $0x168] sm:$0xff] %vm317, 0.0
      %365 = vst.msk [vmem:[#allocation2 + $0x170] sm:$0xff] %vm317, 0.0
      %366 = vst.msk [vmem:[#allocation2 + $0x178] sm:$0x3] %vm320, 0.0
      %367 = vst.msk [vmem:[#allocation2 + $0x180] sm:$0xff] %vm317, 0.0
      %368 = vst.msk [vmem:[#allocation2 + $0x188] sm:$0xff] %vm317, 0.0
      %369 = vst.msk [vmem:[#allocation2 + $0x190] sm:$0x3] %vm320, 0.0
      %370 = vst.msk [vmem:[#allocation2 + $0x198] sm:$0xff] %vm317, 0.0
      %371 = vst.msk [vmem:[#allocation2 + $0x1a0] sm:$0xff] %vm317, 0.0
      %372 = vst.msk [vmem:[#allocation2 + $0x1a8] sm:$0x3] %vm320, 0.0
      %v373 = vld [vmem:[%s293] sm:$0xf]
      %v374 = vld [vmem:[%s293 + $0x4] sm:$0xf]
      %v375 = vld [vmem:[%s293 + $0x8] sm:$0xf]
      %v376 = vld [vmem:[%s293 + $0xc] sm:$0xf]
      %v377 = vld [vmem:[%s293 + $0x10] sm:$0xf]
      %v378 = vld [vmem:[%s293 + $0x14] sm:$0xf]
      %v379 = vld [vmem:[%s293 + $0x18] sm:$0xf]
      %v380 = vld [vmem:[%s293 + $0x1c] sm:$0xf]
      %v381 = vld [vmem:[%s293 + $0x20] sm:$0xf]
      %v382 = vld [vmem:[%s293 + $0x24] sm:$0xf]
      %v383 = vld [vmem:[%s293 + $0x28] sm:$0xf]
      %v384 = vld [vmem:[%s293 + $0x2c] sm:$0xf]
      %v385 = vld [vmem:[%s293 + $0x30] sm:$0xf]
      %v386 = vld [vmem:[%s293 + $0x34] sm:$0xf]
      %v387 = vld [vmem:[%s293 + $0x38] sm:$0xf]
      %v388 = vld [vmem:[%s293 + $0x3c] sm:$0xf]
      %v389 = vld [vmem:[%s293 + $0x40] sm:$0xf]
      %v390 = vld [vmem:[%s293 + $0x44] sm:$0xf]
      %v391 = vld [vmem:[%s293 + $0x48] sm:$0xf]
      %v392 = vld [vmem:[%s293 + $0x4c] sm:$0xf]
      %v393 = vld [vmem:[%s293 + $0x50] sm:$0xf]
      %v394 = vld [vmem:[%s293 + $0x54] sm:$0xf]
      %v395 = vld [vmem:[%s293 + $0x58] sm:$0xf]
      %v396 = vld [vmem:[%s293 + $0x5c] sm:$0xf]
      %v397 = vld [vmem:[%s293 + $0x60] sm:$0xf]
      %v398 = vld [vmem:[%s293 + $0x64] sm:$0xf]
      %v399 = vld [vmem:[%s293 + $0x68] sm:$0xf]
      %v400 = vld [vmem:[%s293 + $0x6c] sm:$0xf]
      %v401 = vld [vmem:[%s293 + $0x70] sm:$0xf]
      %v402 = vld [vmem:[%s293 + $0x74] sm:$0xf]
      %v403 = vld [vmem:[%s293 + $0x78] sm:$0xf]
      %v404 = vld [vmem:[%s293 + $0x7c] sm:$0xf]
      %v405 = vunpack.c.l.bf16 %v373
      %v406 = vunpack.c.l.bf16 %v374
      %v407 = vunpack.c.l.bf16 %v375
      %v408 = vunpack.c.l.bf16 %v376
      %v409 = vunpack.c.l.bf16 %v377
      %v410 = vunpack.c.l.bf16 %v378
      %v411 = vunpack.c.l.bf16 %v379
      %v412 = vunpack.c.l.bf16 %v380
      %v413 = vunpack.c.l.bf16 %v381
      %v414 = vunpack.c.l.bf16 %v382
      %v415 = vunpack.c.l.bf16 %v383
      %v416 = vunpack.c.l.bf16 %v384
      %v417 = vunpack.c.l.bf16 %v385
      %v418 = vunpack.c.l.bf16 %v386
      %v419 = vunpack.c.l.bf16 %v387
      %v420 = vunpack.c.l.bf16 %v388
      %v421 = vunpack.c.l.bf16 %v389
      %v422 = vunpack.c.l.bf16 %v390
      %v423 = vunpack.c.l.bf16 %v391
      %v424 = vunpack.c.l.bf16 %v392
      %v425 = vunpack.c.l.bf16 %v393
      %v426 = vunpack.c.l.bf16 %v394
      %v427 = vunpack.c.l.bf16 %v395
      %v428 = vunpack.c.l.bf16 %v396
      %v429 = vunpack.c.l.bf16 %v397
      %v430 = vunpack.c.l.bf16 %v398
      %v431 = vunpack.c.l.bf16 %v399
      %v432 = vunpack.c.l.bf16 %v400
      %v433 = vunpack.c.l.bf16 %v401
      %v434 = vunpack.c.l.bf16 %v402
      %v435 = vunpack.c.l.bf16 %v403
      %v436 = vunpack.c.l.bf16 %v404
      %s437 = scalar_lea.vmem [#allocation2], 24
      %438 = vst.msk [vmem:[%s437 + $0x1] sm:$0xff] %vm317, %v405
      %439 = vst.msk [vmem:[%s437 + $0x9] sm:$0xff] %vm317, %v406
      %440 = vst.msk [vmem:[%s437 + $0x19] sm:$0xff] %vm317, %v407
      %441 = vst.msk [vmem:[%s437 + $0x21] sm:$0xff] %vm317, %v408
      %442 = vst.msk [vmem:[%s437 + $0x31] sm:$0xff] %vm317, %v409
      %443 = vst.msk [vmem:[%s437 + $0x39] sm:$0xff] %vm317, %v410
      %444 = vst.msk [vmem:[%s437 + $0x49] sm:$0xff] %vm317, %v411
      %445 = vst.msk [vmem:[%s437 + $0x51] sm:$0xff] %vm317, %v412
      %446 = vst.msk [vmem:[%s437 + $0x61] sm:$0xff] %vm317, %v413
      %447 = vst.msk [vmem:[%s437 + $0x69] sm:$0xff] %vm317, %v414
      %448 = vst.msk [vmem:[%s437 + $0x79] sm:$0xff] %vm317, %v415
      %449 = vst.msk [vmem:[%s437 + $0x81] sm:$0xff] %vm317, %v416
      %450 = vst.msk [vmem:[%s437 + $0x91] sm:$0xff] %vm317, %v417
      %451 = vst.msk [vmem:[%s437 + $0x99] sm:$0xff] %vm317, %v418
      %452 = vst.msk [vmem:[%s437 + $0xa9] sm:$0xff] %vm317, %v419
      %453 = vst.msk [vmem:[%s437 + $0xb1] sm:$0xff] %vm317, %v420
      %454 = vst.msk [vmem:[%s437 + $0xc1] sm:$0xff] %vm317, %v421
      %455 = vst.msk [vmem:[%s437 + $0xc9] sm:$0xff] %vm317, %v422
      %456 = vst.msk [vmem:[%s437 + $0xd9] sm:$0xff] %vm317, %v423
      %457 = vst.msk [vmem:[%s437 + $0xe1] sm:$0xff] %vm317, %v424
      %458 = vst.msk [vmem:[%s437 + $0xf1] sm:$0xff] %vm317, %v425
      %459 = vst.msk [vmem:[%s437 + $0xf9] sm:$0xff] %vm317, %v426
      %460 = vst.msk [vmem:[%s437 + $0x109] sm:$0xff] %vm317, %v427
      %461 = vst.msk [vmem:[%s437 + $0x111] sm:$0xff] %vm317, %v428
      %462 = vst.msk [vmem:[%s437 + $0x121] sm:$0xff] %vm317, %v429
      %463 = vst.msk [vmem:[%s437 + $0x129] sm:$0xff] %vm317, %v430
      %464 = vst.msk [vmem:[%s437 + $0x139] sm:$0xff] %vm317, %v431
      %465 = vst.msk [vmem:[%s437 + $0x141] sm:$0xff] %vm317, %v432
      %466 = vst.msk [vmem:[%s437 + $0x151] sm:$0xff] %vm317, %v433
      %467 = vst.msk [vmem:[%s437 + $0x159] sm:$0xff] %vm317, %v434
      %468 = vst.msk [vmem:[%s437 + $0x169] sm:$0xff] %vm317, %v435
      %469 = vst.msk [vmem:[%s437 + $0x171] sm:$0xff] %vm317, %v436
      %s470 = smul.u32 %s22, 8
      %s471 = smul.u32 %s470, 24
      %s472 = scalar_lea.vmem [#allocation2], %s471
      %v473 = vld [vmem:[%s472] sm:$0xff]
      %v474 = vld [vmem:[%s472 + $0x8] sm:$0xff]
      %v475 = vld [vmem:[%s472 + $0x18] sm:$0xff]
      %v476 = vld [vmem:[%s472 + $0x20] sm:$0xff]
      %v477 = vld [vmem:[%s472 + $0x30] sm:$0xff]
      %v478 = vld [vmem:[%s472 + $0x38] sm:$0xff]
      %v479 = vld [vmem:[%s472 + $0x48] sm:$0xff]
      %v480 = vld [vmem:[%s472 + $0x50] sm:$0xff]
      %v481 = vld [vmem:[%s472 + $0x60] sm:$0xff]
      %v482 = vld [vmem:[%s472 + $0x68] sm:$0xff]
      %v483 = vld [vmem:[%s472 + $0x78] sm:$0xff]
      %v484 = vld [vmem:[%s472 + $0x80] sm:$0xff]
      %v485 = vld [vmem:[%s472 + $0x90] sm:$0xff]
      %v486 = vld [vmem:[%s472 + $0x98] sm:$0xff]
      %v487 = vld [vmem:[%s472 + $0xa8] sm:$0xff]
      %v488 = vld [vmem:[%s472 + $0xb0] sm:$0xff]
      %v489 = vpack.c.bf16 %v474, %v473
      %v490 = vpack.c.bf16 %v476, %v475
      %v491 = vpack.c.bf16 %v478, %v477
      %v492 = vpack.c.bf16 %v480, %v479
      %v493 = vpack.c.bf16 %v482, %v481
      %v494 = vpack.c.bf16 %v484, %v483
      %v495 = vpack.c.bf16 %v486, %v485
      %v496 = vpack.c.bf16 %v488, %v487
      %v497 = vld [vmem:[%s1] sm:$0xf]
      %v498 = vld [vmem:[%s472 + $0x1] sm:$0xff]
      %v499 = vld [vmem:[%s472 + $0x9] sm:$0xff]
      %v500 = vld [vmem:[%s472 + $0x19] sm:$0xff]
      %v501 = vld [vmem:[%s472 + $0x21] sm:$0xff]
      %v502 = vld [vmem:[%s472 + $0x31] sm:$0xff]
      %v503 = vld [vmem:[%s472 + $0x39] sm:$0xff]
      %v504 = vld [vmem:[%s472 + $0x49] sm:$0xff]
      %v505 = vld [vmem:[%s472 + $0x51] sm:$0xff]
      %v506 = vld [vmem:[%s472 + $0x61] sm:$0xff]
      %v507 = vld [vmem:[%s472 + $0x69] sm:$0xff]
      %v508 = vld [vmem:[%s472 + $0x79] sm:$0xff]
      %v509 = vld [vmem:[%s472 + $0x81] sm:$0xff]
      %v510 = vld [vmem:[%s472 + $0x91] sm:$0xff]
      %v511 = vld [vmem:[%s472 + $0x99] sm:$0xff]
      %v512 = vld [vmem:[%s472 + $0xa9] sm:$0xff]
      %v513 = vld [vmem:[%s472 + $0xb1] sm:$0xff]
      %v514 = vpack.c.bf16 %v499, %v498
      %v515 = vpack.c.bf16 %v501, %v500
      %v516 = vpack.c.bf16 %v503, %v502
      %v517 = vpack.c.bf16 %v505, %v504
      %v518 = vpack.c.bf16 %v507, %v506
      %v519 = vpack.c.bf16 %v509, %v508
      %v520 = vpack.c.bf16 %v511, %v510
      %v521 = vpack.c.bf16 %v513, %v512
      %v522 = vld [vmem:[%s1 + $0x4] sm:$0xf]
      %v524 = vsel %vm317, %v514, 0
      %v527 = vsel %vm317, %v515, 0
      %v530 = vsel %vm317, %v516, 0
      %v533 = vsel %vm317, %v517, 0
      %v536 = vsel %vm317, %v518, 0
      %v539 = vsel %vm317, %v519, 0
      %v542 = vsel %vm317, %v520, 0
      %v545 = vsel %vm317, %v521, 0
      %vm547 = vcmask 1043456
      %v549 = vsel %vm547, %v522, 0
      %551 = vmatprep.subr.bf16.mxu0 0
      %552 = vmatpush1.bf16.msra.mxu0 0
      %553 = vmatprep.subr.bf16.mxu0 0
      %554 = vmatpush1.bf16.msra.mxu0 0
      %555 = vmatprep.subr.bf16.mxu0 0
      %556 = vmatpush1.bf16.msra.mxu0 0
      %557 = vmatprep.subr.bf16.mxu0 0
      %558 = vmatpush1.bf16.msra.mxu0 0
      %559 = vmatprep.subr.bf16.mxu0 0
      %560 = vmatpush1.bf16.msra.mxu0 0
      %561 = vmatprep.subr.bf16.mxu0 0
      %562 = vmatpush1.bf16.msra.mxu0 0
      %563 = vmatprep.subr.bf16.mxu0 0
      %564 = vmatpush1.bf16.msra.mxu0 0
      %565 = vmatprep.subr.bf16.mxu0 0
      %566 = vmatpush1.bf16.msra.mxu0 %v549
      %567 = vmatprep.subr.bf16.mxu0 0
      %568 = vmatpush2.bf16.msra.mxu0 0
      %569 = vmatprep.subr.bf16.mxu0 0
      %570 = vmatpush2.bf16.msra.mxu0 0
      %571 = vmatprep.subr.bf16.mxu0 0
      %572 = vmatpush2.bf16.msra.mxu0 0
      %573 = vmatprep.subr.bf16.mxu0 0
      %574 = vmatpush2.bf16.msra.mxu0 0
      %575 = vmatprep.subr.bf16.mxu0 0
      %576 = vmatpush2.bf16.msra.mxu0 0
      %577 = vmatprep.subr.bf16.mxu0 0
      %578 = vmatpush2.bf16.msra.mxu0 0
      %579 = vmatprep.subr.bf16.mxu0 0
      %580 = vmatpush2.bf16.msra.mxu0 0
      %581 = vmatprep.subr.bf16.mxu0 0
      %582 = vmatpush2.bf16.msra.mxu0 0
      %583 = vmatprep.mubr.bf16.mxu0 0
      %584 = vmatmul.mubr.bf16.gmra.mxu0 %v524
      %v585 = vpop.f32.mrf.mxu0
      %v586 = vadd.f32 0.0, %v585
      %v587 = vpop.f32.mrf.mxu0
      %v588 = vpop.f32.mrf.mxu0
      %v589 = vadd.f32 0.0, %v588
      %v590 = vpop.f32.mrf.mxu0
      %591 = vmatprep.mubr.bf16.mxu0 0
      %592 = vmatmul.mubr.bf16.gmra.mxu0 %v527
      %v593 = vpop.f32.mrf.mxu0
      %v594 = vadd.f32 0.0, %v593
      %v595 = vpop.f32.mrf.mxu0
      %v596 = vpop.f32.mrf.mxu0
      %v597 = vadd.f32 0.0, %v596
      %v598 = vpop.f32.mrf.mxu0
      %599 = vmatprep.mubr.bf16.mxu0 0
      %600 = vmatmul.mubr.bf16.gmra.mxu0 %v530
      %v601 = vpop.f32.mrf.mxu0
      %v602 = vadd.f32 0.0, %v601
      %v603 = vpop.f32.mrf.mxu0
      %v604 = vpop.f32.mrf.mxu0
      %v605 = vadd.f32 0.0, %v604
      %v606 = vpop.f32.mrf.mxu0
      %607 = vmatprep.mubr.bf16.mxu0 0
      %608 = vmatmul.mubr.bf16.gmra.mxu0 %v533
      %v609 = vpop.f32.mrf.mxu0
      %v610 = vadd.f32 0.0, %v609
      %v611 = vpop.f32.mrf.mxu0
      %v612 = vpop.f32.mrf.mxu0
      %v613 = vadd.f32 0.0, %v612
      %v614 = vpop.f32.mrf.mxu0
      %615 = vmatprep.mubr.bf16.mxu0 0
      %616 = vmatmul.mubr.bf16.gmra.mxu0 %v536
      %v617 = vpop.f32.mrf.mxu0
      %v618 = vadd.f32 0.0, %v617
      %v619 = vpop.f32.mrf.mxu0
      %v620 = vpop.f32.mrf.mxu0
      %v621 = vadd.f32 0.0, %v620
      %v622 = vpop.f32.mrf.mxu0
      %623 = vmatprep.mubr.bf16.mxu0 0
      %624 = vmatmul.mubr.bf16.gmra.mxu0 %v539
      %v625 = vpop.f32.mrf.mxu0
      %v626 = vadd.f32 0.0, %v625
      %v627 = vpop.f32.mrf.mxu0
      %v628 = vpop.f32.mrf.mxu0
      %v629 = vadd.f32 0.0, %v628
      %v630 = vpop.f32.mrf.mxu0
      %631 = vmatprep.mubr.bf16.mxu0 0
      %632 = vmatmul.mubr.bf16.gmra.mxu0 %v542
      %v633 = vpop.f32.mrf.mxu0
      %v634 = vadd.f32 0.0, %v633
      %v635 = vpop.f32.mrf.mxu0
      %v636 = vpop.f32.mrf.mxu0
      %v637 = vadd.f32 0.0, %v636
      %v638 = vpop.f32.mrf.mxu0
      %639 = vmatprep.mubr.bf16.mxu0 0
      %640 = vmatmul.mubr.bf16.gmra.mxu0 %v545
      %v641 = vpop.f32.mrf.mxu0
      %v642 = vadd.f32 0.0, %v641
      %v643 = vpop.f32.mrf.mxu0
      %v644 = vpop.f32.mrf.mxu0
      %v645 = vadd.f32 0.0, %v644
      %v646 = vpop.f32.mrf.mxu0
      %647 = vdwg.mxu0
      %v649 = vsel %vm317, %v489, 0
      %v652 = vsel %vm317, %v490, 0
      %v655 = vsel %vm317, %v491, 0
      %v658 = vsel %vm317, %v492, 0
      %v661 = vsel %vm317, %v493, 0
      %v664 = vsel %vm317, %v494, 0
      %v667 = vsel %vm317, %v495, 0
      %v670 = vsel %vm317, %v496, 0
      %v673 = vsel %vm547, %v497, 0
      %675 = vmatprep.subr.bf16.mxu0 0
      %676 = vmatpush1.bf16.msra.mxu0 0
      %677 = vmatprep.subr.bf16.mxu0 0
      %678 = vmatpush1.bf16.msra.mxu0 0
      %679 = vmatprep.subr.bf16.mxu0 0
      %680 = vmatpush1.bf16.msra.mxu0 0
      %681 = vmatprep.subr.bf16.mxu0 0
      %682 = vmatpush1.bf16.msra.mxu0 0
      %683 = vmatprep.subr.bf16.mxu0 0
      %684 = vmatpush1.bf16.msra.mxu0 0
      %685 = vmatprep.subr.bf16.mxu0 0
      %686 = vmatpush1.bf16.msra.mxu0 0
      %687 = vmatprep.subr.bf16.mxu0 0
      %688 = vmatpush1.bf16.msra.mxu0 0
      %689 = vmatprep.subr.bf16.mxu0 0
      %690 = vmatpush1.bf16.msra.mxu0 %v673
      %691 = vmatprep.subr.bf16.mxu0 0
      %692 = vmatpush2.bf16.msra.mxu0 0
      %693 = vmatprep.subr.bf16.mxu0 0
      %694 = vmatpush2.bf16.msra.mxu0 0
      %695 = vmatprep.subr.bf16.mxu0 0
      %696 = vmatpush2.bf16.msra.mxu0 0
      %697 = vmatprep.subr.bf16.mxu0 0
      %698 = vmatpush2.bf16.msra.mxu0 0
      %699 = vmatprep.subr.bf16.mxu0 0
      %700 = vmatpush2.bf16.msra.mxu0 0
      %701 = vmatprep.subr.bf16.mxu0 0
      %702 = vmatpush2.bf16.msra.mxu0 0
      %703 = vmatprep.subr.bf16.mxu0 0
      %704 = vmatpush2.bf16.msra.mxu0 0
      %705 = vmatprep.subr.bf16.mxu0 0
      %706 = vmatpush2.bf16.msra.mxu0 0
      %707 = vmatprep.mubr.bf16.mxu0 0
      %708 = vmatmul.mubr.bf16.gmra.mxu0 %v649
      %v709 = vpop.f32.mrf.mxu0
      %v710 = vadd.f32 %v586, %v709
      %v711 = vpop.f32.mrf.mxu0
      %v712 = vpop.f32.mrf.mxu0
      %v713 = vadd.f32 %v589, %v712
      %v714 = vpop.f32.mrf.mxu0
      %715 = vmatprep.mubr.bf16.mxu0 0
      %716 = vmatmul.mubr.bf16.gmra.mxu0 %v652
      %v717 = vpop.f32.mrf.mxu0
      %v718 = vadd.f32 %v594, %v717
      %v719 = vpop.f32.mrf.mxu0
      %v720 = vpop.f32.mrf.mxu0
      %v721 = vadd.f32 %v597, %v720
      %v722 = vpop.f32.mrf.mxu0
      %723 = vmatprep.mubr.bf16.mxu0 0
      %724 = vmatmul.mubr.bf16.gmra.mxu0 %v655
      %v725 = vpop.f32.mrf.mxu0
      %v726 = vadd.f32 %v602, %v725
      %v727 = vpop.f32.mrf.mxu0
      %v728 = vpop.f32.mrf.mxu0
      %v729 = vadd.f32 %v605, %v728
      %v730 = vpop.f32.mrf.mxu0
      %731 = vmatprep.mubr.bf16.mxu0 0
      %732 = vmatmul.mubr.bf16.gmra.mxu0 %v658
      %v733 = vpop.f32.mrf.mxu0
      %v734 = vadd.f32 %v610, %v733
      %v735 = vpop.f32.mrf.mxu0
      %v736 = vpop.f32.mrf.mxu0
      %v737 = vadd.f32 %v613, %v736
      %v738 = vpop.f32.mrf.mxu0
      %739 = vmatprep.mubr.bf16.mxu0 0
      %740 = vmatmul.mubr.bf16.gmra.mxu0 %v661
      %v741 = vpop.f32.mrf.mxu0
      %v742 = vadd.f32 %v618, %v741
      %v743 = vpop.f32.mrf.mxu0
      %v744 = vpop.f32.mrf.mxu0
      %v745 = vadd.f32 %v621, %v744
      %v746 = vpop.f32.mrf.mxu0
      %747 = vmatprep.mubr.bf16.mxu0 0
      %748 = vmatmul.mubr.bf16.gmra.mxu0 %v664
      %v749 = vpop.f32.mrf.mxu0
      %v750 = vadd.f32 %v626, %v749
      %v751 = vpop.f32.mrf.mxu0
      %v752 = vpop.f32.mrf.mxu0
      %v753 = vadd.f32 %v629, %v752
      %v754 = vpop.f32.mrf.mxu0
      %755 = vmatprep.mubr.bf16.mxu0 0
      %756 = vmatmul.mubr.bf16.gmra.mxu0 %v667
      %v757 = vpop.f32.mrf.mxu0
      %v758 = vadd.f32 %v634, %v757
      %v759 = vpop.f32.mrf.mxu0
      %v760 = vpop.f32.mrf.mxu0
      %v761 = vadd.f32 %v637, %v760
      %v762 = vpop.f32.mrf.mxu0
      %763 = vmatprep.mubr.bf16.mxu0 0
      %764 = vmatmul.mubr.bf16.gmra.mxu0 %v670
      %v765 = vpop.f32.mrf.mxu0
      %v766 = vadd.f32 %v642, %v765
      %v767 = vpop.f32.mrf.mxu0
      %v768 = vpop.f32.mrf.mxu0
      %v769 = vadd.f32 %v645, %v768
      %v770 = vpop.f32.mrf.mxu0
      %771 = vdwg.mxu0
      %v772 = vld [vmem:[%s472 + $0x2] sm:$0xff]
      %v773 = vld [vmem:[%s472 + $0xa] sm:$0xff]
      %v774 = vld [vmem:[%s472 + $0x1a] sm:$0xff]
      %v775 = vld [vmem:[%s472 + $0x22] sm:$0xff]
      %v776 = vld [vmem:[%s472 + $0x32] sm:$0xff]
      %v777 = vld [vmem:[%s472 + $0x3a] sm:$0xff]
      %v778 = vld [vmem:[%s472 + $0x4a] sm:$0xff]
      %v779 = vld [vmem:[%s472 + $0x52] sm:$0xff]
      %v780 = vld [vmem:[%s472 + $0x62] sm:$0xff]
      %v781 = vld [vmem:[%s472 + $0x6a] sm:$0xff]
      %v782 = vld [vmem:[%s472 + $0x7a] sm:$0xff]
      %v783 = vld [vmem:[%s472 + $0x82] sm:$0xff]
      %v784 = vld [vmem:[%s472 + $0x92] sm:$0xff]
      %v785 = vld [vmem:[%s472 + $0x9a] sm:$0xff]
      %v786 = vld [vmem:[%s472 + $0xaa] sm:$0xff]
      %v787 = vld [vmem:[%s472 + $0xb2] sm:$0xff]
      %v788 = vpack.c.bf16 %v773, %v772
      %v789 = vpack.c.bf16 %v775, %v774
      %v790 = vpack.c.bf16 %v777, %v776
      %v791 = vpack.c.bf16 %v779, %v778
      %v792 = vpack.c.bf16 %v781, %v780
      %v793 = vpack.c.bf16 %v783, %v782
      %v794 = vpack.c.bf16 %v785, %v784
      %v795 = vpack.c.bf16 %v787, %v786
      %v796 = vld [vmem:[%s1 + $0x8] sm:$0xf]
      %v798 = vsel %vm317, %v788, 0
      %v801 = vsel %vm317, %v789, 0
      %v804 = vsel %vm317, %v790, 0
      %v807 = vsel %vm317, %v791, 0
      %v810 = vsel %vm317, %v792, 0
      %v813 = vsel %vm317, %v793, 0
      %v816 = vsel %vm317, %v794, 0
      %v819 = vsel %vm317, %v795, 0
      %v822 = vsel %vm547, %v796, 0
      %824 = vmatprep.subr.bf16.mxu0 0
      %825 = vmatpush1.bf16.msra.mxu0 0
      %826 = vmatprep.subr.bf16.mxu0 0
      %827 = vmatpush1.bf16.msra.mxu0 0
      %828 = vmatprep.subr.bf16.mxu0 0
      %829 = vmatpush1.bf16.msra.mxu0 0
      %830 = vmatprep.subr.bf16.mxu0 0
      %831 = vmatpush1.bf16.msra.mxu0 0
      %832 = vmatprep.subr.bf16.mxu0 0
      %833 = vmatpush1.bf16.msra.mxu0 0
      %834 = vmatprep.subr.bf16.mxu0 0
      %835 = vmatpush1.bf16.msra.mxu0 0
      %836 = vmatprep.subr.bf16.mxu0 0
      %837 = vmatpush1.bf16.msra.mxu0 0
      %838 = vmatprep.subr.bf16.mxu0 0
      %839 = vmatpush1.bf16.msra.mxu0 %v822
      %840 = vmatprep.subr.bf16.mxu0 0
      %841 = vmatpush2.bf16.msra.mxu0 0
      %842 = vmatprep.subr.bf16.mxu0 0
      %843 = vmatpush2.bf16.msra.mxu0 0
      %844 = vmatprep.subr.bf16.mxu0 0
      %845 = vmatpush2.bf16.msra.mxu0 0
      %846 = vmatprep.subr.bf16.mxu0 0
      %847 = vmatpush2.bf16.msra.mxu0 0
      %848 = vmatprep.subr.bf16.mxu0 0
      %849 = vmatpush2.bf16.msra.mxu0 0
      %850 = vmatprep.subr.bf16.mxu0 0
      %851 = vmatpush2.bf16.msra.mxu0 0
      %852 = vmatprep.subr.bf16.mxu0 0
      %853 = vmatpush2.bf16.msra.mxu0 0
      %854 = vmatprep.subr.bf16.mxu0 0
      %855 = vmatpush2.bf16.msra.mxu0 0
      %856 = vmatprep.mubr.bf16.mxu0 0
      %857 = vmatmul.mubr.bf16.gmra.mxu0 %v798
      %v858 = vpop.f32.mrf.mxu0
      %v859 = vadd.f32 0.0, %v858
      %v860 = vpop.f32.mrf.mxu0
      %v861 = vpop.f32.mrf.mxu0
      %v862 = vadd.f32 0.0, %v861
      %v863 = vpop.f32.mrf.mxu0
      %864 = vmatprep.mubr.bf16.mxu0 0
      %865 = vmatmul.mubr.bf16.gmra.mxu0 %v801
      %v866 = vpop.f32.mrf.mxu0
      %v867 = vadd.f32 0.0, %v866
      %v868 = vpop.f32.mrf.mxu0
      %v869 = vpop.f32.mrf.mxu0
      %v870 = vadd.f32 0.0, %v869
      %v871 = vpop.f32.mrf.mxu0
      %872 = vmatprep.mubr.bf16.mxu0 0
      %873 = vmatmul.mubr.bf16.gmra.mxu0 %v804
      %v874 = vpop.f32.mrf.mxu0
      %v875 = vadd.f32 0.0, %v874
      %v876 = vpop.f32.mrf.mxu0
      %v877 = vpop.f32.mrf.mxu0
      %v878 = vadd.f32 0.0, %v877
      %v879 = vpop.f32.mrf.mxu0
      %880 = vmatprep.mubr.bf16.mxu0 0
      %881 = vmatmul.mubr.bf16.gmra.mxu0 %v807
      %v882 = vpop.f32.mrf.mxu0
      %v883 = vadd.f32 0.0, %v882
      %v884 = vpop.f32.mrf.mxu0
      %v885 = vpop.f32.mrf.mxu0
      %v886 = vadd.f32 0.0, %v885
      %v887 = vpop.f32.mrf.mxu0
      %888 = vmatprep.mubr.bf16.mxu0 0
      %889 = vmatmul.mubr.bf16.gmra.mxu0 %v810
      %v890 = vpop.f32.mrf.mxu0
      %v891 = vadd.f32 0.0, %v890
      %v892 = vpop.f32.mrf.mxu0
      %v893 = vpop.f32.mrf.mxu0
      %v894 = vadd.f32 0.0, %v893
      %v895 = vpop.f32.mrf.mxu0
      %896 = vmatprep.mubr.bf16.mxu0 0
      %897 = vmatmul.mubr.bf16.gmra.mxu0 %v813
      %v898 = vpop.f32.mrf.mxu0
      %v899 = vadd.f32 0.0, %v898
      %v900 = vpop.f32.mrf.mxu0
      %v901 = vpop.f32.mrf.mxu0
      %v902 = vadd.f32 0.0, %v901
      %v903 = vpop.f32.mrf.mxu0
      %904 = vmatprep.mubr.bf16.mxu0 0
      %905 = vmatmul.mubr.bf16.gmra.mxu0 %v816
      %v906 = vpop.f32.mrf.mxu0
      %v907 = vadd.f32 0.0, %v906
      %v908 = vpop.f32.mrf.mxu0
      %v909 = vpop.f32.mrf.mxu0
      %v910 = vadd.f32 0.0, %v909
      %v911 = vpop.f32.mrf.mxu0
      %912 = vmatprep.mubr.bf16.mxu0 0
      %913 = vmatmul.mubr.bf16.gmra.mxu0 %v819
      %v914 = vpop.f32.mrf.mxu0
      %v915 = vadd.f32 0.0, %v914
      %v916 = vpop.f32.mrf.mxu0
      %v917 = vpop.f32.mrf.mxu0
      %v918 = vadd.f32 0.0, %v917
      %v919 = vpop.f32.mrf.mxu0
      %920 = vdwg.mxu0
      %v921 = vadd.f32 %v710, %v859
      %v922 = vadd.f32 %v713, %v862
      %v923 = vadd.f32 %v718, %v867
      %v924 = vadd.f32 %v721, %v870
      %v925 = vadd.f32 %v726, %v875
      %v926 = vadd.f32 %v729, %v878
      %v927 = vadd.f32 %v734, %v883
      %v928 = vadd.f32 %v737, %v886
      %v929 = vadd.f32 %v742, %v891
      %v930 = vadd.f32 %v745, %v894
      %v931 = vadd.f32 %v750, %v899
      %v932 = vadd.f32 %v753, %v902
      %v933 = vadd.f32 %v758, %v907
      %v934 = vadd.f32 %v761, %v910
      %v935 = vadd.f32 %v766, %v915
      %v936 = vadd.f32 %v769, %v918
      %s937 = sadd.s32 %s470, 1
      %s938 = smul.u32 %s937, 24
      %s939 = scalar_lea.vmem [#allocation2], %s938
      %v940 = vld [vmem:[%s939] sm:$0xff]
      %v941 = vld [vmem:[%s939 + $0x8] sm:$0xff]
      %v942 = vld [vmem:[%s939 + $0x18] sm:$0xff]
      %v943 = vld [vmem:[%s939 + $0x20] sm:$0xff]
      %v944 = vld [vmem:[%s939 + $0x30] sm:$0xff]
      %v945 = vld [vmem:[%s939 + $0x38] sm:$0xff]
      %v946 = vld [vmem:[%s939 + $0x48] sm:$0xff]
      %v947 = vld [vmem:[%s939 + $0x50] sm:$0xff]
      %v948 = vld [vmem:[%s939 + $0x60] sm:$0xff]
      %v949 = vld [vmem:[%s939 + $0x68] sm:$0xff]
      %v950 = vld [vmem:[%s939 + $0x78] sm:$0xff]
      %v951 = vld [vmem:[%s939 + $0x80] sm:$0xff]
      %v952 = vld [vmem:[%s939 + $0x90] sm:$0xff]
      %v953 = vld [vmem:[%s939 + $0x98] sm:$0xff]
      %v954 = vld [vmem:[%s939 + $0xa8] sm:$0xff]
      %v955 = vld [vmem:[%s939 + $0xb0] sm:$0xff]
      %v956 = vpack.c.bf16 %v941, %v940
      %v957 = vpack.c.bf16 %v943, %v942
      %v958 = vpack.c.bf16 %v945, %v944
      %v959 = vpack.c.bf16 %v947, %v946
      %v960 = vpack.c.bf16 %v949, %v948
      %v961 = vpack.c.bf16 %v951, %v950
      %v962 = vpack.c.bf16 %v953, %v952
      %v963 = vpack.c.bf16 %v955, %v954
      %v964 = vld [vmem:[%s1 + $0xc] sm:$0xf]
      %v966 = vsel %vm317, %v956, 0
      %v969 = vsel %vm317, %v957, 0
      %v972 = vsel %vm317, %v958, 0
      %v975 = vsel %vm317, %v959, 0
      %v978 = vsel %vm317, %v960, 0
      %v981 = vsel %vm317, %v961, 0
      %v984 = vsel %vm317, %v962, 0
      %v987 = vsel %vm317, %v963, 0
      %v990 = vsel %vm547, %v964, 0
      %992 = vmatprep.subr.bf16.mxu0 0
      %993 = vmatpush1.bf16.msra.mxu0 0
      %994 = vmatprep.subr.bf16.mxu0 0
      %995 = vmatpush1.bf16.msra.mxu0 0
      %996 = vmatprep.subr.bf16.mxu0 0
      %997 = vmatpush1.bf16.msra.mxu0 0
      %998 = vmatprep.subr.bf16.mxu0 0
      %999 = vmatpush1.bf16.msra.mxu0 0
      %1000 = vmatprep.subr.bf16.mxu0 0
      %1001 = vmatpush1.bf16.msra.mxu0 0
      %1002 = vmatprep.subr.bf16.mxu0 0
      %1003 = vmatpush1.bf16.msra.mxu0 0
      %1004 = vmatprep.subr.bf16.mxu0 0
      %1005 = vmatpush1.bf16.msra.mxu0 0
      %1006 = vmatprep.subr.bf16.mxu0 0
      %1007 = vmatpush1.bf16.msra.mxu0 %v990
      %1008 = vmatprep.subr.bf16.mxu0 0
      %1009 = vmatpush2.bf16.msra.mxu0 0
      %1010 = vmatprep.subr.bf16.mxu0 0
      %1011 = vmatpush2.bf16.msra.mxu0 0
      %1012 = vmatprep.subr.bf16.mxu0 0
      %1013 = vmatpush2.bf16.msra.mxu0 0
      %1014 = vmatprep.subr.bf16.mxu0 0
      %1015 = vmatpush2.bf16.msra.mxu0 0
      %1016 = vmatprep.subr.bf16.mxu0 0
      %1017 = vmatpush2.bf16.msra.mxu0 0
      %1018 = vmatprep.subr.bf16.mxu0 0
      %1019 = vmatpush2.bf16.msra.mxu0 0
      %1020 = vmatprep.subr.bf16.mxu0 0
      %1021 = vmatpush2.bf16.msra.mxu0 0
      %1022 = vmatprep.subr.bf16.mxu0 0
      %1023 = vmatpush2.bf16.msra.mxu0 0
      %1024 = vmatprep.mubr.bf16.mxu0 0
      %1025 = vmatmul.mubr.bf16.gmra.mxu0 %v966
      %v1026 = vpop.f32.mrf.mxu0
      %v1027 = vadd.f32 0.0, %v1026
      %v1028 = vpop.f32.mrf.mxu0
      %v1029 = vpop.f32.mrf.mxu0
      %v1030 = vadd.f32 0.0, %v1029
      %v1031 = vpop.f32.mrf.mxu0
      %1032 = vmatprep.mubr.bf16.mxu0 0
      %1033 = vmatmul.mubr.bf16.gmra.mxu0 %v969
      %v1034 = vpop.f32.mrf.mxu0
      %v1035 = vadd.f32 0.0, %v1034
      %v1036 = vpop.f32.mrf.mxu0
      %v1037 = vpop.f32.mrf.mxu0
      %v1038 = vadd.f32 0.0, %v1037
      %v1039 = vpop.f32.mrf.mxu0
      %1040 = vmatprep.mubr.bf16.mxu0 0
      %1041 = vmatmul.mubr.bf16.gmra.mxu0 %v972
      %v1042 = vpop.f32.mrf.mxu0
      %v1043 = vadd.f32 0.0, %v1042
      %v1044 = vpop.f32.mrf.mxu0
      %v1045 = vpop.f32.mrf.mxu0
      %v1046 = vadd.f32 0.0, %v1045
      %v1047 = vpop.f32.mrf.mxu0
      %1048 = vmatprep.mubr.bf16.mxu0 0
      %1049 = vmatmul.mubr.bf16.gmra.mxu0 %v975
      %v1050 = vpop.f32.mrf.mxu0
      %v1051 = vadd.f32 0.0, %v1050
      %v1052 = vpop.f32.mrf.mxu0
      %v1053 = vpop.f32.mrf.mxu0
      %v1054 = vadd.f32 0.0, %v1053
      %v1055 = vpop.f32.mrf.mxu0
      %1056 = vmatprep.mubr.bf16.mxu0 0
      %1057 = vmatmul.mubr.bf16.gmra.mxu0 %v978
      %v1058 = vpop.f32.mrf.mxu0
      %v1059 = vadd.f32 0.0, %v1058
      %v1060 = vpop.f32.mrf.mxu0
      %v1061 = vpop.f32.mrf.mxu0
      %v1062 = vadd.f32 0.0, %v1061
      %v1063 = vpop.f32.mrf.mxu0
      %1064 = vmatprep.mubr.bf16.mxu0 0
      %1065 = vmatmul.mubr.bf16.gmra.mxu0 %v981
      %v1066 = vpop.f32.mrf.mxu0
      %v1067 = vadd.f32 0.0, %v1066
      %v1068 = vpop.f32.mrf.mxu0
      %v1069 = vpop.f32.mrf.mxu0
      %v1070 = vadd.f32 0.0, %v1069
      %v1071 = vpop.f32.mrf.mxu0
      %1072 = vmatprep.mubr.bf16.mxu0 0
      %1073 = vmatmul.mubr.bf16.gmra.mxu0 %v984
      %v1074 = vpop.f32.mrf.mxu0
      %v1075 = vadd.f32 0.0, %v1074
      %v1076 = vpop.f32.mrf.mxu0
      %v1077 = vpop.f32.mrf.mxu0
      %v1078 = vadd.f32 0.0, %v1077
      %v1079 = vpop.f32.mrf.mxu0
      %1080 = vmatprep.mubr.bf16.mxu0 0
      %1081 = vmatmul.mubr.bf16.gmra.mxu0 %v987
      %v1082 = vpop.f32.mrf.mxu0
      %v1083 = vadd.f32 0.0, %v1082
      %v1084 = vpop.f32.mrf.mxu0
      %v1085 = vpop.f32.mrf.mxu0
      %v1086 = vadd.f32 0.0, %v1085
      %v1087 = vpop.f32.mrf.mxu0
      %1088 = vdwg.mxu0
      %v1089 = vadd.f32 %v921, %v1027
      %v1090 = vadd.f32 %v922, %v1030
      %v1091 = vadd.f32 %v923, %v1035
      %v1092 = vadd.f32 %v924, %v1038
      %v1093 = vadd.f32 %v925, %v1043
      %v1094 = vadd.f32 %v926, %v1046
      %v1095 = vadd.f32 %v927, %v1051
      %v1096 = vadd.f32 %v928, %v1054
      %v1097 = vadd.f32 %v929, %v1059
      %v1098 = vadd.f32 %v930, %v1062
      %v1099 = vadd.f32 %v931, %v1067
      %v1100 = vadd.f32 %v932, %v1070
      %v1101 = vadd.f32 %v933, %v1075
      %v1102 = vadd.f32 %v934, %v1078
      %v1103 = vadd.f32 %v935, %v1083
      %v1104 = vadd.f32 %v936, %v1086
      %v1105 = vld [vmem:[%s939 + $0x1] sm:$0xff]
      %v1106 = vld [vmem:[%s939 + $0x9] sm:$0xff]
      %v1107 = vld [vmem:[%s939 + $0x19] sm:$0xff]
      %v1108 = vld [vmem:[%s939 + $0x21] sm:$0xff]
      %v1109 = vld [vmem:[%s939 + $0x31] sm:$0xff]
      %v1110 = vld [vmem:[%s939 + $0x39] sm:$0xff]
      %v1111 = vld [vmem:[%s939 + $0x49] sm:$0xff]
      %v1112 = vld [vmem:[%s939 + $0x51] sm:$0xff]
      %v1113 = vld [vmem:[%s939 + $0x61] sm:$0xff]
      %v1114 = vld [vmem:[%s939 + $0x69] sm:$0xff]
      %v1115 = vld [vmem:[%s939 + $0x79] sm:$0xff]
      %v1116 = vld [vmem:[%s939 + $0x81] sm:$0xff]
      %v1117 = vld [vmem:[%s939 + $0x91] sm:$0xff]
      %v1118 = vld [vmem:[%s939 + $0x99] sm:$0xff]
      %v1119 = vld [vmem:[%s939 + $0xa9] sm:$0xff]
      %v1120 = vld [vmem:[%s939 + $0xb1] sm:$0xff]
      %v1121 = vpack.c.bf16 %v1106, %v1105
      %v1122 = vpack.c.bf16 %v1108, %v1107
      %v1123 = vpack.c.bf16 %v1110, %v1109
      %v1124 = vpack.c.bf16 %v1112, %v1111
      %v1125 = vpack.c.bf16 %v1114, %v1113
      %v1126 = vpack.c.bf16 %v1116, %v1115
      %v1127 = vpack.c.bf16 %v1118, %v1117
      %v1128 = vpack.c.bf16 %v1120, %v1119
      %v1129 = vld [vmem:[%s1 + $0x10] sm:$0xf]
      %v1131 = vsel %vm317, %v1121, 0
      %v1134 = vsel %vm317, %v1122, 0
      %v1137 = vsel %vm317, %v1123, 0
      %v1140 = vsel %vm317, %v1124, 0
      %v1143 = vsel %vm317, %v1125, 0
      %v1146 = vsel %vm317, %v1126, 0
      %v1149 = vsel %vm317, %v1127, 0
      %v1152 = vsel %vm317, %v1128, 0
      %v1155 = vsel %vm547, %v1129, 0
      %1157 = vmatprep.subr.bf16.mxu0 0
      %1158 = vmatpush1.bf16.msra.mxu0 0
      %1159 = vmatprep.subr.bf16.mxu0 0
      %1160 = vmatpush1.bf16.msra.mxu0 0
      %1161 = vmatprep.subr.bf16.mxu0 0
      %1162 = vmatpush1.bf16.msra.mxu0 0
      %1163 = vmatprep.subr.bf16.mxu0 0
      %1164 = vmatpush1.bf16.msra.mxu0 0
      %1165 = vmatprep.subr.bf16.mxu0 0
      %1166 = vmatpush1.bf16.msra.mxu0 0
      %1167 = vmatprep.subr.bf16.mxu0 0
      %1168 = vmatpush1.bf16.msra.mxu0 0
      %1169 = vmatprep.subr.bf16.mxu0 0
      %1170 = vmatpush1.bf16.msra.mxu0 0
      %1171 = vmatprep.subr.bf16.mxu0 0
      %1172 = vmatpush1.bf16.msra.mxu0 %v1155
      %1173 = vmatprep.subr.bf16.mxu0 0
      %1174 = vmatpush2.bf16.msra.mxu0 0
      %1175 = vmatprep.subr.bf16.mxu0 0
      %1176 = vmatpush2.bf16.msra.mxu0 0
      %1177 = vmatprep.subr.bf16.mxu0 0
      %1178 = vmatpush2.bf16.msra.mxu0 0
      %1179 = vmatprep.subr.bf16.mxu0 0
      %1180 = vmatpush2.bf16.msra.mxu0 0
      %1181 = vmatprep.subr.bf16.mxu0 0
      %1182 = vmatpush2.bf16.msra.mxu0 0
      %1183 = vmatprep.subr.bf16.mxu0 0
      %1184 = vmatpush2.bf16.msra.mxu0 0
      %1185 = vmatprep.subr.bf16.mxu0 0
      %1186 = vmatpush2.bf16.msra.mxu0 0
      %1187 = vmatprep.subr.bf16.mxu0 0
      %1188 = vmatpush2.bf16.msra.mxu0 0
      %1189 = vmatprep.mubr.bf16.mxu0 0
      %1190 = vmatmul.mubr.bf16.gmra.mxu0 %v1131
      %v1191 = vpop.f32.mrf.mxu0
      %v1192 = vadd.f32 0.0, %v1191
      %v1193 = vpop.f32.mrf.mxu0
      %v1194 = vpop.f32.mrf.mxu0
      %v1195 = vadd.f32 0.0, %v1194
      %v1196 = vpop.f32.mrf.mxu0
      %1197 = vmatprep.mubr.bf16.mxu0 0
      %1198 = vmatmul.mubr.bf16.gmra.mxu0 %v1134
      %v1199 = vpop.f32.mrf.mxu0
      %v1200 = vadd.f32 0.0, %v1199
      %v1201 = vpop.f32.mrf.mxu0
      %v1202 = vpop.f32.mrf.mxu0
      %v1203 = vadd.f32 0.0, %v1202
      %v1204 = vpop.f32.mrf.mxu0
      %1205 = vmatprep.mubr.bf16.mxu0 0
      %1206 = vmatmul.mubr.bf16.gmra.mxu0 %v1137
      %v1207 = vpop.f32.mrf.mxu0
      %v1208 = vadd.f32 0.0, %v1207
      %v1209 = vpop.f32.mrf.mxu0
      %v1210 = vpop.f32.mrf.mxu0
      %v1211 = vadd.f32 0.0, %v1210
      %v1212 = vpop.f32.mrf.mxu0
      %1213 = vmatprep.mubr.bf16.mxu0 0
      %1214 = vmatmul.mubr.bf16.gmra.mxu0 %v1140
      %v1215 = vpop.f32.mrf.mxu0
      %v1216 = vadd.f32 0.0, %v1215
      %v1217 = vpop.f32.mrf.mxu0
      %v1218 = vpop.f32.mrf.mxu0
      %v1219 = vadd.f32 0.0, %v1218
      %v1220 = vpop.f32.mrf.mxu0
      %1221 = vmatprep.mubr.bf16.mxu0 0
      %1222 = vmatmul.mubr.bf16.gmra.mxu0 %v1143
      %v1223 = vpop.f32.mrf.mxu0
      %v1224 = vadd.f32 0.0, %v1223
      %v1225 = vpop.f32.mrf.mxu0
      %v1226 = vpop.f32.mrf.mxu0
      %v1227 = vadd.f32 0.0, %v1226
      %v1228 = vpop.f32.mrf.mxu0
      %1229 = vmatprep.mubr.bf16.mxu0 0
      %1230 = vmatmul.mubr.bf16.gmra.mxu0 %v1146
      %v1231 = vpop.f32.mrf.mxu0
      %v1232 = vadd.f32 0.0, %v1231
      %v1233 = vpop.f32.mrf.mxu0
      %v1234 = vpop.f32.mrf.mxu0
      %v1235 = vadd.f32 0.0, %v1234
      %v1236 = vpop.f32.mrf.mxu0
      %1237 = vmatprep.mubr.bf16.mxu0 0
      %1238 = vmatmul.mubr.bf16.gmra.mxu0 %v1149
      %v1239 = vpop.f32.mrf.mxu0
      %v1240 = vadd.f32 0.0, %v1239
      %v1241 = vpop.f32.mrf.mxu0
      %v1242 = vpop.f32.mrf.mxu0
      %v1243 = vadd.f32 0.0, %v1242
      %v1244 = vpop.f32.mrf.mxu0
      %1245 = vmatprep.mubr.bf16.mxu0 0
      %1246 = vmatmul.mubr.bf16.gmra.mxu0 %v1152
      %v1247 = vpop.f32.mrf.mxu0
      %v1248 = vadd.f32 0.0, %v1247
      %v1249 = vpop.f32.mrf.mxu0
      %v1250 = vpop.f32.mrf.mxu0
      %v1251 = vadd.f32 0.0, %v1250
      %v1252 = vpop.f32.mrf.mxu0
      %1253 = vdwg.mxu0
      %v1254 = vadd.f32 %v1089, %v1192
      %v1255 = vadd.f32 %v1090, %v1195
      %v1256 = vadd.f32 %v1091, %v1200
      %v1257 = vadd.f32 %v1092, %v1203
      %v1258 = vadd.f32 %v1093, %v1208
      %v1259 = vadd.f32 %v1094, %v1211
      %v1260 = vadd.f32 %v1095, %v1216
      %v1261 = vadd.f32 %v1096, %v1219
      %v1262 = vadd.f32 %v1097, %v1224
      %v1263 = vadd.f32 %v1098, %v1227
      %v1264 = vadd.f32 %v1099, %v1232
      %v1265 = vadd.f32 %v1100, %v1235
      %v1266 = vadd.f32 %v1101, %v1240
      %v1267 = vadd.f32 %v1102, %v1243
      %v1268 = vadd.f32 %v1103, %v1248
      %v1269 = vadd.f32 %v1104, %v1251
      %v1270 = vld [vmem:[%s939 + $0x2] sm:$0xff]
      %v1271 = vld [vmem:[%s939 + $0xa] sm:$0xff]
      %v1272 = vld [vmem:[%s939 + $0x1a] sm:$0xff]
      %v1273 = vld [vmem:[%s939 + $0x22] sm:$0xff]
      %v1274 = vld [vmem:[%s939 + $0x32] sm:$0xff]
      %v1275 = vld [vmem:[%s939 + $0x3a] sm:$0xff]
      %v1276 = vld [vmem:[%s939 + $0x4a] sm:$0xff]
      %v1277 = vld [vmem:[%s939 + $0x52] sm:$0xff]
      %v1278 = vld [vmem:[%s939 + $0x62] sm:$0xff]
      %v1279 = vld [vmem:[%s939 + $0x6a] sm:$0xff]
      %v1280 = vld [vmem:[%s939 + $0x7a] sm:$0xff]
      %v1281 = vld [vmem:[%s939 + $0x82] sm:$0xff]
      %v1282 = vld [vmem:[%s939 + $0x92] sm:$0xff]
      %v1283 = vld [vmem:[%s939 + $0x9a] sm:$0xff]
      %v1284 = vld [vmem:[%s939 + $0xaa] sm:$0xff]
      %v1285 = vld [vmem:[%s939 + $0xb2] sm:$0xff]
      %v1286 = vpack.c.bf16 %v1271, %v1270
      %v1287 = vpack.c.bf16 %v1273, %v1272
      %v1288 = vpack.c.bf16 %v1275, %v1274
      %v1289 = vpack.c.bf16 %v1277, %v1276
      %v1290 = vpack.c.bf16 %v1279, %v1278
      %v1291 = vpack.c.bf16 %v1281, %v1280
      %v1292 = vpack.c.bf16 %v1283, %v1282
      %v1293 = vpack.c.bf16 %v1285, %v1284
      %v1294 = vld [vmem:[%s1 + $0x14] sm:$0xf]
      %v1296 = vsel %vm317, %v1286, 0
      %v1299 = vsel %vm317, %v1287, 0
      %v1302 = vsel %vm317, %v1288, 0
      %v1305 = vsel %vm317, %v1289, 0
      %v1308 = vsel %vm317, %v1290, 0
      %v1311 = vsel %vm317, %v1291, 0
      %v1314 = vsel %vm317, %v1292, 0
      %v1317 = vsel %vm317, %v1293, 0
      %v1320 = vsel %vm547, %v1294, 0
      %1322 = vmatprep.subr.bf16.mxu0 0
      %1323 = vmatpush1.bf16.msra.mxu0 0
      %1324 = vmatprep.subr.bf16.mxu0 0
      %1325 = vmatpush1.bf16.msra.mxu0 0
      %1326 = vmatprep.subr.bf16.mxu0 0
      %1327 = vmatpush1.bf16.msra.mxu0 0
      %1328 = vmatprep.subr.bf16.mxu0 0
      %1329 = vmatpush1.bf16.msra.mxu0 0
      %1330 = vmatprep.subr.bf16.mxu0 0
      %1331 = vmatpush1.bf16.msra.mxu0 0
      %1332 = vmatprep.subr.bf16.mxu0 0
      %1333 = vmatpush1.bf16.msra.mxu0 0
      %1334 = vmatprep.subr.bf16.mxu0 0
      %1335 = vmatpush1.bf16.msra.mxu0 0
      %1336 = vmatprep.subr.bf16.mxu0 0
      %1337 = vmatpush1.bf16.msra.mxu0 %v1320
      %1338 = vmatprep.subr.bf16.mxu0 0
      %1339 = vmatpush2.bf16.msra.mxu0 0
      %1340 = vmatprep.subr.bf16.mxu0 0
      %1341 = vmatpush2.bf16.msra.mxu0 0
      %1342 = vmatprep.subr.bf16.mxu0 0
      %1343 = vmatpush2.bf16.msra.mxu0 0
      %1344 = vmatprep.subr.bf16.mxu0 0
      %1345 = vmatpush2.bf16.msra.mxu0 0
      %1346 = vmatprep.subr.bf16.mxu0 0
      %1347 = vmatpush2.bf16.msra.mxu0 0
      %1348 = vmatprep.subr.bf16.mxu0 0
      %1349 = vmatpush2.bf16.msra.mxu0 0
      %1350 = vmatprep.subr.bf16.mxu0 0
      %1351 = vmatpush2.bf16.msra.mxu0 0
      %1352 = vmatprep.subr.bf16.mxu0 0
      %1353 = vmatpush2.bf16.msra.mxu0 0
      %1354 = vmatprep.mubr.bf16.mxu0 0
      %1355 = vmatmul.mubr.bf16.gmra.mxu0 %v1296
      %v1356 = vpop.f32.mrf.mxu0
      %v1357 = vadd.f32 0.0, %v1356
      %v1358 = vpop.f32.mrf.mxu0
      %v1359 = vpop.f32.mrf.mxu0
      %v1360 = vadd.f32 0.0, %v1359
      %v1361 = vpop.f32.mrf.mxu0
      %1362 = vmatprep.mubr.bf16.mxu0 0
      %1363 = vmatmul.mubr.bf16.gmra.mxu0 %v1299
      %v1364 = vpop.f32.mrf.mxu0
      %v1365 = vadd.f32 0.0, %v1364
      %v1366 = vpop.f32.mrf.mxu0
      %v1367 = vpop.f32.mrf.mxu0
      %v1368 = vadd.f32 0.0, %v1367
      %v1369 = vpop.f32.mrf.mxu0
      %1370 = vmatprep.mubr.bf16.mxu0 0
      %1371 = vmatmul.mubr.bf16.gmra.mxu0 %v1302
      %v1372 = vpop.f32.mrf.mxu0
      %v1373 = vadd.f32 0.0, %v1372
      %v1374 = vpop.f32.mrf.mxu0
      %v1375 = vpop.f32.mrf.mxu0
      %v1376 = vadd.f32 0.0, %v1375
      %v1377 = vpop.f32.mrf.mxu0
      %1378 = vmatprep.mubr.bf16.mxu0 0
      %1379 = vmatmul.mubr.bf16.gmra.mxu0 %v1305
      %v1380 = vpop.f32.mrf.mxu0
      %v1381 = vadd.f32 0.0, %v1380
      %v1382 = vpop.f32.mrf.mxu0
      %v1383 = vpop.f32.mrf.mxu0
      %v1384 = vadd.f32 0.0, %v1383
      %v1385 = vpop.f32.mrf.mxu0
      %1386 = vmatprep.mubr.bf16.mxu0 0
      %1387 = vmatmul.mubr.bf16.gmra.mxu0 %v1308
      %v1388 = vpop.f32.mrf.mxu0
      %v1389 = vadd.f32 0.0, %v1388
      %v1390 = vpop.f32.mrf.mxu0
      %v1391 = vpop.f32.mrf.mxu0
      %v1392 = vadd.f32 0.0, %v1391
      %v1393 = vpop.f32.mrf.mxu0
      %1394 = vmatprep.mubr.bf16.mxu0 0
      %1395 = vmatmul.mubr.bf16.gmra.mxu0 %v1311
      %v1396 = vpop.f32.mrf.mxu0
      %v1397 = vadd.f32 0.0, %v1396
      %v1398 = vpop.f32.mrf.mxu0
      %v1399 = vpop.f32.mrf.mxu0
      %v1400 = vadd.f32 0.0, %v1399
      %v1401 = vpop.f32.mrf.mxu0
      %1402 = vmatprep.mubr.bf16.mxu0 0
      %1403 = vmatmul.mubr.bf16.gmra.mxu0 %v1314
      %v1404 = vpop.f32.mrf.mxu0
      %v1405 = vadd.f32 0.0, %v1404
      %v1406 = vpop.f32.mrf.mxu0
      %v1407 = vpop.f32.mrf.mxu0
      %v1408 = vadd.f32 0.0, %v1407
      %v1409 = vpop.f32.mrf.mxu0
      %1410 = vmatprep.mubr.bf16.mxu0 0
      %1411 = vmatmul.mubr.bf16.gmra.mxu0 %v1317
      %v1412 = vpop.f32.mrf.mxu0
      %v1413 = vadd.f32 0.0, %v1412
      %v1414 = vpop.f32.mrf.mxu0
      %v1415 = vpop.f32.mrf.mxu0
      %v1416 = vadd.f32 0.0, %v1415
      %v1417 = vpop.f32.mrf.mxu0
      %1418 = vdwg.mxu0
      %v1419 = vadd.f32 %v1254, %v1357
      %v1420 = vadd.f32 %v1255, %v1360
      %v1421 = vadd.f32 %v1256, %v1365
      %v1422 = vadd.f32 %v1257, %v1368
      %v1423 = vadd.f32 %v1258, %v1373
      %v1424 = vadd.f32 %v1259, %v1376
      %v1425 = vadd.f32 %v1260, %v1381
      %v1426 = vadd.f32 %v1261, %v1384
      %v1427 = vadd.f32 %v1262, %v1389
      %v1428 = vadd.f32 %v1263, %v1392
      %v1429 = vadd.f32 %v1264, %v1397
      %v1430 = vadd.f32 %v1265, %v1400
      %v1431 = vadd.f32 %v1266, %v1405
      %v1432 = vadd.f32 %v1267, %v1408
      %v1433 = vadd.f32 %v1268, %v1413
      %v1434 = vadd.f32 %v1269, %v1416
      %s1435 = sadd.s32 %s470, 2
      %s1436 = smul.u32 %s1435, 24
      %s1437 = scalar_lea.vmem [#allocation2], %s1436
      %v1438 = vld [vmem:[%s1437] sm:$0xff]
      %v1439 = vld [vmem:[%s1437 + $0x8] sm:$0xff]
      %v1440 = vld [vmem:[%s1437 + $0x18] sm:$0xff]
      %v1441 = vld [vmem:[%s1437 + $0x20] sm:$0xff]
      %v1442 = vld [vmem:[%s1437 + $0x30] sm:$0xff]
      %v1443 = vld [vmem:[%s1437 + $0x38] sm:$0xff]
      %v1444 = vld [vmem:[%s1437 + $0x48] sm:$0xff]
      %v1445 = vld [vmem:[%s1437 + $0x50] sm:$0xff]
      %v1446 = vld [vmem:[%s1437 + $0x60] sm:$0xff]
      %v1447 = vld [vmem:[%s1437 + $0x68] sm:$0xff]
      %v1448 = vld [vmem:[%s1437 + $0x78] sm:$0xff]
      %v1449 = vld [vmem:[%s1437 + $0x80] sm:$0xff]
      %v1450 = vld [vmem:[%s1437 + $0x90] sm:$0xff]
      %v1451 = vld [vmem:[%s1437 + $0x98] sm:$0xff]
      %v1452 = vld [vmem:[%s1437 + $0xa8] sm:$0xff]
      %v1453 = vld [vmem:[%s1437 + $0xb0] sm:$0xff]
      %v1454 = vpack.c.bf16 %v1439, %v1438
      %v1455 = vpack.c.bf16 %v1441, %v1440
      %v1456 = vpack.c.bf16 %v1443, %v1442
      %v1457 = vpack.c.bf16 %v1445, %v1444
      %v1458 = vpack.c.bf16 %v1447, %v1446
      %v1459 = vpack.c.bf16 %v1449, %v1448
      %v1460 = vpack.c.bf16 %v1451, %v1450
      %v1461 = vpack.c.bf16 %v1453, %v1452
      %v1462 = vld [vmem:[%s1 + $0x18] sm:$0xf]
      %v1464 = vsel %vm317, %v1454, 0
      %v1467 = vsel %vm317, %v1455, 0
      %v1470 = vsel %vm317, %v1456, 0
      %v1473 = vsel %vm317, %v1457, 0
      %v1476 = vsel %vm317, %v1458, 0
      %v1479 = vsel %vm317, %v1459, 0
      %v1482 = vsel %vm317, %v1460, 0
      %v1485 = vsel %vm317, %v1461, 0
      %v1488 = vsel %vm547, %v1462, 0
      %1490 = vmatprep.subr.bf16.mxu0 0
      %1491 = vmatpush1.bf16.msra.mxu0 0
      %1492 = vmatprep.subr.bf16.mxu0 0
      %1493 = vmatpush1.bf16.msra.mxu0 0
      %1494 = vmatprep.subr.bf16.mxu0 0
      %1495 = vmatpush1.bf16.msra.mxu0 0
      %1496 = vmatprep.subr.bf16.mxu0 0
      %1497 = vmatpush1.bf16.msra.mxu0 0
      %1498 = vmatprep.subr.bf16.mxu0 0
      %1499 = vmatpush1.bf16.msra.mxu0 0
      %1500 = vmatprep.subr.bf16.mxu0 0
      %1501 = vmatpush1.bf16.msra.mxu0 0
      %1502 = vmatprep.subr.bf16.mxu0 0
      %1503 = vmatpush1.bf16.msra.mxu0 0
      %1504 = vmatprep.subr.bf16.mxu0 0
      %1505 = vmatpush1.bf16.msra.mxu0 %v1488
      %1506 = vmatprep.subr.bf16.mxu0 0
      %1507 = vmatpush2.bf16.msra.mxu0 0
      %1508 = vmatprep.subr.bf16.mxu0 0
      %1509 = vmatpush2.bf16.msra.mxu0 0
      %1510 = vmatprep.subr.bf16.mxu0 0
      %1511 = vmatpush2.bf16.msra.mxu0 0
      %1512 = vmatprep.subr.bf16.mxu0 0
      %1513 = vmatpush2.bf16.msra.mxu0 0
      %1514 = vmatprep.subr.bf16.mxu0 0
      %1515 = vmatpush2.bf16.msra.mxu0 0
      %1516 = vmatprep.subr.bf16.mxu0 0
      %1517 = vmatpush2.bf16.msra.mxu0 0
      %1518 = vmatprep.subr.bf16.mxu0 0
      %1519 = vmatpush2.bf16.msra.mxu0 0
      %1520 = vmatprep.subr.bf16.mxu0 0
      %1521 = vmatpush2.bf16.msra.mxu0 0
      %1522 = vmatprep.mubr.bf16.mxu0 0
      %1523 = vmatmul.mubr.bf16.gmra.mxu0 %v1464
      %v1524 = vpop.f32.mrf.mxu0
      %v1525 = vadd.f32 0.0, %v1524
      %v1526 = vpop.f32.mrf.mxu0
      %v1527 = vpop.f32.mrf.mxu0
      %v1528 = vadd.f32 0.0, %v1527
      %v1529 = vpop.f32.mrf.mxu0
      %1530 = vmatprep.mubr.bf16.mxu0 0
      %1531 = vmatmul.mubr.bf16.gmra.mxu0 %v1467
      %v1532 = vpop.f32.mrf.mxu0
      %v1533 = vadd.f32 0.0, %v1532
      %v1534 = vpop.f32.mrf.mxu0
      %v1535 = vpop.f32.mrf.mxu0
      %v1536 = vadd.f32 0.0, %v1535
      %v1537 = vpop.f32.mrf.mxu0
      %1538 = vmatprep.mubr.bf16.mxu0 0
      %1539 = vmatmul.mubr.bf16.gmra.mxu0 %v1470
      %v1540 = vpop.f32.mrf.mxu0
      %v1541 = vadd.f32 0.0, %v1540
      %v1542 = vpop.f32.mrf.mxu0
      %v1543 = vpop.f32.mrf.mxu0
      %v1544 = vadd.f32 0.0, %v1543
      %v1545 = vpop.f32.mrf.mxu0
      %1546 = vmatprep.mubr.bf16.mxu0 0
      %1547 = vmatmul.mubr.bf16.gmra.mxu0 %v1473
      %v1548 = vpop.f32.mrf.mxu0
      %v1549 = vadd.f32 0.0, %v1548
      %v1550 = vpop.f32.mrf.mxu0
      %v1551 = vpop.f32.mrf.mxu0
      %v1552 = vadd.f32 0.0, %v1551
      %v1553 = vpop.f32.mrf.mxu0
      %1554 = vmatprep.mubr.bf16.mxu0 0
      %1555 = vmatmul.mubr.bf16.gmra.mxu0 %v1476
      %v1556 = vpop.f32.mrf.mxu0
      %v1557 = vadd.f32 0.0, %v1556
      %v1558 = vpop.f32.mrf.mxu0
      %v1559 = vpop.f32.mrf.mxu0
      %v1560 = vadd.f32 0.0, %v1559
      %v1561 = vpop.f32.mrf.mxu0
      %1562 = vmatprep.mubr.bf16.mxu0 0
      %1563 = vmatmul.mubr.bf16.gmra.mxu0 %v1479
      %v1564 = vpop.f32.mrf.mxu0
      %v1565 = vadd.f32 0.0, %v1564
      %v1566 = vpop.f32.mrf.mxu0
      %v1567 = vpop.f32.mrf.mxu0
      %v1568 = vadd.f32 0.0, %v1567
      %v1569 = vpop.f32.mrf.mxu0
      %1570 = vmatprep.mubr.bf16.mxu0 0
      %1571 = vmatmul.mubr.bf16.gmra.mxu0 %v1482
      %v1572 = vpop.f32.mrf.mxu0
      %v1573 = vadd.f32 0.0, %v1572
      %v1574 = vpop.f32.mrf.mxu0
      %v1575 = vpop.f32.mrf.mxu0
      %v1576 = vadd.f32 0.0, %v1575
      %v1577 = vpop.f32.mrf.mxu0
      %1578 = vmatprep.mubr.bf16.mxu0 0
      %1579 = vmatmul.mubr.bf16.gmra.mxu0 %v1485
      %v1580 = vpop.f32.mrf.mxu0
      %v1581 = vadd.f32 0.0, %v1580
      %v1582 = vpop.f32.mrf.mxu0
      %v1583 = vpop.f32.mrf.mxu0
      %v1584 = vadd.f32 0.0, %v1583
      %v1585 = vpop.f32.mrf.mxu0
      %1586 = vdwg.mxu0
      %v1587 = vadd.f32 %v1419, %v1525
      %v1588 = vadd.f32 %v1420, %v1528
      %v1589 = vadd.f32 %v1421, %v1533
      %v1590 = vadd.f32 %v1422, %v1536
      %v1591 = vadd.f32 %v1423, %v1541
      %v1592 = vadd.f32 %v1424, %v1544
      %v1593 = vadd.f32 %v1425, %v1549
      %v1594 = vadd.f32 %v1426, %v1552
      %v1595 = vadd.f32 %v1427, %v1557
      %v1596 = vadd.f32 %v1428, %v1560
      %v1597 = vadd.f32 %v1429, %v1565
      %v1598 = vadd.f32 %v1430, %v1568
      %v1599 = vadd.f32 %v1431, %v1573
      %v1600 = vadd.f32 %v1432, %v1576
      %v1601 = vadd.f32 %v1433, %v1581
      %v1602 = vadd.f32 %v1434, %v1584
      %v1603 = vld [vmem:[%s1437 + $0x1] sm:$0xff]
      %v1604 = vld [vmem:[%s1437 + $0x9] sm:$0xff]
      %v1605 = vld [vmem:[%s1437 + $0x19] sm:$0xff]
      %v1606 = vld [vmem:[%s1437 + $0x21] sm:$0xff]
      %v1607 = vld [vmem:[%s1437 + $0x31] sm:$0xff]
      %v1608 = vld [vmem:[%s1437 + $0x39] sm:$0xff]
      %v1609 = vld [vmem:[%s1437 + $0x49] sm:$0xff]
      %v1610 = vld [vmem:[%s1437 + $0x51] sm:$0xff]
      %v1611 = vld [vmem:[%s1437 + $0x61] sm:$0xff]
      %v1612 = vld [vmem:[%s1437 + $0x69] sm:$0xff]
      %v1613 = vld [vmem:[%s1437 + $0x79] sm:$0xff]
      %v1614 = vld [vmem:[%s1437 + $0x81] sm:$0xff]
      %v1615 = vld [vmem:[%s1437 + $0x91] sm:$0xff]
      %v1616 = vld [vmem:[%s1437 + $0x99] sm:$0xff]
      %v1617 = vld [vmem:[%s1437 + $0xa9] sm:$0xff]
      %v1618 = vld [vmem:[%s1437 + $0xb1] sm:$0xff]
      %v1619 = vpack.c.bf16 %v1604, %v1603
      %v1620 = vpack.c.bf16 %v1606, %v1605
      %v1621 = vpack.c.bf16 %v1608, %v1607
      %v1622 = vpack.c.bf16 %v1610, %v1609
      %v1623 = vpack.c.bf16 %v1612, %v1611
      %v1624 = vpack.c.bf16 %v1614, %v1613
      %v1625 = vpack.c.bf16 %v1616, %v1615
      %v1626 = vpack.c.bf16 %v1618, %v1617
      %v1627 = vld [vmem:[%s1 + $0x1c] sm:$0xf]
      %v1629 = vsel %vm317, %v1619, 0
      %v1632 = vsel %vm317, %v1620, 0
      %v1635 = vsel %vm317, %v1621, 0
      %v1638 = vsel %vm317, %v1622, 0
      %v1641 = vsel %vm317, %v1623, 0
      %v1644 = vsel %vm317, %v1624, 0
      %v1647 = vsel %vm317, %v1625, 0
      %v1650 = vsel %vm317, %v1626, 0
      %v1653 = vsel %vm547, %v1627, 0
      %1655 = vmatprep.subr.bf16.mxu0 0
      %1656 = vmatpush1.bf16.msra.mxu0 0
      %1657 = vmatprep.subr.bf16.mxu0 0
      %1658 = vmatpush1.bf16.msra.mxu0 0
      %1659 = vmatprep.subr.bf16.mxu0 0
      %1660 = vmatpush1.bf16.msra.mxu0 0
      %1661 = vmatprep.subr.bf16.mxu0 0
      %1662 = vmatpush1.bf16.msra.mxu0 0
      %1663 = vmatprep.subr.bf16.mxu0 0
      %1664 = vmatpush1.bf16.msra.mxu0 0
      %1665 = vmatprep.subr.bf16.mxu0 0
      %1666 = vmatpush1.bf16.msra.mxu0 0
      %1667 = vmatprep.subr.bf16.mxu0 0
      %1668 = vmatpush1.bf16.msra.mxu0 0
      %1669 = vmatprep.subr.bf16.mxu0 0
      %1670 = vmatpush1.bf16.msra.mxu0 %v1653
      %1671 = vmatprep.subr.bf16.mxu0 0
      %1672 = vmatpush2.bf16.msra.mxu0 0
      %1673 = vmatprep.subr.bf16.mxu0 0
      %1674 = vmatpush2.bf16.msra.mxu0 0
      %1675 = vmatprep.subr.bf16.mxu0 0
      %1676 = vmatpush2.bf16.msra.mxu0 0
      %1677 = vmatprep.subr.bf16.mxu0 0
      %1678 = vmatpush2.bf16.msra.mxu0 0
      %1679 = vmatprep.subr.bf16.mxu0 0
      %1680 = vmatpush2.bf16.msra.mxu0 0
      %1681 = vmatprep.subr.bf16.mxu0 0
      %1682 = vmatpush2.bf16.msra.mxu0 0
      %1683 = vmatprep.subr.bf16.mxu0 0
      %1684 = vmatpush2.bf16.msra.mxu0 0
      %1685 = vmatprep.subr.bf16.mxu0 0
      %1686 = vmatpush2.bf16.msra.mxu0 0
      %1687 = vmatprep.mubr.bf16.mxu0 0
      %1688 = vmatmul.mubr.bf16.gmra.mxu0 %v1629
      %v1689 = vpop.f32.mrf.mxu0
      %v1690 = vadd.f32 0.0, %v1689
      %v1691 = vpop.f32.mrf.mxu0
      %v1692 = vpop.f32.mrf.mxu0
      %v1693 = vadd.f32 0.0, %v1692
      %v1694 = vpop.f32.mrf.mxu0
      %1695 = vmatprep.mubr.bf16.mxu0 0
      %1696 = vmatmul.mubr.bf16.gmra.mxu0 %v1632
      %v1697 = vpop.f32.mrf.mxu0
      %v1698 = vadd.f32 0.0, %v1697
      %v1699 = vpop.f32.mrf.mxu0
      %v1700 = vpop.f32.mrf.mxu0
      %v1701 = vadd.f32 0.0, %v1700
      %v1702 = vpop.f32.mrf.mxu0
      %1703 = vmatprep.mubr.bf16.mxu0 0
      %1704 = vmatmul.mubr.bf16.gmra.mxu0 %v1635
      %v1705 = vpop.f32.mrf.mxu0
      %v1706 = vadd.f32 0.0, %v1705
      %v1707 = vpop.f32.mrf.mxu0
      %v1708 = vpop.f32.mrf.mxu0
      %v1709 = vadd.f32 0.0, %v1708
      %v1710 = vpop.f32.mrf.mxu0
      %1711 = vmatprep.mubr.bf16.mxu0 0
      %1712 = vmatmul.mubr.bf16.gmra.mxu0 %v1638
      %v1713 = vpop.f32.mrf.mxu0
      %v1714 = vadd.f32 0.0, %v1713
      %v1715 = vpop.f32.mrf.mxu0
      %v1716 = vpop.f32.mrf.mxu0
      %v1717 = vadd.f32 0.0, %v1716
      %v1718 = vpop.f32.mrf.mxu0
      %1719 = vmatprep.mubr.bf16.mxu0 0
      %1720 = vmatmul.mubr.bf16.gmra.mxu0 %v1641
      %v1721 = vpop.f32.mrf.mxu0
      %v1722 = vadd.f32 0.0, %v1721
      %v1723 = vpop.f32.mrf.mxu0
      %v1724 = vpop.f32.mrf.mxu0
      %v1725 = vadd.f32 0.0, %v1724
      %v1726 = vpop.f32.mrf.mxu0
      %1727 = vmatprep.mubr.bf16.mxu0 0
      %1728 = vmatmul.mubr.bf16.gmra.mxu0 %v1644
      %v1729 = vpop.f32.mrf.mxu0
      %v1730 = vadd.f32 0.0, %v1729
      %v1731 = vpop.f32.mrf.mxu0
      %v1732 = vpop.f32.mrf.mxu0
      %v1733 = vadd.f32 0.0, %v1732
      %v1734 = vpop.f32.mrf.mxu0
      %1735 = vmatprep.mubr.bf16.mxu0 0
      %1736 = vmatmul.mubr.bf16.gmra.mxu0 %v1647
      %v1737 = vpop.f32.mrf.mxu0
      %v1738 = vadd.f32 0.0, %v1737
      %v1739 = vpop.f32.mrf.mxu0
      %v1740 = vpop.f32.mrf.mxu0
      %v1741 = vadd.f32 0.0, %v1740
      %v1742 = vpop.f32.mrf.mxu0
      %1743 = vmatprep.mubr.bf16.mxu0 0
      %1744 = vmatmul.mubr.bf16.gmra.mxu0 %v1650
      %v1745 = vpop.f32.mrf.mxu0
      %v1746 = vadd.f32 0.0, %v1745
      %v1747 = vpop.f32.mrf.mxu0
      %v1748 = vpop.f32.mrf.mxu0
      %v1749 = vadd.f32 0.0, %v1748
      %v1750 = vpop.f32.mrf.mxu0
      %1751 = vdwg.mxu0
      %v1752 = vadd.f32 %v1587, %v1690
      %v1753 = vadd.f32 %v1588, %v1693
      %v1754 = vadd.f32 %v1589, %v1698
      %v1755 = vadd.f32 %v1590, %v1701
      %v1756 = vadd.f32 %v1591, %v1706
      %v1757 = vadd.f32 %v1592, %v1709
      %v1758 = vadd.f32 %v1593, %v1714
      %v1759 = vadd.f32 %v1594, %v1717
      %v1760 = vadd.f32 %v1595, %v1722
      %v1761 = vadd.f32 %v1596, %v1725
      %v1762 = vadd.f32 %v1597, %v1730
      %v1763 = vadd.f32 %v1598, %v1733
      %v1764 = vadd.f32 %v1599, %v1738
      %v1765 = vadd.f32 %v1600, %v1741
      %v1766 = vadd.f32 %v1601, %v1746
      %v1767 = vadd.f32 %v1602, %v1749
      %v1768 = vld [vmem:[%s1437 + $0x2] sm:$0xff]
      %v1769 = vld [vmem:[%s1437 + $0xa] sm:$0xff]
      %v1770 = vld [vmem:[%s1437 + $0x1a] sm:$0xff]
      %v1771 = vld [vmem:[%s1437 + $0x22] sm:$0xff]
      %v1772 = vld [vmem:[%s1437 + $0x32] sm:$0xff]
      %v1773 = vld [vmem:[%s1437 + $0x3a] sm:$0xff]
      %v1774 = vld [vmem:[%s1437 + $0x4a] sm:$0xff]
      %v1775 = vld [vmem:[%s1437 + $0x52] sm:$0xff]
      %v1776 = vld [vmem:[%s1437 + $0x62] sm:$0xff]
      %v1777 = vld [vmem:[%s1437 + $0x6a] sm:$0xff]
      %v1778 = vld [vmem:[%s1437 + $0x7a] sm:$0xff]
      %v1779 = vld [vmem:[%s1437 + $0x82] sm:$0xff]
      %v1780 = vld [vmem:[%s1437 + $0x92] sm:$0xff]
      %v1781 = vld [vmem:[%s1437 + $0x9a] sm:$0xff]
      %v1782 = vld [vmem:[%s1437 + $0xaa] sm:$0xff]
      %v1783 = vld [vmem:[%s1437 + $0xb2] sm:$0xff]
      %v1784 = vpack.c.bf16 %v1769, %v1768
      %v1785 = vpack.c.bf16 %v1771, %v1770
      %v1786 = vpack.c.bf16 %v1773, %v1772
      %v1787 = vpack.c.bf16 %v1775, %v1774
      %v1788 = vpack.c.bf16 %v1777, %v1776
      %v1789 = vpack.c.bf16 %v1779, %v1778
      %v1790 = vpack.c.bf16 %v1781, %v1780
      %v1791 = vpack.c.bf16 %v1783, %v1782
      %v1792 = vld [vmem:[%s1 + $0x20] sm:$0xf]
      %v1794 = vsel %vm317, %v1784, 0
      %v1797 = vsel %vm317, %v1785, 0
      %v1800 = vsel %vm317, %v1786, 0
      %v1803 = vsel %vm317, %v1787, 0
      %v1806 = vsel %vm317, %v1788, 0
      %v1809 = vsel %vm317, %v1789, 0
      %v1812 = vsel %vm317, %v1790, 0
      %v1815 = vsel %vm317, %v1791, 0
      %v1818 = vsel %vm547, %v1792, 0
      %1820 = vmatprep.subr.bf16.mxu0 0
      %1821 = vmatpush1.bf16.msra.mxu0 0
      %1822 = vmatprep.subr.bf16.mxu0 0
      %1823 = vmatpush1.bf16.msra.mxu0 0
      %1824 = vmatprep.subr.bf16.mxu0 0
      %1825 = vmatpush1.bf16.msra.mxu0 0
      %1826 = vmatprep.subr.bf16.mxu0 0
      %1827 = vmatpush1.bf16.msra.mxu0 0
      %1828 = vmatprep.subr.bf16.mxu0 0
      %1829 = vmatpush1.bf16.msra.mxu0 0
      %1830 = vmatprep.subr.bf16.mxu0 0
      %1831 = vmatpush1.bf16.msra.mxu0 0
      %1832 = vmatprep.subr.bf16.mxu0 0
      %1833 = vmatpush1.bf16.msra.mxu0 0
      %1834 = vmatprep.subr.bf16.mxu0 0
      %1835 = vmatpush1.bf16.msra.mxu0 %v1818
      %1836 = vmatprep.subr.bf16.mxu0 0
      %1837 = vmatpush2.bf16.msra.mxu0 0
      %1838 = vmatprep.subr.bf16.mxu0 0
      %1839 = vmatpush2.bf16.msra.mxu0 0
      %1840 = vmatprep.subr.bf16.mxu0 0
      %1841 = vmatpush2.bf16.msra.mxu0 0
      %1842 = vmatprep.subr.bf16.mxu0 0
      %1843 = vmatpush2.bf16.msra.mxu0 0
      %1844 = vmatprep.subr.bf16.mxu0 0
      %1845 = vmatpush2.bf16.msra.mxu0 0
      %1846 = vmatprep.subr.bf16.mxu0 0
      %1847 = vmatpush2.bf16.msra.mxu0 0
      %1848 = vmatprep.subr.bf16.mxu0 0
      %1849 = vmatpush2.bf16.msra.mxu0 0
      %1850 = vmatprep.subr.bf16.mxu0 0
      %1851 = vmatpush2.bf16.msra.mxu0 0
      %1852 = vmatprep.mubr.bf16.mxu0 0
      %1853 = vmatmul.mubr.bf16.gmra.mxu0 %v1794
      %v1854 = vpop.f32.mrf.mxu0
      %v1855 = vadd.f32 0.0, %v1854
      %v1856 = vpop.f32.mrf.mxu0
      %v1857 = vpop.f32.mrf.mxu0
      %v1858 = vadd.f32 0.0, %v1857
      %v1859 = vpop.f32.mrf.mxu0
      %1860 = vmatprep.mubr.bf16.mxu0 0
      %1861 = vmatmul.mubr.bf16.gmra.mxu0 %v1797
      %v1862 = vpop.f32.mrf.mxu0
      %v1863 = vadd.f32 0.0, %v1862
      %v1864 = vpop.f32.mrf.mxu0
      %v1865 = vpop.f32.mrf.mxu0
      %v1866 = vadd.f32 0.0, %v1865
      %v1867 = vpop.f32.mrf.mxu0
      %1868 = vmatprep.mubr.bf16.mxu0 0
      %1869 = vmatmul.mubr.bf16.gmra.mxu0 %v1800
      %v1870 = vpop.f32.mrf.mxu0
      %v1871 = vadd.f32 0.0, %v1870
      %v1872 = vpop.f32.mrf.mxu0
      %v1873 = vpop.f32.mrf.mxu0
      %v1874 = vadd.f32 0.0, %v1873
      %v1875 = vpop.f32.mrf.mxu0
      %1876 = vmatprep.mubr.bf16.mxu0 0
      %1877 = vmatmul.mubr.bf16.gmra.mxu0 %v1803
      %v1878 = vpop.f32.mrf.mxu0
      %v1879 = vadd.f32 0.0, %v1878
      %v1880 = vpop.f32.mrf.mxu0
      %v1881 = vpop.f32.mrf.mxu0
      %v1882 = vadd.f32 0.0, %v1881
      %v1883 = vpop.f32.mrf.mxu0
      %1884 = vmatprep.mubr.bf16.mxu0 0
      %1885 = vmatmul.mubr.bf16.gmra.mxu0 %v1806
      %v1886 = vpop.f32.mrf.mxu0
      %v1887 = vadd.f32 0.0, %v1886
      %v1888 = vpop.f32.mrf.mxu0
      %v1889 = vpop.f32.mrf.mxu0
      %v1890 = vadd.f32 0.0, %v1889
      %v1891 = vpop.f32.mrf.mxu0
      %1892 = vmatprep.mubr.bf16.mxu0 0
      %1893 = vmatmul.mubr.bf16.gmra.mxu0 %v1809
      %v1894 = vpop.f32.mrf.mxu0
      %v1895 = vadd.f32 0.0, %v1894
      %v1896 = vpop.f32.mrf.mxu0
      %v1897 = vpop.f32.mrf.mxu0
      %v1898 = vadd.f32 0.0, %v1897
      %v1899 = vpop.f32.mrf.mxu0
      %1900 = vmatprep.mubr.bf16.mxu0 0
      %1901 = vmatmul.mubr.bf16.gmra.mxu0 %v1812
      %v1902 = vpop.f32.mrf.mxu0
      %v1903 = vadd.f32 0.0, %v1902
      %v1904 = vpop.f32.mrf.mxu0
      %v1905 = vpop.f32.mrf.mxu0
      %v1906 = vadd.f32 0.0, %v1905
      %v1907 = vpop.f32.mrf.mxu0
      %1908 = vmatprep.mubr.bf16.mxu0 0
      %1909 = vmatmul.mubr.bf16.gmra.mxu0 %v1815
      %v1910 = vpop.f32.mrf.mxu0
      %v1911 = vadd.f32 0.0, %v1910
      %v1912 = vpop.f32.mrf.mxu0
      %v1913 = vpop.f32.mrf.mxu0
      %v1914 = vadd.f32 0.0, %v1913
      %v1915 = vpop.f32.mrf.mxu0
      %1916 = vdwg.mxu0
      %v1917 = vadd.f32 %v1752, %v1855
      %v1918 = vadd.f32 %v1753, %v1858
      %v1919 = vadd.f32 %v1754, %v1863
      %v1920 = vadd.f32 %v1755, %v1866
      %v1921 = vadd.f32 %v1756, %v1871
      %v1922 = vadd.f32 %v1757, %v1874
      %v1923 = vadd.f32 %v1758, %v1879
      %v1924 = vadd.f32 %v1759, %v1882
      %v1925 = vadd.f32 %v1760, %v1887
      %v1926 = vadd.f32 %v1761, %v1890
      %v1927 = vadd.f32 %v1762, %v1895
      %v1928 = vadd.f32 %v1763, %v1898
      %v1929 = vadd.f32 %v1764, %v1903
      %v1930 = vadd.f32 %v1765, %v1906
      %v1931 = vadd.f32 %v1766, %v1911
      %v1932 = vadd.f32 %v1767, %v1914
      %v1933 = vld [vmem:[%s2] sm:$0x1]
      %v1935 = vlaneseq
      %v1936 = vshrl.u32 %v1935, 7
      %v1937 = vsub.s32 0, %v1936
      %v1938 = vrot.slane %v1933, %v1937
      %v1940 = vadd.f32 %v1917, %v1938
      %v1941 = vadd.f32 %v1918, %v1938
      %v1942 = vadd.f32 %v1919, %v1938
      %v1943 = vadd.f32 %v1920, %v1938
      %v1944 = vadd.f32 %v1921, %v1938
      %v1945 = vadd.f32 %v1922, %v1938
      %v1946 = vadd.f32 %v1923, %v1938
      %v1947 = vadd.f32 %v1924, %v1938
      %v1948 = vadd.f32 %v1925, %v1938
      %v1949 = vadd.f32 %v1926, %v1938
      %v1950 = vadd.f32 %v1927, %v1938
      %v1951 = vadd.f32 %v1928, %v1938
      %v1952 = vadd.f32 %v1929, %v1938
      %v1953 = vadd.f32 %v1930, %v1938
      %v1954 = vadd.f32 %v1931, %v1938
      %v1955 = vadd.f32 %v1932, %v1938
      %v1956 = vld [vmem:[%s303] sm:$0xf]
      %v1957 = vld [vmem:[%s303 + $0x4] sm:$0xf]
      %v1958 = vld [vmem:[%s303 + $0x8] sm:$0xf]
      %v1959 = vld [vmem:[%s303 + $0xc] sm:$0xf]
      %v1960 = vld [vmem:[%s303 + $0x10] sm:$0xf]
      %v1961 = vld [vmem:[%s303 + $0x14] sm:$0xf]
      %v1962 = vld [vmem:[%s303 + $0x18] sm:$0xf]
      %v1963 = vld [vmem:[%s303 + $0x1c] sm:$0xf]
      %v1964 = vld [vmem:[%s303 + $0x20] sm:$0xf]
      %v1965 = vld [vmem:[%s303 + $0x24] sm:$0xf]
      %v1966 = vld [vmem:[%s303 + $0x28] sm:$0xf]
      %v1967 = vld [vmem:[%s303 + $0x2c] sm:$0xf]
      %v1968 = vld [vmem:[%s303 + $0x30] sm:$0xf]
      %v1969 = vld [vmem:[%s303 + $0x34] sm:$0xf]
      %v1970 = vld [vmem:[%s303 + $0x38] sm:$0xf]
      %v1971 = vld [vmem:[%s303 + $0x3c] sm:$0xf]
      %v1972 = vld [vmem:[%s4] sm:$0x3]
      %v1989 = vunpack.c.l.b16 %v1956
      %v1990 = vunpack.c.l.b16 %v1957
      %v1991 = vunpack.c.l.b16 %v1958
      %v1992 = vunpack.c.l.b16 %v1959
      %v1993 = vunpack.c.l.b16 %v1960
      %v1994 = vunpack.c.l.b16 %v1961
      %v1995 = vunpack.c.l.b16 %v1962
      %v1996 = vunpack.c.l.b16 %v1963
      %v1997 = vunpack.c.l.b16 %v1964
      %v1998 = vunpack.c.l.b16 %v1965
      %v1999 = vunpack.c.l.b16 %v1966
      %v2000 = vunpack.c.l.b16 %v1967
      %v2001 = vunpack.c.l.b16 %v1968
      %v2002 = vunpack.c.l.b16 %v1969
      %v2003 = vunpack.c.l.b16 %v1970
      %v2004 = vunpack.c.l.b16 %v1971
      %v2005 = vpack.c.b16 %v1990, %v1989
      %v2006 = vpack.c.b16 %v1992, %v1991
      %v2007 = vpack.c.b16 %v1994, %v1993
      %v2008 = vpack.c.b16 %v1996, %v1995
      %v2009 = vpack.c.b16 %v1998, %v1997
      %v2010 = vpack.c.b16 %v2000, %v1999
      %v2011 = vpack.c.b16 %v2002, %v2001
      %v2012 = vpack.c.b16 %v2004, %v2003
      %vm2013 = vcmask 31744
      %v2015 = vsel %vm2013, %v2005, 0
      %v2018 = vsel %vm2013, %v2006, 0
      %v2021 = vsel %vm2013, %v2007, 0
      %v2024 = vsel %vm2013, %v2008, 0
      %v2027 = vsel %vm2013, %v2009, 0
      %v2030 = vsel %vm2013, %v2010, 0
      %v2033 = vsel %vm2013, %v2011, 0
      %v2036 = vsel %vm2013, %v2012, 0
      %vm2038 = vcmask 1041408
      %v2040 = vsel %vm2038, %v1972, 0
      %2042 = vmatprep.subr.bf16.mxu0 0
      %2043 = vmatpush1.bf16.msra.mxu0 0
      %2044 = vmatprep.subr.bf16.mxu0 0
      %2045 = vmatpush1.bf16.msra.mxu0 0
      %2046 = vmatprep.subr.bf16.mxu0 0
      %2047 = vmatpush1.bf16.msra.mxu0 0
      %2048 = vmatprep.subr.bf16.mxu0 0
      %2049 = vmatpush1.bf16.msra.mxu0 0
      %2050 = vmatprep.subr.bf16.mxu0 0
      %2051 = vmatpush1.bf16.msra.mxu0 0
      %2052 = vmatprep.subr.bf16.mxu0 0
      %2053 = vmatpush1.bf16.msra.mxu0 0
      %2054 = vmatprep.subr.bf16.mxu0 0
      %2055 = vmatpush1.bf16.msra.mxu0 0
      %2056 = vmatprep.subr.bf16.mxu0 0
      %2057 = vmatpush1.bf16.msra.mxu0 %v2040
      %2058 = vmatprep.subr.bf16.mxu0 0
      %2059 = vmatpush2.bf16.msra.mxu0 0
      %2060 = vmatprep.subr.bf16.mxu0 0
      %2061 = vmatpush2.bf16.msra.mxu0 0
      %2062 = vmatprep.subr.bf16.mxu0 0
      %2063 = vmatpush2.bf16.msra.mxu0 0
      %2064 = vmatprep.subr.bf16.mxu0 0
      %2065 = vmatpush2.bf16.msra.mxu0 0
      %2066 = vmatprep.subr.bf16.mxu0 0
      %2067 = vmatpush2.bf16.msra.mxu0 0
      %2068 = vmatprep.subr.bf16.mxu0 0
      %2069 = vmatpush2.bf16.msra.mxu0 0
      %2070 = vmatprep.subr.bf16.mxu0 0
      %2071 = vmatpush2.bf16.msra.mxu0 0
      %2072 = vmatprep.subr.bf16.mxu0 0
      %2073 = vmatpush2.bf16.msra.mxu0 0
      %2074 = vmatprep.mubr.bf16.mxu0 0
      %2075 = vmatmul.mubr.bf16.gmra.mxu0 %v2015
      %v2076 = vpop.f32.mrf.mxu0
      %v2077 = vadd.f32 0.0, %v2076
      %v2078 = vpop.f32.mrf.mxu0
      %v2079 = vpop.f32.mrf.mxu0
      %v2080 = vadd.f32 0.0, %v2079
      %v2081 = vpop.f32.mrf.mxu0
      %2082 = vmatprep.mubr.bf16.mxu0 0
      %2083 = vmatmul.mubr.bf16.gmra.mxu0 %v2018
      %v2084 = vpop.f32.mrf.mxu0
      %v2085 = vadd.f32 0.0, %v2084
      %v2086 = vpop.f32.mrf.mxu0
      %v2087 = vpop.f32.mrf.mxu0
      %v2088 = vadd.f32 0.0, %v2087
      %v2089 = vpop.f32.mrf.mxu0
      %2090 = vmatprep.mubr.bf16.mxu0 0
      %2091 = vmatmul.mubr.bf16.gmra.mxu0 %v2021
      %v2092 = vpop.f32.mrf.mxu0
      %v2093 = vadd.f32 0.0, %v2092
      %v2094 = vpop.f32.mrf.mxu0
      %v2095 = vpop.f32.mrf.mxu0
      %v2096 = vadd.f32 0.0, %v2095
      %v2097 = vpop.f32.mrf.mxu0
      %2098 = vmatprep.mubr.bf16.mxu0 0
      %2099 = vmatmul.mubr.bf16.gmra.mxu0 %v2024
      %v2100 = vpop.f32.mrf.mxu0
      %v2101 = vadd.f32 0.0, %v2100
      %v2102 = vpop.f32.mrf.mxu0
      %v2103 = vpop.f32.mrf.mxu0
      %v2104 = vadd.f32 0.0, %v2103
      %v2105 = vpop.f32.mrf.mxu0
      %2106 = vmatprep.mubr.bf16.mxu0 0
      %2107 = vmatmul.mubr.bf16.gmra.mxu0 %v2027
      %v2108 = vpop.f32.mrf.mxu0
      %v2109 = vadd.f32 0.0, %v2108
      %v2110 = vpop.f32.mrf.mxu0
      %v2111 = vpop.f32.mrf.mxu0
      %v2112 = vadd.f32 0.0, %v2111
      %v2113 = vpop.f32.mrf.mxu0
      %2114 = vmatprep.mubr.bf16.mxu0 0
      %2115 = vmatmul.mubr.bf16.gmra.mxu0 %v2030
      %v2116 = vpop.f32.mrf.mxu0
      %v2117 = vadd.f32 0.0, %v2116
      %v2118 = vpop.f32.mrf.mxu0
      %v2119 = vpop.f32.mrf.mxu0
      %v2120 = vadd.f32 0.0, %v2119
      %v2121 = vpop.f32.mrf.mxu0
      %2122 = vmatprep.mubr.bf16.mxu0 0
      %2123 = vmatmul.mubr.bf16.gmra.mxu0 %v2033
      %v2124 = vpop.f32.mrf.mxu0
      %v2125 = vadd.f32 0.0, %v2124
      %v2126 = vpop.f32.mrf.mxu0
      %v2127 = vpop.f32.mrf.mxu0
      %v2128 = vadd.f32 0.0, %v2127
      %v2129 = vpop.f32.mrf.mxu0
      %2130 = vmatprep.mubr.bf16.mxu0 0
      %2131 = vmatmul.mubr.bf16.gmra.mxu0 %v2036
      %v2132 = vpop.f32.mrf.mxu0
      %v2133 = vadd.f32 0.0, %v2132
      %v2134 = vpop.f32.mrf.mxu0
      %v2135 = vpop.f32.mrf.mxu0
      %v2136 = vadd.f32 0.0, %v2135
      %v2137 = vpop.f32.mrf.mxu0
      %2138 = vdwg.mxu0
      %v2139 = vadd.f32 %v1940, %v2077
      %v2140 = vadd.f32 %v1941, %v2080
      %v2141 = vadd.f32 %v1942, %v2085
      %v2142 = vadd.f32 %v1943, %v2088
      %v2143 = vadd.f32 %v1944, %v2093
      %v2144 = vadd.f32 %v1945, %v2096
      %v2145 = vadd.f32 %v1946, %v2101
      %v2146 = vadd.f32 %v1947, %v2104
      %v2147 = vadd.f32 %v1948, %v2109
      %v2148 = vadd.f32 %v1949, %v2112
      %v2149 = vadd.f32 %v1950, %v2117
      %v2150 = vadd.f32 %v1951, %v2120
      %v2151 = vadd.f32 %v1952, %v2125
      %v2152 = vadd.f32 %v1953, %v2128
      %v2153 = vadd.f32 %v1954, %v2133
      %v2154 = vadd.f32 %v1955, %v2136
      %v2155 = vld [vmem:[%s5] sm:$0x1]
      %v2157 = vlaneseq
      %v2158 = vshrl.u32 %v2157, 7
      %v2159 = vsub.s32 0, %v2158
      %v2160 = vrot.slane %v2155, %v2159
      %v2162 = vadd.f32 %v2139, %v2160
      %v2163 = vadd.f32 %v2140, %v2160
      %v2164 = vadd.f32 %v2141, %v2160
      %v2165 = vadd.f32 %v2142, %v2160
      %v2166 = vadd.f32 %v2143, %v2160
      %v2167 = vadd.f32 %v2144, %v2160
      %v2168 = vadd.f32 %v2145, %v2160
      %v2169 = vadd.f32 %v2146, %v2160
      %v2170 = vadd.f32 %v2147, %v2160
      %v2171 = vadd.f32 %v2148, %v2160
      %v2172 = vadd.f32 %v2149, %v2160
      %v2173 = vadd.f32 %v2150, %v2160
      %v2174 = vadd.f32 %v2151, %v2160
      %v2175 = vadd.f32 %v2152, %v2160
      %v2176 = vadd.f32 %v2153, %v2160
      %v2177 = vadd.f32 %v2154, %v2160
      %v2178 = vmax.f32 %v2162, 0.0
      %v2179 = vmax.f32 %v2163, 0.0
      %v2180 = vmax.f32 %v2164, 0.0
      %v2181 = vmax.f32 %v2165, 0.0
      %v2182 = vmax.f32 %v2166, 0.0
      %v2183 = vmax.f32 %v2167, 0.0
      %v2184 = vmax.f32 %v2168, 0.0
      %v2185 = vmax.f32 %v2169, 0.0
      %v2186 = vmax.f32 %v2170, 0.0
      %v2187 = vmax.f32 %v2171, 0.0
      %v2188 = vmax.f32 %v2172, 0.0
      %v2189 = vmax.f32 %v2173, 0.0
      %v2190 = vmax.f32 %v2174, 0.0
      %v2191 = vmax.f32 %v2175, 0.0
      %v2192 = vmax.f32 %v2176, 0.0
      %v2193 = vmax.f32 %v2177, 0.0
      %2194 = vst.msk [vmem:[%s314] sm:$0xff] %vm317, %v2178
      %2195 = vst.msk [vmem:[%s314 + $0x8] sm:$0xff] %vm317, %v2179
      %2196 = vst.msk [vmem:[%s314 + $0x10] sm:$0xff] %vm317, %v2180
      %2197 = vst.msk [vmem:[%s314 + $0x18] sm:$0xff] %vm317, %v2181
      %2198 = vst.msk [vmem:[%s314 + $0x20] sm:$0xff] %vm317, %v2182
      %2199 = vst.msk [vmem:[%s314 + $0x28] sm:$0xff] %vm317, %v2183
      %2200 = vst.msk [vmem:[%s314 + $0x30] sm:$0xff] %vm317, %v2184
      %2201 = vst.msk [vmem:[%s314 + $0x38] sm:$0xff] %vm317, %v2185
      %2202 = vst.msk [vmem:[%s314 + $0x40] sm:$0xff] %vm317, %v2186
      %2203 = vst.msk [vmem:[%s314 + $0x48] sm:$0xff] %vm317, %v2187
      %2204 = vst.msk [vmem:[%s314 + $0x50] sm:$0xff] %vm317, %v2188
      %2205 = vst.msk [vmem:[%s314 + $0x58] sm:$0xff] %vm317, %v2189
      %2206 = vst.msk [vmem:[%s314 + $0x60] sm:$0xff] %vm317, %v2190
      %2207 = vst.msk [vmem:[%s314 + $0x68] sm:$0xff] %vm317, %v2191
      %2208 = vst.msk [vmem:[%s314 + $0x70] sm:$0xff] %vm317, %v2192
      %2209 = vst.msk [vmem:[%s314 + $0x78] sm:$0xff] %vm317, %v2193
      %s2210 = smul.u32 8, %s22
      %p2211 = scmp.lt.s32.totalorder %s21, 1
      %s2212 = scalar_select %p2211, %s21, 1
      %p2213 = scmp.lt.s32.totalorder %s2210, 15
      %s2214 = scalar_select %p2213, %s2210, 15
      %s2215 = smul.addr %s2214, 2
      %s2216 = smul.addr %s2212, 32
      %s2217 = sadd.s32 %s2215, %s2216
      %s2218 = smul.addr %s2217, 8
      %s2219 = scalar_lea.vmem %s6, %s2218
      // Predicated region
      $region45: #{basic_block_forward.3} parent=43 // pred_check
        %p2220 = pneg %p187
      $region46: #{basic_block_forward.3} parent=43 // pred_check_branch
        %2222 = sbr.rel (%p2220) target = $region48
      $region47: #{basic_block_forward.3} parent=43 // pred_region
        %s2223 = smul.u32 8, %s22
      $region48: #{basic_block_forward.3} parent=43 // pred_fallthru
        _
    $region44: #{basic_block_forward.3} parent=5 // pred_fallthru
      _
    %p2224 = scmp.le.s32.totalorder 2, %s12
    // Predicated region
    $region49: #{basic_block_forward.3} parent=5 // pred_check
      %p2225 = pneg %p2224
    $region50: #{basic_block_forward.3} parent=5 // pred_check_branch
      %2227 = sbr.rel (%p2225) target = $region52
    $region51: #{basic_block_forward.3} parent=5 // pred_region
      %s2228 = ssub.s32 %s12, 2
      // Predicated region
      $region53: #{basic_block_forward.3} parent=51 // pred_check
        %p2229 = pneg %p193
      $region54: #{basic_block_forward.3} parent=51 // pred_check_branch
        %2231 = sbr.rel (%p2229) target = $region56
      $region55: #{basic_block_forward.3} parent=51 // pred_region
        %s2232 = smul.u32 8, %s24
        %p2233 = scmp.lt.s32.totalorder %s23, 1
        %s2234 = scalar_select %p2233, %s23, 1
        %p2235 = scmp.lt.s32.totalorder %s2232, 15
        %s2236 = scalar_select %p2235, %s2232, 15
        %s2237 = smul.addr %s2236, 2
        %s2238 = smul.addr %s2234, 32
        %s2239 = sadd.s32 %s2237, %s2238
        %s2240 = smul.addr %s2239, 8
        %s2241 = scalar_lea.vmem %s6, %s2240
      $region56: #{basic_block_forward.3} parent=51 // pred_fallthru
        _
    $region52: #{basic_block_forward.3} parent=5 // pred_fallthru
      _
  $region6: #{basic_block_forward.3} parent=0 // loop_footer
    %s16 = sadd.s32 1, %s12
  $region7: #{basic_block_forward.3} parent=0 // loop_footer_branch
    %11 = sbr.rel target = $region3
  $region8: #{basic_block_forward.3} parent=0 // loop_exit
    _

</llo_original>
